<compile_context>
chip_gen: v7x
topology: tpu7x:2x2x1
jax: 0.10.0
libtpu: 0.0.40
codegen_flags: <defaults>
</compile_context>

<pallas_src>
import functools
import math

import jax
import jax.numpy as jnp
from jax import lax
from jax.experimental import pallas as pl
from jax.experimental.pallas import tpu as pltpu


# ----------------------------- in-kernel math -------------------------------
def _round_up(x, m):
    return (x + m - 1) // m * m


def _gelu(x):
    # tanh-approximate GELU (goes to the EUP slot). Max abs deviation from
    # torch.nn.GELU()'s exact-erf form is ~1e-3 — documented approximation.
    c = math.sqrt(2.0 / math.pi)
    return 0.5 * x * (1.0 + jnp.tanh(c * (x + 0.044715 * x * x * x)))


def _layernorm(x, w, b, eps=1e-5):
    mu = jnp.mean(x, axis=-1, keepdims=True)
    var = jnp.mean(jnp.square(x - mu), axis=-1, keepdims=True)
    return (x - mu) * lax.rsqrt(var + eps) * w + b


def _softmax(x):
    m = jnp.max(x, axis=-1, keepdims=True)
    e = jnp.exp(x - m)
    return e * pl.reciprocal(jnp.sum(e, axis=-1, keepdims=True), approx=True)


# --------------------------------- kernel -----------------------------------
def _vit_kernel(patches_ref, wp_ref, bp_ref, clspos_ref, posb_ref,
                ln1w_ref, ln1b_ref, wqkv_ref, bqkv_ref, wo_ref, bo_ref,
                ln2w_ref, ln2b_ref, w1_ref, b1_ref, w2_ref, b2_ref,
                lncw_ref, lncb_ref, wc_ref, bc_ref,
                out_ref, x_scr, attn_scr,
                *, num_heads, seq_len, batch_tile):
    f32 = jnp.float32
    cdt = wqkv_ref.dtype                  # matmul compute dtype (bf16)
    l = pl.program_id(1)
    num_l = pl.num_programs(1)

    Bt = batch_tile
    M, D = x_scr.shape                    # M = Bt * S_pad
    S_pad = M // Bt
    hd = D // num_heads

    # ---- init: patch embedding + CLS + positional (once per batch tile) ----
    @pl.when(l == 0)
    def _init():
        _, P_pad, K = patches_ref.shape
        patches = patches_ref[...].reshape(Bt * P_pad, K)
        emb = jnp.dot(patches, wp_ref[...],
                      preferred_element_type=f32) + bp_ref[...]      # [Bt*P, D]
        emb = emb.reshape(Bt, P_pad, D) + posb_ref[...][None]
        cls_rows = jnp.broadcast_to(clspos_ref[...][None], (Bt, 1, D))
        parts = [cls_rows, emb]
        pad_rows = S_pad - 1 - P_pad
        if pad_rows > 0:
            parts.append(jnp.zeros((Bt, pad_rows, D), f32))
        x_scr[...] = jnp.concatenate(parts, axis=1).reshape(M, D)
        # embedding_dropout: identity in eval mode

    # -------------------------- transformer block ---------------------------
    x = x_scr[...]                                                   # [M, D] f32

    # multi-head self-attention (pre-LN); fused QKV projection
    h = _layernorm(x, ln1w_ref[0], ln1b_ref[0]).astype(cdt)
    qkv = jnp.dot(h, wqkv_ref[0], preferred_element_type=f32) + bqkv_ref[0]
    qkv3 = qkv.reshape(Bt, S_pad, 3 * D)

    # key-padding bias built once per layer step (no per-head re-broadcast)
    col = lax.broadcasted_iota(jnp.int32, (Bt, S_pad, S_pad), 2)
    key_bias = jnp.where(col < seq_len, 0.0, -1e30).astype(f32)

    for hh in range(num_heads):
        c0 = hh * hd
        qh = qkv3[:, :, c0:c0 + hd].astype(cdt)          # 1/sqrt(hd) folded in W_q
        kh = qkv3[:, :, D + c0:D + c0 + hd].astype(cdt)
        vh = qkv3[:, :, 2 * D + c0:2 * D + c0 + hd].astype(cdt)
        s = jnp.einsum('bqd,bkd->bqk', qh, kh,
                       preferred_element_type=f32) + key_bias       # [Bt,S,S]
        p = _softmax(s)                                             # attn_dropout=0
        attn_scr[:, :, c0:c0 + hd] = jnp.einsum(
            'bqk,bkd->bqd', p.astype(cdt), vh, preferred_element_type=f32)

    attn = attn_scr[...].reshape(M, D).astype(cdt)
    x = x + jnp.dot(attn, wo_ref[0], preferred_element_type=f32) + bo_ref[0]

    # MLP block (pre-LN)
    h2 = _layernorm(x, ln2w_ref[0], ln2b_ref[0]).astype(cdt)
    m1 = _gelu(jnp.dot(h2, w1_ref[0], preferred_element_type=f32) + b1_ref[0])
    x = x + jnp.dot(m1.astype(cdt), w2_ref[0],
                    preferred_element_type=f32) + b2_ref[0]          # mlp_dropout=id
    x_scr[...] = x

    # ------------------- classifier head on the CLS tokens ------------------
    @pl.when(l == num_l - 1)
    def _final():
        cls_tok = x.reshape(Bt, S_pad, D)[:, 0, :]                   # [Bt, D]
        ct = _layernorm(cls_tok, lncw_ref[...], lncb_ref[...]).astype(cdt)
        out_ref[0] = jnp.dot(ct, wc_ref[...],
                             preferred_element_type=f32) + bc_ref[...]


# ------------------------------ host-side glue -------------------------------
def _unfold_patches(x, ps):
    """NCHW image -> [B, num_patches, C*ps*ps], matching Conv2d(k=s=ps)."""
    B, C, H, W = x.shape
    gh, gw = H // ps, W // ps
    x = x.reshape(B, C, gh, ps, gw, ps)
    x = x.transpose(0, 2, 4, 1, 3, 5)            # [B, gh, gw, C, ps, ps]
    return x.reshape(B, gh * gw, C * ps * ps)


def init_vit_params(key, *, img_size, in_channels, patch_size, num_layers,
                    embed_dim, mlp_size, num_heads, num_classes,
                    compute_dtype=jnp.bfloat16):
    assert img_size % patch_size == 0
    assert embed_dim % num_heads == 0
    P = (img_size // patch_size) ** 2
    P_pad = _round_up(P, 8)                      # sublane-align the patch axis
    K = in_channels * patch_size * patch_size
    L, D, Mlp = num_layers, embed_dim, mlp_size
    hd = D // num_heads
    scale = 1.0 / math.sqrt(hd)
    f32 = jnp.float32
    cdt = compute_dtype
    std = 0.02
    ks = jax.random.split(key, 12)

    conv_w = jax.random.normal(ks[0], (D, K), f32) * std             # torch [D, K]
    conv_b = jax.random.normal(ks[1], (1, D), f32) * std
    cls = jax.random.normal(ks[2], (1, D), f32)                      # torch.randn
    pos = jax.random.normal(ks[3], (P + 1, D), f32)                  # torch.randn

    in_proj_w = jax.random.normal(ks[4], (L, 3 * D, D), f32) * std   # torch [3D, D]
    in_proj_b = jax.random.normal(ks[5], (L, 3 * D), f32) * std
    out_proj_w = jax.random.normal(ks[6], (L, D, D), f32) * std
    out_proj_b = jax.random.normal(ks[7], (L, D), f32) * std
    w1 = jax.random.normal(ks[8], (L, Mlp, D), f32) * std
    b1 = jax.random.normal(ks[9], (L, Mlp), f32) * std
    b2 = jnp.zeros((L, D), f32)
    w2 = jax.random.normal(ks[10], (L, D, Mlp), f32) * std
    wc = jax.random.normal(ks[11], (num_classes, D), f32) * std
    bc = jnp.zeros((1, num_classes), f32)

    # Fused QKV, lane-dense [L, D, 3D]; fold the 1/sqrt(hd) softmax scale into
    # the Q third of weight+bias (mathematically identical to scaling scores).
    wqkv = jnp.swapaxes(in_proj_w, 1, 2)                             # [L, D, 3D]
    bqkv = in_proj_b.reshape(L, 1, 3 * D)
    qscale = jnp.concatenate([jnp.full((1, 1, D), scale, f32),
                              jnp.ones((1, 1, 2 * D), f32)], axis=-1)
    wqkv = wqkv * qscale
    bqkv = bqkv * qscale

    pos_body = pos[1:]
    if P_pad != P:
        pos_body = jnp.pad(pos_body, ((0, P_pad - P), (0, 0)))

    return dict(
        wp_t=conv_w.T.astype(cdt), bp=conv_b,                        # [K, D], [1, D]
        cls_pos=cls + pos[0:1], pos_body=pos_body,                   # [1, D], [P_pad, D]
        ln1w=jnp.ones((L, 1, D), f32), ln1b=jnp.zeros((L, 1, D), f32),
        wqkv=wqkv.astype(cdt), bqkv=bqkv,                            # [L, D, 3D], [L, 1, 3D]
        wo=jnp.swapaxes(out_proj_w, 1, 2).astype(cdt),               # [L, D, D]
        bo=out_proj_b.reshape(L, 1, D),
        ln2w=jnp.ones((L, 1, D), f32), ln2b=jnp.zeros((L, 1, D), f32),
        w1=jnp.swapaxes(w1, 1, 2).astype(cdt), b1=b1.reshape(L, 1, Mlp),
        w2=jnp.swapaxes(w2, 1, 2).astype(cdt), b2=b2.reshape(L, 1, D),
        lncw=jnp.ones((1, D), f32), lncb=jnp.zeros((1, D), f32),
        wc_t=wc.T.astype(cdt), bc=bc,                                # [D, NCLS], [1, NCLS]
    )


def _pick_batch_tile(B, S_pad, P_pad, K, D, mlp, num_classes, requested):
    """Size the batch tile toward the weight-streaming roofline, capped by an
    explicit VMEM budget derived from the physical VMEM of this chip."""
    try:
        vmem_phys = int(pltpu.get_tpu_info().vmem_capacity_bytes)
    except Exception:  # query unavailable (e.g. interpret mode) -> assume 128 MiB
        vmem_phys = 128 * 1024 * 1024
    vmem_limit = min(int(vmem_phys * 0.80), 100 * 1024 * 1024)       # ~52 MiB on v7x

    bf16, f32 = 2, 4
    # streamed per-layer weights (double-buffered by the Pallas pipeline)
    layer_bytes = ((D * 3 * D + D * D + 2 * D * mlp) * bf16
                   + (3 * D + D + mlp + 5 * D) * f32)
    resident = ((K * D + num_classes * D) * bf16 + (P_pad + 6) * D * f32
                + num_classes * f32)
    fixed = 2 * layer_bytes + resident + (4 << 20)                   # + headroom

    # per-image f32/bf16 working set: x_scr + attn_scr + qkv + MLP intermediate
    # + bf16 matmul-input copies + per-head score tensors.
    per_row = ((2 * D + 3 * D + mlp) * f32
               + (3 * D + mlp + 3 * D) * bf16 + 3 * S_pad * f32)
    per_img = per_row * S_pad + 2 * P_pad * K * bf16                 # + patch block

    if requested is not None:
        return max(1, min(int(requested), B)), vmem_limit

    target_m = 512                            # ~roofline crossover rows (v5e-v7x)
    bt = max(1, min(B, max(1, target_m // S_pad)))
    budget = vmem_limit - fixed
    if budget > 0:
        bt = max(1, min(bt, budget // max(per_img, 1)))
    else:
        bt = 1
    # keep >= 2 batch tiles so the "parallel" axis can shard across 2 TCs (v7x)
    if B > 1 and pl.cdiv(B, bt) < 2:
        bt = pl.cdiv(B, 2)
    return max(1, min(bt, B)), vmem_limit


def vit_forward(x, p, *, patch_size, num_heads, num_classes, batch_tile=None):
    patches = _unfold_patches(x, patch_size)
    B, P, K = patches.shape
    L, D = p["wqkv"].shape[0], p["wqkv"].shape[1]
    mlp = p["w1"].shape[2]
    P_pad = p["pos_body"].shape[0]
    seq_len = P + 1
    S_pad = _round_up(P_pad + 1, 16)          # bf16 packs 16 rows per vreg

    if P_pad != P:
        patches = jnp.pad(patches, ((0, 0), (0, P_pad - P), (0, 0)))
    patches = patches.astype(p["wqkv"].dtype)                        # bf16 input DMA

    Bt, vmem_limit = _pick_batch_tile(B, S_pad, P_pad, K, D, mlp,
                                      num_classes, batch_tile)
    nb = pl.cdiv(B, Bt)
    B_pad = nb * Bt
    if B_pad != B:
        patches = jnp.pad(patches, ((0, B_pad - B), (0, 0), (0, 0)))

    # TODO(synk): on v7x with large num_classes, the prologue/epilogue weights
    # (wp_t/pos/classifier) could be left in HBM (pl.ANY) and DMA'd only in the
    # l==0 / l==L-1 branches instead of staying VMEM-resident for the whole grid.
    def rep_spec(a):                          # loaded once, resident across grid
        nd = a.ndim
        return pl.BlockSpec(a.shape, lambda b, l, _nd=nd: (0,) * _nd)

    def layer_spec(a):                        # streamed: one layer's slice / step
        nd = a.ndim
        return pl.BlockSpec((1,) + a.shape[1:],
                            lambda b, l, _nd=nd: (l,) + (0,) * (_nd - 1))

    args = (patches,
            p["wp_t"], p["bp"], p["cls_pos"], p["pos_body"],
            p["ln1w"], p["ln1b"], p["wqkv"], p["bqkv"], p["wo"], p["bo"],
            p["ln2w"], p["ln2b"], p["w1"], p["b1"], p["w2"], p["b2"],
            p["lncw"], p["lncb"], p["wc_t"], p["bc"])

    in_specs = [pl.BlockSpec((Bt, P_pad, K), lambda b, l: (b, 0, 0))]
    in_specs += [rep_spec(a) for a in args[1:5]]       # patch-embed / cls+pos
    in_specs += [layer_spec(a) for a in args[5:17]]    # per-layer weights
    in_specs += [rep_spec(a) for a in args[17:]]       # classifier

    out = pl.pallas_call(
        functools.partial(_vit_kernel, num_heads=num_heads,
                          seq_len=seq_len, batch_tile=Bt),
        grid=(nb, L),
        in_specs=in_specs,
        out_specs=pl.BlockSpec((1, Bt, num_classes), lambda b, l: (b, 0, 0)),
        out_shape=jax.ShapeDtypeStruct((nb, Bt, num_classes), jnp.float32),
        scratch_shapes=[pltpu.VMEM((Bt * S_pad, D), jnp.float32),     # activations
                        pltpu.VMEM((Bt, S_pad, D), jnp.float32)],     # attn output
        compiler_params=pltpu.CompilerParams(
            dimension_semantics=("parallel", "arbitrary"),
            vmem_limit_bytes=int(vmem_limit)),
    )(*args)
    return out.reshape(B_pad, num_classes)[:B]


# ---------------------------------- demo -------------------------------------
if __name__ == "__main__":
    # Small-but-consistent configuration (img divisible by patch size,
    # embed_dim divisible by num_heads), same ratios as the PyTorch defaults.
    IMG, C, PS = 24, 1, 6
    LAYERS, D, MLP, HEADS, NCLS = 3, 36, 144, 3, 7
    B = 2

    key = jax.random.PRNGKey(0)
    kparam, kx = jax.random.split(key)
    params = init_vit_params(kparam, img_size=IMG, in_channels=C,
                             patch_size=PS, num_layers=LAYERS, embed_dim=D,
                             mlp_size=MLP, num_heads=HEADS, num_classes=NCLS)
    x = jax.random.normal(kx, (B, C, IMG, IMG), jnp.float32)

    logits = vit_forward(x, params, patch_size=PS, num_heads=HEADS,
                         num_classes=NCLS)
    jax.block_until_ready(logits)
    assert logits.shape == (B, NCLS) and logits.dtype == jnp.float32
    assert bool(jnp.all(jnp.isfinite(logits)))
    print("KERNEL_OK")
</pallas_src>

<mosaic_0001>
module attributes {stable_mosaic.version = 11 : i64} {
  func.func @_vit_kernel(%arg0: i32, %arg1: i32, %arg2: memref<1x16x36xbf16, #tpu.memory_space<vmem>>, %arg3: memref<36x36xbf16, #tpu.memory_space<vmem>>, %arg4: memref<1x36xf32, #tpu.memory_space<vmem>>, %arg5: memref<1x36xf32, #tpu.memory_space<vmem>>, %arg6: memref<16x36xf32, #tpu.memory_space<vmem>>, %arg7: memref<1x1x36xf32, #tpu.memory_space<vmem>>, %arg8: memref<1x1x36xf32, #tpu.memory_space<vmem>>, %arg9: memref<1x36x108xbf16, #tpu.memory_space<vmem>>, %arg10: memref<1x1x108xf32, #tpu.memory_space<vmem>>, %arg11: memref<1x36x36xbf16, #tpu.memory_space<vmem>>, %arg12: memref<1x1x36xf32, #tpu.memory_space<vmem>>, %arg13: memref<1x1x36xf32, #tpu.memory_space<vmem>>, %arg14: memref<1x1x36xf32, #tpu.memory_space<vmem>>, %arg15: memref<1x36x144xbf16, #tpu.memory_space<vmem>>, %arg16: memref<1x1x144xf32, #tpu.memory_space<vmem>>, %arg17: memref<1x144x36xbf16, #tpu.memory_space<vmem>>, %arg18: memref<1x1x36xf32, #tpu.memory_space<vmem>>, %arg19: memref<1x36xf32, #tpu.memory_space<vmem>>, %arg20: memref<1x36xf32, #tpu.memory_space<vmem>>, %arg21: memref<36x7xbf16, #tpu.memory_space<vmem>>, %arg22: memref<1x7xf32, #tpu.memory_space<vmem>>, %arg23: memref<1x1x7xf32, #tpu.memory_space<vmem>>, %arg24: memref<32x36xf32, #tpu.memory_space<vmem>>, %arg25: memref<1x32x36xf32, #tpu.memory_space<vmem>>) attributes {dimension_semantics = [#tpu.dimension_semantics<parallel>, #tpu.dimension_semantics<arbitrary>], iteration_bounds = array<i64: 2, 3>, scalar_prefetch = 0 : i64, scratch_operands = 2 : i64, tpu.core_type = #tpu.core_type<tc>, window_params = [{transform_indices = @transform_0, window_bounds = array<i64: 1, 16, 36>}, {pipeline_mode = #tpu.pipeline_mode<synchronous>, transform_indices = @transform_1, window_bounds = array<i64: 36, 36>}, {pipeline_mode = #tpu.pipeline_mode<synchronous>, transform_indices = @transform_2, window_bounds = array<i64: 1, 36>}, {pipeline_mode = #tpu.pipeline_mode<synchronous>, transform_indices = @transform_3, window_bounds = array<i64: 1, 36>}, {pipeline_mode = #tpu.pipeline_mode<synchronous>, transform_indices = @transform_4, window_bounds = array<i64: 16, 36>}, {transform_indices = @transform_5, window_bounds = array<i64: 1, 1, 36>}, {transform_indices = @transform_6, window_bounds = array<i64: 1, 1, 36>}, {transform_indices = @transform_7, window_bounds = array<i64: 1, 36, 108>}, {transform_indices = @transform_8, window_bounds = array<i64: 1, 1, 108>}, {transform_indices = @transform_9, window_bounds = array<i64: 1, 36, 36>}, {transform_indices = @transform_10, window_bounds = array<i64: 1, 1, 36>}, {transform_indices = @transform_11, window_bounds = array<i64: 1, 1, 36>}, {transform_indices = @transform_12, window_bounds = array<i64: 1, 1, 36>}, {transform_indices = @transform_13, window_bounds = array<i64: 1, 36, 144>}, {transform_indices = @transform_14, window_bounds = array<i64: 1, 1, 144>}, {transform_indices = @transform_15, window_bounds = array<i64: 1, 144, 36>}, {transform_indices = @transform_16, window_bounds = array<i64: 1, 1, 36>}, {pipeline_mode = #tpu.pipeline_mode<synchronous>, transform_indices = @transform_17, window_bounds = array<i64: 1, 36>}, {pipeline_mode = #tpu.pipeline_mode<synchronous>, transform_indices = @transform_18, window_bounds = array<i64: 1, 36>}, {pipeline_mode = #tpu.pipeline_mode<synchronous>, transform_indices = @transform_19, window_bounds = array<i64: 36, 7>}, {pipeline_mode = #tpu.pipeline_mode<synchronous>, transform_indices = @transform_20, window_bounds = array<i64: 1, 7>}, {transform_indices = @transform_21, window_bounds = array<i64: 1, 1, 7>}]} {
    %c0_i32 = arith.constant 0 : i32
    %0 = arith.cmpi eq, %arg1, %c0_i32 : i32
    %1 = arith.extui %0 : i1 to i32
    %c0_i32_0 = arith.constant 0 : i32
    %2 = arith.cmpi ne, %1, %c0_i32_0 : i32
    scf.if %2 {
      %c0_82 = arith.constant 0 : index
      %c0_83 = arith.constant 0 : index
      %c0_84 = arith.constant 0 : index
      %179 = vector.load %arg2[%c0_82, %c0_83, %c0_84] : memref<1x16x36xbf16, #tpu.memory_space<vmem>>, vector<1x16x36xbf16>
      %180 = vector.shape_cast %179 : vector<1x16x36xbf16> to vector<16x36xbf16>
      %c0_85 = arith.constant 0 : index
      %c0_86 = arith.constant 0 : index
      %181 = vector.load %arg3[%c0_85, %c0_86] : memref<36x36xbf16, #tpu.memory_space<vmem>>, vector<36x36xbf16>
      %cst_87 = arith.constant dense<0.000000e+00> : vector<16x36xf32>
      %182 = tpu.matmul %180, %181, %cst_87 {dimension_numbers = #tpu.dot_dimension_numbers<[1], [0], [0], [1], [0, 0, 1, 1], [], []>} : vector<16x36xbf16>, vector<36x36xbf16>, vector<16x36xf32> -> vector<16x36xf32>
      %c0_88 = arith.constant 0 : index
      %c0_89 = arith.constant 0 : index
      %183 = vector.load %arg4[%c0_88, %c0_89] : memref<1x36xf32, #tpu.memory_space<vmem>>, vector<1x36xf32>
      %184 = vector.broadcast %183 : vector<1x36xf32> to vector<16x36xf32>
      %185 = arith.addf %182, %184 : vector<16x36xf32>
      %186 = vector.shape_cast %185 : vector<16x36xf32> to vector<1x16x36xf32>
      %c0_90 = arith.constant 0 : index
      %c0_91 = arith.constant 0 : index
      %187 = vector.load %arg6[%c0_90, %c0_91] : memref<16x36xf32, #tpu.memory_space<vmem>>, vector<16x36xf32>
      %188 = vector.shape_cast %187 : vector<16x36xf32> to vector<1x16x36xf32>
      %189 = arith.addf %186, %188 : vector<1x16x36xf32>
      %c0_92 = arith.constant 0 : index
      %c0_93 = arith.constant 0 : index
      %190 = vector.load %arg5[%c0_92, %c0_93] : memref<1x36xf32, #tpu.memory_space<vmem>>, vector<1x36xf32>
      %191 = vector.shape_cast %190 : vector<1x36xf32> to vector<1x1x36xf32>
      %cst_94 = arith.constant 0.000000e+00 : f32
      %192 = vector.broadcast %cst_94 : f32 to vector<1x15x36xf32>
      %193 = tpu.concatenate %191, %189, %192 in 1 : vector<1x1x36xf32>, vector<1x16x36xf32>, vector<1x15x36xf32> -> vector<1x32x36xf32>
      %194 = vector.shape_cast %193 : vector<1x32x36xf32> to vector<32x36xf32>
      %c0_95 = arith.constant 0 : index
      %c0_96 = arith.constant 0 : index
      %195 = vector.load %arg24[%c0_95, %c0_96] : memref<32x36xf32, #tpu.memory_space<vmem>>, vector<32x36xf32>
      tpu.vector_store %arg24[%c0_95, %c0_96], %194 {strides = array<i32>} : memref<32x36xf32, #tpu.memory_space<vmem>>, vector<32x36xf32>,
    } else {
    }
    %c0 = arith.constant 0 : index
    %c0_1 = arith.constant 0 : index
    %3 = vector.load %arg24[%c0, %c0_1] : memref<32x36xf32, #tpu.memory_space<vmem>>, vector<32x36xf32>
    %c0_2 = arith.constant 0 : index
    %c0_3 = arith.constant 0 : index
    %c0_4 = arith.constant 0 : index
    %4 = vector.load %arg7[%c0_2, %c0_3, %c0_4] : memref<1x1x36xf32, #tpu.memory_space<vmem>>, vector<1x1x36xf32>
    %5 = vector.shape_cast %4 : vector<1x1x36xf32> to vector<1x36xf32>
    %c0_5 = arith.constant 0 : index
    %c0_6 = arith.constant 0 : index
    %c0_7 = arith.constant 0 : index
    %6 = vector.load %arg8[%c0_5, %c0_6, %c0_7] : memref<1x1x36xf32, #tpu.memory_space<vmem>>, vector<1x1x36xf32>
    %7 = vector.shape_cast %6 : vector<1x1x36xf32> to vector<1x36xf32>
    %cst = arith.constant dense<0.000000e+00> : vector<32xf32>
    %8 = vector.multi_reduction <add>, %3, %cst [1] : vector<32x36xf32> to vector<32xf32>
    %9 = vector.shape_cast %8 : vector<32xf32> to vector<32x1xf32>
    %cst_8 = arith.constant 3.600000e+01 : f32
    %10 = vector.broadcast %cst_8 : f32 to vector<32x1xf32>
    %11 = arith.divf %9, %10 : vector<32x1xf32>
    %12 = vector.broadcast %11 : vector<32x1xf32> to vector<32x36xf32>
    %13 = arith.subf %3, %12 : vector<32x36xf32>
    %14 = arith.mulf %13, %13 : vector<32x36xf32>
    %cst_9 = arith.constant dense<0.000000e+00> : vector<32xf32>
    %15 = vector.multi_reduction <add>, %14, %cst_9 [1] : vector<32x36xf32> to vector<32xf32>
    %16 = vector.shape_cast %15 : vector<32xf32> to vector<32x1xf32>
    %cst_10 = arith.constant 3.600000e+01 : f32
    %17 = vector.broadcast %cst_10 : f32 to vector<32x1xf32>
    %18 = arith.divf %16, %17 : vector<32x1xf32>
    %19 = vector.broadcast %11 : vector<32x1xf32> to vector<32x36xf32>
    %20 = arith.subf %3, %19 : vector<32x36xf32>
    %cst_11 = arith.constant 9.99999974E-6 : f32
    %21 = vector.broadcast %cst_11 : f32 to vector<32x1xf32>
    %22 = arith.addf %18, %21 : vector<32x1xf32>
    %23 = math.rsqrt %22 : vector<32x1xf32>
    %24 = vector.broadcast %23 : vector<32x1xf32> to vector<32x36xf32>
    %25 = arith.mulf %20, %24 : vector<32x36xf32>
    %26 = vector.broadcast %5 : vector<1x36xf32> to vector<32x36xf32>
    %27 = arith.mulf %25, %26 : vector<32x36xf32>
    %28 = vector.broadcast %7 : vector<1x36xf32> to vector<32x36xf32>
    %29 = arith.addf %27, %28 : vector<32x36xf32>
    %30 = arith.truncf %29 : vector<32x36xf32> to vector<32x36xbf16>
    %c0_12 = arith.constant 0 : index
    %c0_13 = arith.constant 0 : index
    %c0_14 = arith.constant 0 : index
    %31 = vector.load %arg9[%c0_12, %c0_13, %c0_14] : memref<1x36x108xbf16, #tpu.memory_space<vmem>>, vector<1x36x108xbf16>
    %32 = vector.shape_cast %31 : vector<1x36x108xbf16> to vector<36x108xbf16>
    %cst_15 = arith.constant dense<0.000000e+00> : vector<32x108xf32>
    %33 = tpu.matmul %30, %32, %cst_15 {dimension_numbers = #tpu.dot_dimension_numbers<[1], [0], [0], [1], [0, 0, 1, 1], [], []>} : vector<32x36xbf16>, vector<36x108xbf16>, vector<32x108xf32> -> vector<32x108xf32>
    %c0_16 = arith.constant 0 : index
    %c0_17 = arith.constant 0 : index
    %c0_18 = arith.constant 0 : index
    %34 = vector.load %arg10[%c0_16, %c0_17, %c0_18] : memref<1x1x108xf32, #tpu.memory_space<vmem>>, vector<1x1x108xf32>
    %35 = vector.shape_cast %34 : vector<1x1x108xf32> to vector<1x108xf32>
    %36 = vector.broadcast %35 : vector<1x108xf32> to vector<32x108xf32>
    %37 = arith.addf %33, %36 : vector<32x108xf32>
    %38 = vector.shape_cast %37 : vector<32x108xf32> to vector<1x32x108xf32>
    %39 = tpu.iota {dimensions = array<i32: 2>} : vector<1x32x32xi32>
    %c17_i32 = arith.constant 17 : i32
    %40 = vector.broadcast %c17_i32 : i32 to vector<1x32x32xi32>
    %41 = arith.cmpi slt, %39, %40 : vector<1x32x32xi32>
    %cst_19 = arith.constant 0.000000e+00 : f32
    %cst_20 = arith.constant -1.000000e+30 : f32
    %42 = vector.broadcast %cst_19 : f32 to vector<1x32x32xf32>
    %43 = vector.broadcast %cst_20 : f32 to vector<1x32x32xf32>
    %44 = arith.select %41, %42, %43 : vector<1x32x32xi1>, vector<1x32x32xf32>
    %45 = vector.extract_strided_slice %38 {offsets = [0, 0, 0], sizes = [1, 32, 12], strides = [1, 1, 1]} : vector<1x32x108xf32> to vector<1x32x12xf32>
    %46 = arith.truncf %45 : vector<1x32x12xf32> to vector<1x32x12xbf16>
    %47 = vector.extract_strided_slice %38 {offsets = [0, 0, 36], sizes = [1, 32, 12], strides = [1, 1, 1]} : vector<1x32x108xf32> to vector<1x32x12xf32>
    %48 = arith.truncf %47 : vector<1x32x12xf32> to vector<1x32x12xbf16>
    %49 = vector.extract_strided_slice %38 {offsets = [0, 0, 72], sizes = [1, 32, 12], strides = [1, 1, 1]} : vector<1x32x108xf32> to vector<1x32x12xf32>
    %50 = arith.truncf %49 : vector<1x32x12xf32> to vector<1x32x12xbf16>
    "tpu.trace_start"() <{level = 10 : i32, message = "bqd,bkd->bqk"}> : () -> ()
    %cst_21 = arith.constant dense<0.000000e+00> : vector<1x32x32xf32>
    %51 = tpu.matmul %46, %48, %cst_21 {dimension_numbers = #tpu.dot_dimension_numbers<[2], [2], [1], [1], [0, 0, 0, 1, 1, 1], [0], [0]>} : vector<1x32x12xbf16>, vector<1x32x12xbf16>, vector<1x32x32xf32> -> vector<1x32x32xf32>
    "tpu.trace_stop"() : () -> ()
    %52 = arith.addf %51, %44 : vector<1x32x32xf32>
    %cst_22 = arith.constant dense<0xFF800000> : vector<1x32xf32>
    %53 = vector.multi_reduction <maximumf>, %52, %cst_22 [2] : vector<1x32x32xf32> to vector<1x32xf32>
    %54 = vector.shape_cast %53 : vector<1x32xf32> to vector<1x32x1xf32>
    %55 = vector.broadcast %54 : vector<1x32x1xf32> to vector<1x32x32xf32>
    %56 = arith.subf %52, %55 : vector<1x32x32xf32>
    %57 = math.exp %56 : vector<1x32x32xf32>
    %cst_23 = arith.constant dense<0.000000e+00> : vector<1x32xf32>
    %58 = vector.multi_reduction <add>, %57, %cst_23 [2] : vector<1x32x32xf32> to vector<1x32xf32>
    %59 = vector.shape_cast %58 : vector<1x32xf32> to vector<1x32x1xf32>
    %60 = tpu.reciprocal %59 {approx = true} : vector<1x32x1xf32> -> vector<1x32x1xf32>
    %61 = vector.broadcast %60 : vector<1x32x1xf32> to vector<1x32x32xf32>
    %62 = arith.mulf %57, %61 : vector<1x32x32xf32>
    %63 = arith.truncf %62 : vector<1x32x32xf32> to vector<1x32x32xbf16>
    "tpu.trace_start"() <{level = 10 : i32, message = "bqk,bkd->bqd"}> : () -> ()
    %cst_24 = arith.constant dense<0.000000e+00> : vector<1x32x12xf32>
    %64 = tpu.matmul %63, %50, %cst_24 {dimension_numbers = #tpu.dot_dimension_numbers<[2], [1], [1], [2], [0, 0, 0, 1, 1, 2], [0], [0]>} : vector<1x32x32xbf16>, vector<1x32x12xbf16>, vector<1x32x12xf32> -> vector<1x32x12xf32>
    "tpu.trace_stop"() : () -> ()
    %c0_25 = arith.constant 0 : index
    %c0_26 = arith.constant 0 : index
    %c0_27 = arith.constant 0 : index
    %65 = vector.load %arg25[%c0_25, %c0_26, %c0_27] : memref<1x32x36xf32, #tpu.memory_space<vmem>>, vector<1x32x12xf32>
    tpu.vector_store %arg25[%c0_25, %c0_26, %c0_27], %64 {strides = array<i32>} : memref<1x32x36xf32, #tpu.memory_space<vmem>>, vector<1x32x12xf32>,
    %66 = vector.extract_strided_slice %38 {offsets = [0, 0, 12], sizes = [1, 32, 12], strides = [1, 1, 1]} : vector<1x32x108xf32> to vector<1x32x12xf32>
    %67 = arith.truncf %66 : vector<1x32x12xf32> to vector<1x32x12xbf16>
    %68 = vector.extract_strided_slice %38 {offsets = [0, 0, 48], sizes = [1, 32, 12], strides = [1, 1, 1]} : vector<1x32x108xf32> to vector<1x32x12xf32>
    %69 = arith.truncf %68 : vector<1x32x12xf32> to vector<1x32x12xbf16>
    %70 = vector.extract_strided_slice %38 {offsets = [0, 0, 84], sizes = [1, 32, 12], strides = [1, 1, 1]} : vector<1x32x108xf32> to vector<1x32x12xf32>
    %71 = arith.truncf %70 : vector<1x32x12xf32> to vector<1x32x12xbf16>
    "tpu.trace_start"() <{level = 10 : i32, message = "bqd,bkd->bqk"}> : () -> ()
    %cst_28 = arith.constant dense<0.000000e+00> : vector<1x32x32xf32>
    %72 = tpu.matmul %67, %69, %cst_28 {dimension_numbers = #tpu.dot_dimension_numbers<[2], [2], [1], [1], [0, 0, 0, 1, 1, 1], [0], [0]>} : vector<1x32x12xbf16>, vector<1x32x12xbf16>, vector<1x32x32xf32> -> vector<1x32x32xf32>
    "tpu.trace_stop"() : () -> ()
    %73 = arith.addf %72, %44 : vector<1x32x32xf32>
    %cst_29 = arith.constant dense<0xFF800000> : vector<1x32xf32>
    %74 = vector.multi_reduction <maximumf>, %73, %cst_29 [2] : vector<1x32x32xf32> to vector<1x32xf32>
    %75 = vector.shape_cast %74 : vector<1x32xf32> to vector<1x32x1xf32>
    %76 = vector.broadcast %75 : vector<1x32x1xf32> to vector<1x32x32xf32>
    %77 = arith.subf %73, %76 : vector<1x32x32xf32>
    %78 = math.exp %77 : vector<1x32x32xf32>
    %cst_30 = arith.constant dense<0.000000e+00> : vector<1x32xf32>
    %79 = vector.multi_reduction <add>, %78, %cst_30 [2] : vector<1x32x32xf32> to vector<1x32xf32>
    %80 = vector.shape_cast %79 : vector<1x32xf32> to vector<1x32x1xf32>
    %81 = tpu.reciprocal %80 {approx = true} : vector<1x32x1xf32> -> vector<1x32x1xf32>
    %82 = vector.broadcast %81 : vector<1x32x1xf32> to vector<1x32x32xf32>
    %83 = arith.mulf %78, %82 : vector<1x32x32xf32>
    %84 = arith.truncf %83 : vector<1x32x32xf32> to vector<1x32x32xbf16>
    "tpu.trace_start"() <{level = 10 : i32, message = "bqk,bkd->bqd"}> : () -> ()
    %cst_31 = arith.constant dense<0.000000e+00> : vector<1x32x12xf32>
    %85 = tpu.matmul %84, %71, %cst_31 {dimension_numbers = #tpu.dot_dimension_numbers<[2], [1], [1], [2], [0, 0, 0, 1, 1, 2], [0], [0]>} : vector<1x32x32xbf16>, vector<1x32x12xbf16>, vector<1x32x12xf32> -> vector<1x32x12xf32>
    "tpu.trace_stop"() : () -> ()
    %c0_32 = arith.constant 0 : index
    %c0_33 = arith.constant 0 : index
    %c12 = arith.constant 12 : index
    %86 = vector.load %arg25[%c0_32, %c0_33, %c12] : memref<1x32x36xf32, #tpu.memory_space<vmem>>, vector<1x32x12xf32>
    tpu.vector_store %arg25[%c0_32, %c0_33, %c12], %85 {strides = array<i32>} : memref<1x32x36xf32, #tpu.memory_space<vmem>>, vector<1x32x12xf32>,
    %87 = vector.extract_strided_slice %38 {offsets = [0, 0, 24], sizes = [1, 32, 12], strides = [1, 1, 1]} : vector<1x32x108xf32> to vector<1x32x12xf32>
    %88 = arith.truncf %87 : vector<1x32x12xf32> to vector<1x32x12xbf16>
    %89 = vector.extract_strided_slice %38 {offsets = [0, 0, 60], sizes = [1, 32, 12], strides = [1, 1, 1]} : vector<1x32x108xf32> to vector<1x32x12xf32>
    %90 = arith.truncf %89 : vector<1x32x12xf32> to vector<1x32x12xbf16>
    %91 = vector.extract_strided_slice %38 {offsets = [0, 0, 96], sizes = [1, 32, 12], strides = [1, 1, 1]} : vector<1x32x108xf32> to vector<1x32x12xf32>
    %92 = arith.truncf %91 : vector<1x32x12xf32> to vector<1x32x12xbf16>
    "tpu.trace_start"() <{level = 10 : i32, message = "bqd,bkd->bqk"}> : () -> ()
    %cst_34 = arith.constant dense<0.000000e+00> : vector<1x32x32xf32>
    %93 = tpu.matmul %88, %90, %cst_34 {dimension_numbers = #tpu.dot_dimension_numbers<[2], [2], [1], [1], [0, 0, 0, 1, 1, 1], [0], [0]>} : vector<1x32x12xbf16>, vector<1x32x12xbf16>, vector<1x32x32xf32> -> vector<1x32x32xf32>
    "tpu.trace_stop"() : () -> ()
    %94 = arith.addf %93, %44 : vector<1x32x32xf32>
    %cst_35 = arith.constant dense<0xFF800000> : vector<1x32xf32>
    %95 = vector.multi_reduction <maximumf>, %94, %cst_35 [2] : vector<1x32x32xf32> to vector<1x32xf32>
    %96 = vector.shape_cast %95 : vector<1x32xf32> to vector<1x32x1xf32>
    %97 = vector.broadcast %96 : vector<1x32x1xf32> to vector<1x32x32xf32>
    %98 = arith.subf %94, %97 : vector<1x32x32xf32>
    %99 = math.exp %98 : vector<1x32x32xf32>
    %cst_36 = arith.constant dense<0.000000e+00> : vector<1x32xf32>
    %100 = vector.multi_reduction <add>, %99, %cst_36 [2] : vector<1x32x32xf32> to vector<1x32xf32>
    %101 = vector.shape_cast %100 : vector<1x32xf32> to vector<1x32x1xf32>
    %102 = tpu.reciprocal %101 {approx = true} : vector<1x32x1xf32> -> vector<1x32x1xf32>
    %103 = vector.broadcast %102 : vector<1x32x1xf32> to vector<1x32x32xf32>
    %104 = arith.mulf %99, %103 : vector<1x32x32xf32>
    %105 = arith.truncf %104 : vector<1x32x32xf32> to vector<1x32x32xbf16>
    "tpu.trace_start"() <{level = 10 : i32, message = "bqk,bkd->bqd"}> : () -> ()
    %cst_37 = arith.constant dense<0.000000e+00> : vector<1x32x12xf32>
    %106 = tpu.matmul %105, %92, %cst_37 {dimension_numbers = #tpu.dot_dimension_numbers<[2], [1], [1], [2], [0, 0, 0, 1, 1, 2], [0], [0]>} : vector<1x32x32xbf16>, vector<1x32x12xbf16>, vector<1x32x12xf32> -> vector<1x32x12xf32>
    "tpu.trace_stop"() : () -> ()
    %c0_38 = arith.constant 0 : index
    %c0_39 = arith.constant 0 : index
    %c24 = arith.constant 24 : index
    %107 = vector.load %arg25[%c0_38, %c0_39, %c24] : memref<1x32x36xf32, #tpu.memory_space<vmem>>, vector<1x32x12xf32>
    tpu.vector_store %arg25[%c0_38, %c0_39, %c24], %106 {strides = array<i32>} : memref<1x32x36xf32, #tpu.memory_space<vmem>>, vector<1x32x12xf32>,
    %c0_40 = arith.constant 0 : index
    %c0_41 = arith.constant 0 : index
    %c0_42 = arith.constant 0 : index
    %108 = vector.load %arg25[%c0_40, %c0_41, %c0_42] : memref<1x32x36xf32, #tpu.memory_space<vmem>>, vector<1x32x36xf32>
    %109 = vector.shape_cast %108 : vector<1x32x36xf32> to vector<32x36xf32>
    %110 = arith.truncf %109 : vector<32x36xf32> to vector<32x36xbf16>
    %c0_43 = arith.constant 0 : index
    %c0_44 = arith.constant 0 : index
    %c0_45 = arith.constant 0 : index
    %111 = vector.load %arg11[%c0_43, %c0_44, %c0_45] : memref<1x36x36xbf16, #tpu.memory_space<vmem>>, vector<1x36x36xbf16>
    %112 = vector.shape_cast %111 : vector<1x36x36xbf16> to vector<36x36xbf16>
    %cst_46 = arith.constant dense<0.000000e+00> : vector<32x36xf32>
    %113 = tpu.matmul %110, %112, %cst_46 {dimension_numbers = #tpu.dot_dimension_numbers<[1], [0], [0], [1], [0, 0, 1, 1], [], []>} : vector<32x36xbf16>, vector<36x36xbf16>, vector<32x36xf32> -> vector<32x36xf32>
    %114 = arith.addf %3, %113 : vector<32x36xf32>
    %c0_47 = arith.constant 0 : index
    %c0_48 = arith.constant 0 : index
    %c0_49 = arith.constant 0 : index
    %115 = vector.load %arg12[%c0_47, %c0_48, %c0_49] : memref<1x1x36xf32, #tpu.memory_space<vmem>>, vector<1x1x36xf32>
    %116 = vector.shape_cast %115 : vector<1x1x36xf32> to vector<1x36xf32>
    %117 = vector.broadcast %116 : vector<1x36xf32> to vector<32x36xf32>
    %118 = arith.addf %114, %117 : vector<32x36xf32>
    %c0_50 = arith.constant 0 : index
    %c0_51 = arith.constant 0 : index
    %c0_52 = arith.constant 0 : index
    %119 = vector.load %arg13[%c0_50, %c0_51, %c0_52] : memref<1x1x36xf32, #tpu.memory_space<vmem>>, vector<1x1x36xf32>
    %120 = vector.shape_cast %119 : vector<1x1x36xf32> to vector<1x36xf32>
    %c0_53 = arith.constant 0 : index
    %c0_54 = arith.constant 0 : index
    %c0_55 = arith.constant 0 : index
    %121 = vector.load %arg14[%c0_53, %c0_54, %c0_55] : memref<1x1x36xf32, #tpu.memory_space<vmem>>, vector<1x1x36xf32>
    %122 = vector.shape_cast %121 : vector<1x1x36xf32> to vector<1x36xf32>
    %cst_56 = arith.constant dense<0.000000e+00> : vector<32xf32>
    %123 = vector.multi_reduction <add>, %118, %cst_56 [1] : vector<32x36xf32> to vector<32xf32>
    %124 = vector.shape_cast %123 : vector<32xf32> to vector<32x1xf32>
    %cst_57 = arith.constant 3.600000e+01 : f32
    %125 = vector.broadcast %cst_57 : f32 to vector<32x1xf32>
    %126 = arith.divf %124, %125 : vector<32x1xf32>
    %127 = vector.broadcast %126 : vector<32x1xf32> to vector<32x36xf32>
    %128 = arith.subf %118, %127 : vector<32x36xf32>
    %129 = arith.mulf %128, %128 : vector<32x36xf32>
    %cst_58 = arith.constant dense<0.000000e+00> : vector<32xf32>
    %130 = vector.multi_reduction <add>, %129, %cst_58 [1] : vector<32x36xf32> to vector<32xf32>
    %131 = vector.shape_cast %130 : vector<32xf32> to vector<32x1xf32>
    %cst_59 = arith.constant 3.600000e+01 : f32
    %132 = vector.broadcast %cst_59 : f32 to vector<32x1xf32>
    %133 = arith.divf %131, %132 : vector<32x1xf32>
    %134 = vector.broadcast %126 : vector<32x1xf32> to vector<32x36xf32>
    %135 = arith.subf %118, %134 : vector<32x36xf32>
    %cst_60 = arith.constant 9.99999974E-6 : f32
    %136 = vector.broadcast %cst_60 : f32 to vector<32x1xf32>
    %137 = arith.addf %133, %136 : vector<32x1xf32>
    %138 = math.rsqrt %137 : vector<32x1xf32>
    %139 = vector.broadcast %138 : vector<32x1xf32> to vector<32x36xf32>
    %140 = arith.mulf %135, %139 : vector<32x36xf32>
    %141 = vector.broadcast %120 : vector<1x36xf32> to vector<32x36xf32>
    %142 = arith.mulf %140, %141 : vector<32x36xf32>
    %143 = vector.broadcast %122 : vector<1x36xf32> to vector<32x36xf32>
    %144 = arith.addf %142, %143 : vector<32x36xf32>
    %145 = arith.truncf %144 : vector<32x36xf32> to vector<32x36xbf16>
    %c0_61 = arith.constant 0 : index
    %c0_62 = arith.constant 0 : index
    %c0_63 = arith.constant 0 : index
    %146 = vector.load %arg15[%c0_61, %c0_62, %c0_63] : memref<1x36x144xbf16, #tpu.memory_space<vmem>>, vector<1x36x144xbf16>
    %147 = vector.shape_cast %146 : vector<1x36x144xbf16> to vector<36x144xbf16>
    %cst_64 = arith.constant dense<0.000000e+00> : vector<32x144xf32>
    %148 = tpu.matmul %145, %147, %cst_64 {dimension_numbers = #tpu.dot_dimension_numbers<[1], [0], [0], [1], [0, 0, 1, 1], [], []>} : vector<32x36xbf16>, vector<36x144xbf16>, vector<32x144xf32> -> vector<32x144xf32>
    %c0_65 = arith.constant 0 : index
    %c0_66 = arith.constant 0 : index
    %c0_67 = arith.constant 0 : index
    %149 = vector.load %arg16[%c0_65, %c0_66, %c0_67] : memref<1x1x144xf32, #tpu.memory_space<vmem>>, vector<1x1x144xf32>
    %150 = vector.shape_cast %149 : vector<1x1x144xf32> to vector<1x144xf32>
    %151 = vector.broadcast %150 : vector<1x144xf32> to vector<32x144xf32>
    %152 = arith.addf %148, %151 : vector<32x144xf32>
    %cst_68 = arith.constant 5.000000e-01 : f32
    %153 = vector.broadcast %cst_68 : f32 to vector<32x144xf32>
    %154 = arith.mulf %153, %152 : vector<32x144xf32>
    %cst_69 = arith.constant 4.471500e-02 : f32
    %155 = vector.broadcast %cst_69 : f32 to vector<32x144xf32>
    %156 = arith.mulf %155, %152 : vector<32x144xf32>
    %157 = arith.mulf %156, %152 : vector<32x144xf32>
    %158 = arith.mulf %157, %152 : vector<32x144xf32>
    %159 = arith.addf %152, %158 : vector<32x144xf32>
    %cst_70 = arith.constant 0.797884583 : f32
    %160 = vector.broadcast %cst_70 : f32 to vector<32x144xf32>
    %161 = arith.mulf %160, %159 : vector<32x144xf32>
    %162 = math.tanh %161 : vector<32x144xf32>
    %cst_71 = arith.constant 1.000000e+00 : f32
    %163 = vector.broadcast %cst_71 : f32 to vector<32x144xf32>
    %164 = arith.addf %163, %162 : vector<32x144xf32>
    %165 = arith.mulf %154, %164 : vector<32x144xf32>
    %166 = arith.truncf %165 : vector<32x144xf32> to vector<32x144xbf16>
    %c0_72 = arith.constant 0 : index
    %c0_73 = arith.constant 0 : index
    %c0_74 = arith.constant 0 : index
    %167 = vector.load %arg17[%c0_72, %c0_73, %c0_74] : memref<1x144x36xbf16, #tpu.memory_space<vmem>>, vector<1x144x36xbf16>
    %168 = vector.shape_cast %167 : vector<1x144x36xbf16> to vector<144x36xbf16>
    %cst_75 = arith.constant dense<0.000000e+00> : vector<32x36xf32>
    %169 = tpu.matmul %166, %168, %cst_75 {dimension_numbers = #tpu.dot_dimension_numbers<[1], [0], [0], [1], [0, 0, 1, 1], [], []>} : vector<32x144xbf16>, vector<144x36xbf16>, vector<32x36xf32> -> vector<32x36xf32>
    %170 = arith.addf %118, %169 : vector<32x36xf32>
    %c0_76 = arith.constant 0 : index
    %c0_77 = arith.constant 0 : index
    %c0_78 = arith.constant 0 : index
    %171 = vector.load %arg18[%c0_76, %c0_77, %c0_78] : memref<1x1x36xf32, #tpu.memory_space<vmem>>, vector<1x1x36xf32>
    %172 = vector.shape_cast %171 : vector<1x1x36xf32> to vector<1x36xf32>
    %173 = vector.broadcast %172 : vector<1x36xf32> to vector<32x36xf32>
    %174 = arith.addf %170, %173 : vector<32x36xf32>
    %c0_79 = arith.constant 0 : index
    %c0_80 = arith.constant 0 : index
    %175 = vector.load %arg24[%c0_79, %c0_80] : memref<32x36xf32, #tpu.memory_space<vmem>>, vector<32x36xf32>
    tpu.vector_store %arg24[%c0_79, %c0_80], %174 {strides = array<i32>} : memref<32x36xf32, #tpu.memory_space<vmem>>, vector<32x36xf32>,
    %c2_i32 = arith.constant 2 : i32
    %176 = arith.cmpi eq, %arg1, %c2_i32 : i32
    %177 = arith.extui %176 : i1 to i32
    %c0_i32_81 = arith.constant 0 : i32
    %178 = arith.cmpi ne, %177, %c0_i32_81 : i32
    scf.if %178 {
      %179 = vector.shape_cast %174 : vector<32x36xf32> to vector<1x32x36xf32>
      %180 = vector.extract_strided_slice %179 {offsets = [0, 0, 0], sizes = [1, 1, 36], strides = [1, 1, 1]} : vector<1x32x36xf32> to vector<1x1x36xf32>
      %181 = vector.shape_cast %180 : vector<1x1x36xf32> to vector<1x36xf32>
      %c0_82 = arith.constant 0 : index
      %c0_83 = arith.constant 0 : index
      %182 = vector.load %arg19[%c0_82, %c0_83] : memref<1x36xf32, #tpu.memory_space<vmem>>, vector<1x36xf32>
      %c0_84 = arith.constant 0 : index
      %c0_85 = arith.constant 0 : index
      %183 = vector.load %arg20[%c0_84, %c0_85] : memref<1x36xf32, #tpu.memory_space<vmem>>, vector<1x36xf32>
      %cst_86 = arith.constant dense<0.000000e+00> : vector<1xf32>
      %184 = vector.multi_reduction <add>, %181, %cst_86 [1] : vector<1x36xf32> to vector<1xf32>
      %185 = vector.shape_cast %184 : vector<1xf32> to vector<1x1xf32>
      %cst_87 = arith.constant 3.600000e+01 : f32
      %186 = vector.broadcast %cst_87 : f32 to vector<1x1xf32>
      %187 = arith.divf %185, %186 : vector<1x1xf32>
      %188 = vector.broadcast %187 : vector<1x1xf32> to vector<1x36xf32>
      %189 = arith.subf %181, %188 : vector<1x36xf32>
      %190 = arith.mulf %189, %189 : vector<1x36xf32>
      %cst_88 = arith.constant dense<0.000000e+00> : vector<1xf32>
      %191 = vector.multi_reduction <add>, %190, %cst_88 [1] : vector<1x36xf32> to vector<1xf32>
      %192 = vector.shape_cast %191 : vector<1xf32> to vector<1x1xf32>
      %cst_89 = arith.constant 3.600000e+01 : f32
      %193 = vector.broadcast %cst_89 : f32 to vector<1x1xf32>
      %194 = arith.divf %192, %193 : vector<1x1xf32>
      %195 = vector.broadcast %187 : vector<1x1xf32> to vector<1x36xf32>
      %196 = arith.subf %181, %195 : vector<1x36xf32>
      %cst_90 = arith.constant 9.99999974E-6 : f32
      %197 = vector.broadcast %cst_90 : f32 to vector<1x1xf32>
      %198 = arith.addf %194, %197 : vector<1x1xf32>
      %199 = math.rsqrt %198 : vector<1x1xf32>
      %200 = vector.broadcast %199 : vector<1x1xf32> to vector<1x36xf32>
      %201 = arith.mulf %196, %200 : vector<1x36xf32>
      %202 = arith.mulf %201, %182 : vector<1x36xf32>
      %203 = arith.addf %202, %183 : vector<1x36xf32>
      %204 = arith.truncf %203 : vector<1x36xf32> to vector<1x36xbf16>
      %c0_91 = arith.constant 0 : index
      %c0_92 = arith.constant 0 : index
      %205 = vector.load %arg21[%c0_91, %c0_92] : memref<36x7xbf16, #tpu.memory_space<vmem>>, vector<36x7xbf16>
      %cst_93 = arith.constant dense<0.000000e+00> : vector<1x7xf32>
      %206 = tpu.matmul %204, %205, %cst_93 {dimension_numbers = #tpu.dot_dimension_numbers<[1], [0], [0], [1], [0, 0, 1, 1], [], []>} : vector<1x36xbf16>, vector<36x7xbf16>, vector<1x7xf32> -> vector<1x7xf32>
      %c0_94 = arith.constant 0 : index
      %c0_95 = arith.constant 0 : index
      %207 = vector.load %arg22[%c0_94, %c0_95] : memref<1x7xf32, #tpu.memory_space<vmem>>, vector<1x7xf32>
      %208 = arith.addf %206, %207 : vector<1x7xf32>
      %c0_96 = arith.constant 0 : index
      %c0_97 = arith.constant 0 : index
      %c0_98 = arith.constant 0 : index
      %209 = vector.load %arg23[%c0_96, %c0_97, %c0_98] : memref<1x1x7xf32, #tpu.memory_space<vmem>>, vector<1x1x7xf32>
      %210 = vector.shape_cast %209 : vector<1x1x7xf32> to vector<1x7xf32>
      %211 = vector.shape_cast %208 : vector<1x7xf32> to vector<1x1x7xf32>
      tpu.vector_store %arg23[%c0_96, %c0_97, %c0_98], %211 {strides = array<i32>} : memref<1x1x7xf32, #tpu.memory_space<vmem>>, vector<1x1x7xf32>,
    } else {
    }
    return
  }
  func.func @transform_0(%arg0: i32, %arg1: i32) -> (i32, i32, i32) {
    %c0_i32 = arith.constant 0 : i32
    %c0_i32_0 = arith.constant 0 : i32
    %c0_i32_1 = arith.constant 0 : i32
    return %arg0, %c0_i32, %c0_i32_0 : i32, i32, i32
  }
  func.func @transform_1(%arg0: i32, %arg1: i32) -> (i32, i32) {
    %c0_i32 = arith.constant 0 : i32
    %c0_i32_0 = arith.constant 0 : i32
    %c0_i32_1 = arith.constant 0 : i32
    return %c0_i32, %c0_i32_0 : i32, i32
  }
  func.func @transform_2(%arg0: i32, %arg1: i32) -> (i32, i32) {
    %c0_i32 = arith.constant 0 : i32
    %c0_i32_0 = arith.constant 0 : i32
    %c0_i32_1 = arith.constant 0 : i32
    return %c0_i32, %c0_i32_0 : i32, i32
  }
  func.func @transform_3(%arg0: i32, %arg1: i32) -> (i32, i32) {
    %c0_i32 = arith.constant 0 : i32
    %c0_i32_0 = arith.constant 0 : i32
    %c0_i32_1 = arith.constant 0 : i32
    return %c0_i32, %c0_i32_0 : i32, i32
  }
  func.func @transform_4(%arg0: i32, %arg1: i32) -> (i32, i32) {
    %c0_i32 = arith.constant 0 : i32
    %c0_i32_0 = arith.constant 0 : i32
    %c0_i32_1 = arith.constant 0 : i32
    return %c0_i32, %c0_i32_0 : i32, i32
  }
  func.func @transform_5(%arg0: i32, %arg1: i32) -> (i32, i32, i32) {
    %c0_i32 = arith.constant 0 : i32
    %c0_i32_0 = arith.constant 0 : i32
    %c0_i32_1 = arith.constant 0 : i32
    return %arg1, %c0_i32, %c0_i32_0 : i32, i32, i32
  }
  func.func @transform_6(%arg0: i32, %arg1: i32) -> (i32, i32, i32) {
    %c0_i32 = arith.constant 0 : i32
    %c0_i32_0 = arith.constant 0 : i32
    %c0_i32_1 = arith.constant 0 : i32
    return %arg1, %c0_i32, %c0_i32_0 : i32, i32, i32
  }
  func.func @transform_7(%arg0: i32, %arg1: i32) -> (i32, i32, i32) {
    %c0_i32 = arith.constant 0 : i32
    %c0_i32_0 = arith.constant 0 : i32
    %c0_i32_1 = arith.constant 0 : i32
    return %arg1, %c0_i32, %c0_i32_0 : i32, i32, i32
  }
  func.func @transform_8(%arg0: i32, %arg1: i32) -> (i32, i32, i32) {
    %c0_i32 = arith.constant 0 : i32
    %c0_i32_0 = arith.constant 0 : i32
    %c0_i32_1 = arith.constant 0 : i32
    return %arg1, %c0_i32, %c0_i32_0 : i32, i32, i32
  }
  func.func @transform_9(%arg0: i32, %arg1: i32) -> (i32, i32, i32) {
    %c0_i32 = arith.constant 0 : i32
    %c0_i32_0 = arith.constant 0 : i32
    %c0_i32_1 = arith.constant 0 : i32
    return %arg1, %c0_i32, %c0_i32_0 : i32, i32, i32
  }
  func.func @transform_10(%arg0: i32, %arg1: i32) -> (i32, i32, i32) {
    %c0_i32 = arith.constant 0 : i32
    %c0_i32_0 = arith.constant 0 : i32
    %c0_i32_1 = arith.constant 0 : i32
    return %arg1, %c0_i32, %c0_i32_0 : i32, i32, i32
  }
  func.func @transform_11(%arg0: i32, %arg1: i32) -> (i32, i32, i32) {
    %c0_i32 = arith.constant 0 : i32
    %c0_i32_0 = arith.constant 0 : i32
    %c0_i32_1 = arith.constant 0 : i32
    return %arg1, %c0_i32, %c0_i32_0 : i32, i32, i32
  }
  func.func @transform_12(%arg0: i32, %arg1: i32) -> (i32, i32, i32) {
    %c0_i32 = arith.constant 0 : i32
    %c0_i32_0 = arith.constant 0 : i32
    %c0_i32_1 = arith.constant 0 : i32
    return %arg1, %c0_i32, %c0_i32_0 : i32, i32, i32
  }
  func.func @transform_13(%arg0: i32, %arg1: i32) -> (i32, i32, i32) {
    %c0_i32 = arith.constant 0 : i32
    %c0_i32_0 = arith.constant 0 : i32
    %c0_i32_1 = arith.constant 0 : i32
    return %arg1, %c0_i32, %c0_i32_0 : i32, i32, i32
  }
  func.func @transform_14(%arg0: i32, %arg1: i32) -> (i32, i32, i32) {
    %c0_i32 = arith.constant 0 : i32
    %c0_i32_0 = arith.constant 0 : i32
    %c0_i32_1 = arith.constant 0 : i32
    return %arg1, %c0_i32, %c0_i32_0 : i32, i32, i32
  }
  func.func @transform_15(%arg0: i32, %arg1: i32) -> (i32, i32, i32) {
    %c0_i32 = arith.constant 0 : i32
    %c0_i32_0 = arith.constant 0 : i32
    %c0_i32_1 = arith.constant 0 : i32
    return %arg1, %c0_i32, %c0_i32_0 : i32, i32, i32
  }
  func.func @transform_16(%arg0: i32, %arg1: i32) -> (i32, i32, i32) {
    %c0_i32 = arith.constant 0 : i32
    %c0_i32_0 = arith.constant 0 : i32
    %c0_i32_1 = arith.constant 0 : i32
    return %arg1, %c0_i32, %c0_i32_0 : i32, i32, i32
  }
  func.func @transform_17(%arg0: i32, %arg1: i32) -> (i32, i32) {
    %c0_i32 = arith.constant 0 : i32
    %c0_i32_0 = arith.constant 0 : i32
    %c0_i32_1 = arith.constant 0 : i32
    return %c0_i32, %c0_i32_0 : i32, i32
  }
  func.func @transform_18(%arg0: i32, %arg1: i32) -> (i32, i32) {
    %c0_i32 = arith.constant 0 : i32
    %c0_i32_0 = arith.constant 0 : i32
    %c0_i32_1 = arith.constant 0 : i32
    return %c0_i32, %c0_i32_0 : i32, i32
  }
  func.func @transform_19(%arg0: i32, %arg1: i32) -> (i32, i32) {
    %c0_i32 = arith.constant 0 : i32
    %c0_i32_0 = arith.constant 0 : i32
    %c0_i32_1 = arith.constant 0 : i32
    return %c0_i32, %c0_i32_0 : i32, i32
  }
  func.func @transform_20(%arg0: i32, %arg1: i32) -> (i32, i32) {
    %c0_i32 = arith.constant 0 : i32
    %c0_i32_0 = arith.constant 0 : i32
    %c0_i32_1 = arith.constant 0 : i32
    return %c0_i32, %c0_i32_0 : i32, i32
  }
  func.func @transform_21(%arg0: i32, %arg1: i32) -> (i32, i32, i32) {
    %c0_i32 = arith.constant 0 : i32
    %c0_i32_0 = arith.constant 0 : i32
    %c0_i32_1 = arith.constant 0 : i32
    return %arg0, %c0_i32, %c0_i32_0 : i32, i32, i32
  }
}

</mosaic_0001>

<llo_original>
// kernel: tpu_custom_call.1
$region0: #{tpu_custom_call.1}
  #allocation0 [shape = 'u32[]', space=smem, size = 0x4, offset = 0x4, fixed_abs, tag = 'smem constant byte address 0x4 - core index']
  #allocation1 [shape = 'u32[144,128]{1,0:T(1,128)}', space=vmem, size = 0x12000, scoped, tag = 'internal scratch']
  #allocation2 [shape = 'f32[32,36]{1,0:T(8,128)}', space=vmem, size = 0x4000, scoped, tag = 'scratch operand']
  #allocation3 [shape = 'f32[1,32,36]{2,1,0:T(8,128)}', space=vmem, size = 0x4000, scoped, tag = 'scratch operand']
  %s0 = inlined_call_operand.hbm [shape: bf16[2,16,36], index: 0, kind: input, shape index: {}]
  %s1 = inlined_call_operand.hbm [shape: bf16[36,36], index: 1, kind: input, shape index: {}]
  %s2 = inlined_call_operand.hbm [shape: f32[1,36], index: 2, kind: input, shape index: {}]
  %s3 = inlined_call_operand.hbm [shape: f32[1,36], index: 3, kind: input, shape index: {}]
  %s4 = inlined_call_operand.hbm [shape: f32[16,36], index: 4, kind: input, shape index: {}]
  %s5 = inlined_call_operand.hbm [shape: f32[3,1,36], index: 5, kind: input, shape index: {}]
  %s6 = inlined_call_operand.hbm [shape: f32[3,1,36], index: 6, kind: input, shape index: {}]
  %s7 = inlined_call_operand.hbm [shape: bf16[3,36,108], index: 7, kind: input, shape index: {}]
  %s8 = inlined_call_operand.hbm [shape: f32[3,1,108], index: 8, kind: input, shape index: {}]
  %s9 = inlined_call_operand.hbm [shape: bf16[3,36,36], index: 9, kind: input, shape index: {}]
  %s10 = inlined_call_operand.hbm [shape: f32[3,1,36], index: 10, kind: input, shape index: {}]
  %s11 = inlined_call_operand.hbm [shape: f32[3,1,36], index: 11, kind: input, shape index: {}]
  %s12 = inlined_call_operand.hbm [shape: f32[3,1,36], index: 12, kind: input, shape index: {}]
  %s13 = inlined_call_operand.hbm [shape: bf16[3,36,144], index: 13, kind: input, shape index: {}]
  %s14 = inlined_call_operand.hbm [shape: f32[3,1,144], index: 14, kind: input, shape index: {}]
  %s15 = inlined_call_operand.hbm [shape: bf16[3,144,36], index: 15, kind: input, shape index: {}]
  %s16 = inlined_call_operand.hbm [shape: f32[3,1,36], index: 16, kind: input, shape index: {}]
  %s17 = inlined_call_operand.hbm [shape: f32[1,36], index: 17, kind: input, shape index: {}]
  %s18 = inlined_call_operand.hbm [shape: f32[1,36], index: 18, kind: input, shape index: {}]
  %s19 = inlined_call_operand.hbm [shape: bf16[36,7], index: 19, kind: input, shape index: {}]
  %s20 = inlined_call_operand.hbm [shape: f32[1,7], index: 20, kind: input, shape index: {}]
  %s21 = inlined_call_operand.hbm [shape: f32[2,1,7], index: 21, kind: output, shape index: {}]
  %s22 = sld [smem:[#allocation0]]
  $region209: #{tpu_custom_call.1} parent=0
    _
  %s24 = ssub.s32 1, %s22
  %s25 = scalar_select 0, %s24, %s22
  $region1: #{tpu_custom_call.1} parent=0
    #allocation4 [shape = 'u8[8192]{0}', space=vmem, size = 0x2000, scoped, tag = 'input window, operand 0']
    #allocation5 [shape = 's32[2]{0}', space=sflag, size = 0x8, scoped, tag = 'scoped memory for tpu_custom_call.1']
    #allocation6 [shape = 's32[2]{0}', space=sflag, size = 0x8, scoped, tag = 'scoped memory for tpu_custom_call.1']
    #allocation7 [shape = 'u8[10240]{0}', space=vmem, size = 0x2800, scoped, tag = 'input window, operand 1, single buffered']
    #allocation8 [shape = 's32[1]{0}', space=sflag, size = 0x4, scoped, tag = 'scoped memory for tpu_custom_call.1']
    #allocation9 [shape = 'u8[512]{0}', space=vmem, size = 0x400, scoped, tag = 'input window, operand 2, single buffered']
    #allocation10 [shape = 'u8[512]{0}', space=vmem, size = 0x400, scoped, tag = 'input window, operand 3, single buffered']
    #allocation11 [shape = 's32[1]{0}', space=sflag, size = 0x4, scoped, tag = 'scoped memory for tpu_custom_call.1']
    #allocation12 [shape = 'u8[8192]{0}', space=vmem, size = 0x2000, scoped, tag = 'input window, operand 4, single buffered']
    #allocation13 [shape = 'u8[1024]{0}', space=vmem, size = 0x400, scoped, tag = 'input window, operand 5']
    #allocation14 [shape = 's32[2]{0}', space=sflag, size = 0x8, scoped, tag = 'scoped memory for tpu_custom_call.1']
    #allocation15 [shape = 'u8[1024]{0}', space=vmem, size = 0x400, scoped, tag = 'input window, operand 6']
    #allocation16 [shape = 'u8[20480]{0}', space=vmem, size = 0x5000, scoped, tag = 'input window, operand 7']
    #allocation17 [shape = 's32[2]{0}', space=sflag, size = 0x8, scoped, tag = 'scoped memory for tpu_custom_call.1']
    #allocation18 [shape = 'u8[1024]{0}', space=vmem, size = 0x400, scoped, tag = 'input window, operand 8']
    #allocation19 [shape = 'u8[20480]{0}', space=vmem, size = 0x5000, scoped, tag = 'input window, operand 9']
    #allocation20 [shape = 's32[2]{0}', space=sflag, size = 0x8, scoped, tag = 'scoped memory for tpu_custom_call.1']
    #allocation21 [shape = 'u8[1024]{0}', space=vmem, size = 0x400, scoped, tag = 'input window, operand 10']
    #allocation22 [shape = 'u8[1024]{0}', space=vmem, size = 0x400, scoped, tag = 'input window, operand 11']
    #allocation23 [shape = 's32[2]{0}', space=sflag, size = 0x8, scoped, tag = 'scoped memory for tpu_custom_call.1']
    #allocation24 [shape = 'u8[1024]{0}', space=vmem, size = 0x400, scoped, tag = 'input window, operand 12']
    #allocation25 [shape = 'u8[40960]{0}', space=vmem, size = 0xa000, scoped, tag = 'input window, operand 13']
    #allocation26 [shape = 's32[2]{0}', space=sflag, size = 0x8, scoped, tag = 'scoped memory for tpu_custom_call.1']
    #allocation27 [shape = 'u8[2048]{0}', space=vmem, size = 0x800, scoped, tag = 'input window, operand 14']
    #allocation28 [shape = 'u8[73728]{0}', space=vmem, size = 0x12000, scoped, tag = 'input window, operand 15']
    #allocation29 [shape = 's32[2]{0}', space=sflag, size = 0x8, scoped, tag = 'scoped memory for tpu_custom_call.1']
    #allocation30 [shape = 'u8[1024]{0}', space=vmem, size = 0x400, scoped, tag = 'input window, operand 16']
    #allocation31 [shape = 'u8[512]{0}', space=vmem, size = 0x400, scoped, tag = 'input window, operand 17, single buffered']
    #allocation32 [shape = 's32[1]{0}', space=sflag, size = 0x4, scoped, tag = 'scoped memory for tpu_custom_call.1']
    #allocation33 [shape = 'u8[512]{0}', space=vmem, size = 0x400, scoped, tag = 'input window, operand 18, single buffered']
    #allocation34 [shape = 'u8[10240]{0}', space=vmem, size = 0x2800, scoped, tag = 'input window, operand 19, single buffered']
    #allocation35 [shape = 's32[1]{0}', space=sflag, size = 0x4, scoped, tag = 'scoped memory for tpu_custom_call.1']
    #allocation36 [shape = 'u8[512]{0}', space=vmem, size = 0x400, scoped, tag = 'input window, operand 20, single buffered']
    #allocation37 [shape = 'u8[1024]{0}', space=vmem, size = 0x400, scoped, tag = 'output window, operand 0']
    %26 = vsyncpa [#allocation5], 0
    %s27 = scalar_lea.sflag [#allocation5], 1
    %28 = vsyncpa %s27, 0
    %29 = vsyncpa [#allocation8], 0
    %30 = vsyncpa [#allocation11], 0
    %31 = vsyncpa [#allocation14], 0
    %s32 = scalar_lea.sflag [#allocation14], 1
    %33 = vsyncpa %s32, 0
    %34 = vsyncpa [#allocation17], 0
    %s35 = scalar_lea.sflag [#allocation17], 1
    %36 = vsyncpa %s35, 0
    %37 = vsyncpa [#allocation20], 0
    %s38 = scalar_lea.sflag [#allocation20], 1
    %39 = vsyncpa %s38, 0
    %40 = vsyncpa [#allocation23], 0
    %s41 = scalar_lea.sflag [#allocation23], 1
    %42 = vsyncpa %s41, 0
    %43 = vsyncpa [#allocation26], 0
    %s44 = scalar_lea.sflag [#allocation26], 1
    %45 = vsyncpa %s44, 0
    %46 = vsyncpa [#allocation29], 0
    %s47 = scalar_lea.sflag [#allocation29], 1
    %48 = vsyncpa %s47, 0
    %49 = vsyncpa [#allocation32], 0
    %50 = vsyncpa [#allocation35], 0
    %51 = vsyncpa [#allocation6], 0
    %s52 = scalar_lea.sflag [#allocation6], 1
    %53 = vsyncpa %s52, 0
    loop: start=0, step=1, limit=8
    $region2: #{tpu_custom_call.1} parent=1 // loop_pre_header
      _
    $region3: #{tpu_custom_call.1} parent=1 // loop_header
      %s55 = sphi 0, %s59
      %p56 = scmp.ge.s32.totalorder %s55, 8
      %s62 = sphi 0, %s74
      %s63 = sphi 0, %s70
      %s64 = sphi 0, %s62
      %s65 = sphi 0, %s63
      %s66 = sphi 0, %s64
      %s67 = sphi 0, %s65
      %s77 = sphi 0, %s79
      %s80 = sphi 0, %s77
      %s81 = sphi 0, %s80
      %s97 = sphi 0, %s81
      %s101 = sphi 0, %s101
      %s103 = sphi 0, %s101
      %s104 = sphi 0, %s103
      %s118 = sphi 0, %s104
      %s122 = sphi 0, %s122
      %s124 = sphi 0, %s122
      %s125 = sphi 0, %s124
      %s139 = sphi 0, %s125
      %s143 = sphi 0, %s143
      %s145 = sphi 0, %s143
      %s146 = sphi 0, %s145
      %s160 = sphi 0, %s146
      %s164 = sphi 0, %s164
      %s166 = sphi 0, %s164
      %s167 = sphi 0, %s166
      %s181 = sphi 0, %s167
      %s187 = sphi 0, %s189
      %s190 = sphi 0, %s187
      %s191 = sphi 0, %s190
      %s207 = sphi 0, %s191
      %s213 = sphi 0, %s215
      %s216 = sphi 0, %s213
      %s217 = sphi 0, %s216
      %s233 = sphi 0, %s217
      %s239 = sphi 0, %s241
      %s242 = sphi 0, %s239
      %s243 = sphi 0, %s242
      %s259 = sphi 0, %s243
      %s265 = sphi 0, %s267
      %s268 = sphi 0, %s265
      %s269 = sphi 0, %s268
      %s285 = sphi 0, %s269
      %s291 = sphi 0, %s293
      %s294 = sphi 0, %s291
      %s295 = sphi 0, %s294
      %s311 = sphi 0, %s295
      %s317 = sphi 0, %s319
      %s320 = sphi 0, %s317
      %s321 = sphi 0, %s320
      %s337 = sphi 0, %s321
      %s343 = sphi 0, %s345
      %s346 = sphi 0, %s343
      %s347 = sphi 0, %s346
      %s363 = sphi 0, %s347
      %s369 = sphi 0, %s371
      %s372 = sphi 0, %s369
      %s373 = sphi 0, %s372
      %s389 = sphi 0, %s373
      %s395 = sphi 0, %s397
      %s398 = sphi 0, %s395
      %s399 = sphi 0, %s398
      %s415 = sphi 0, %s399
      %s421 = sphi 0, %s423
      %s424 = sphi 0, %s421
      %s425 = sphi 0, %s424
      %s441 = sphi 0, %s425
      %s447 = sphi 0, %s449
      %s450 = sphi 0, %s447
      %s451 = sphi 0, %s450
      %s467 = sphi 0, %s451
      %s473 = sphi 0, %s475
      %s476 = sphi 0, %s473
      %s477 = sphi 0, %s476
      %s493 = sphi 0, %s477
      %s497 = sphi 0, %s497
      %s499 = sphi 0, %s497
      %s500 = sphi 0, %s499
      %s514 = sphi 0, %s500
      %s518 = sphi 0, %s518
      %s520 = sphi 0, %s518
      %s521 = sphi 0, %s520
      %s535 = sphi 0, %s521
      %s539 = sphi 0, %s539
      %s541 = sphi 0, %s539
      %s542 = sphi 0, %s541
      %s556 = sphi 0, %s542
      %s560 = sphi 0, %s560
      %s562 = sphi 0, %s560
      %s563 = sphi 0, %s562
      %s577 = sphi 0, %s563
      %s583 = sphi 0, %s585
      %s586 = sphi 0, %s583
      %s587 = sphi 0, %s586
      %s603 = sphi 0, %s587
    $region4: #{tpu_custom_call.1} parent=1 // loop_header_branch
      %58 = sbr.rel (%p56) target = $region8
    $region5: #{tpu_custom_call.1} parent=1 // loop_body
      %s60 = ssub.s32 %s55, 1
      %s61 = ssub.s32 %s55, 2
      %s68 = sadd.s32 1, %s63
      %p69 = scmp.ge.s32.totalorder %s68, 3
      %s70 = scalar_select %p69, 0, %s68
      %s71 = sadd.s32 1, %s62
      %s72 = scalar_select %p69, %s71, %s62
      %p73 = scmp.ge.s32.totalorder %s72, 2
      %s74 = scalar_select %p73, 0, %s72
      %s75 = ssub.s32 %s62, %s74
      %p76 = scmp.eq.s32.totalorder %s75, 0
      %s78 = sadd.s32 %s77, 1
      %s79 = scalar_select %p76, %s77, %s78
      %p82 = pneg %p76
      %p83 = scmp.eq.s32.totalorder %s55, 5
      %p84 = por %p82, %p83
      %p85 = scmp.ne.s32.totalorder %s77, %s80
      %p86 = scmp.eq.s32.totalorder %s55, 0
      %p87 = por %p85, %p86
      %p88 = scmp.ne.s32.totalorder %s77, %s80
      %p89 = scmp.eq.s32.totalorder %s60, 5
      %p90 = por %p88, %p89
      %p91 = scmp.ne.s32.totalorder %s80, %s81
      %p92 = scmp.eq.s32.totalorder %s60, 0
      %p93 = por %p91, %p92
      %p94 = scmp.ne.s32.totalorder %s80, %s81
      %p95 = scmp.eq.s32.totalorder %s61, 5
      %p96 = por %p94, %p95
      %p98 = scmp.ne.s32.totalorder %s81, %s97
      %p99 = scmp.eq.s32.totalorder %s61, 0
      %p100 = por %p98, %p99
      %s102 = sadd.s32 %s101, 1
      %p105 = scmp.eq.s32.totalorder %s55, 5
      %p106 = scmp.ne.s32.totalorder %s101, %s103
      %p107 = scmp.eq.s32.totalorder %s55, 0
      %p108 = por %p106, %p107
      %p109 = scmp.ne.s32.totalorder %s101, %s103
      %p110 = scmp.eq.s32.totalorder %s60, 5
      %p111 = por %p109, %p110
      %p112 = scmp.ne.s32.totalorder %s103, %s104
      %p113 = scmp.eq.s32.totalorder %s60, 0
      %p114 = por %p112, %p113
      %p115 = scmp.ne.s32.totalorder %s103, %s104
      %p116 = scmp.eq.s32.totalorder %s61, 5
      %p117 = por %p115, %p116
      %p119 = scmp.ne.s32.totalorder %s104, %s118
      %p120 = scmp.eq.s32.totalorder %s61, 0
      %p121 = por %p119, %p120
      %s123 = sadd.s32 %s122, 1
      %p126 = scmp.eq.s32.totalorder %s55, 5
      %p127 = scmp.ne.s32.totalorder %s122, %s124
      %p128 = scmp.eq.s32.totalorder %s55, 0
      %p129 = por %p127, %p128
      %p130 = scmp.ne.s32.totalorder %s122, %s124
      %p131 = scmp.eq.s32.totalorder %s60, 5
      %p132 = por %p130, %p131
      %p133 = scmp.ne.s32.totalorder %s124, %s125
      %p134 = scmp.eq.s32.totalorder %s60, 0
      %p135 = por %p133, %p134
      %p136 = scmp.ne.s32.totalorder %s124, %s125
      %p137 = scmp.eq.s32.totalorder %s61, 5
      %p138 = por %p136, %p137
      %p140 = scmp.ne.s32.totalorder %s125, %s139
      %p141 = scmp.eq.s32.totalorder %s61, 0
      %p142 = por %p140, %p141
      %s144 = sadd.s32 %s143, 1
      %p147 = scmp.eq.s32.totalorder %s55, 5
      %p148 = scmp.ne.s32.totalorder %s143, %s145
      %p149 = scmp.eq.s32.totalorder %s55, 0
      %p150 = por %p148, %p149
      %p151 = scmp.ne.s32.totalorder %s143, %s145
      %p152 = scmp.eq.s32.totalorder %s60, 5
      %p153 = por %p151, %p152
      %p154 = scmp.ne.s32.totalorder %s145, %s146
      %p155 = scmp.eq.s32.totalorder %s60, 0
      %p156 = por %p154, %p155
      %p157 = scmp.ne.s32.totalorder %s145, %s146
      %p158 = scmp.eq.s32.totalorder %s61, 5
      %p159 = por %p157, %p158
      %p161 = scmp.ne.s32.totalorder %s146, %s160
      %p162 = scmp.eq.s32.totalorder %s61, 0
      %p163 = por %p161, %p162
      %s165 = sadd.s32 %s164, 1
      %p168 = scmp.eq.s32.totalorder %s55, 5
      %p169 = scmp.ne.s32.totalorder %s164, %s166
      %p170 = scmp.eq.s32.totalorder %s55, 0
      %p171 = por %p169, %p170
      %p172 = scmp.ne.s32.totalorder %s164, %s166
      %p173 = scmp.eq.s32.totalorder %s60, 5
      %p174 = por %p172, %p173
      %p175 = scmp.ne.s32.totalorder %s166, %s167
      %p176 = scmp.eq.s32.totalorder %s60, 0
      %p177 = por %p175, %p176
      %p178 = scmp.ne.s32.totalorder %s166, %s167
      %p179 = scmp.eq.s32.totalorder %s61, 5
      %p180 = por %p178, %p179
      %p182 = scmp.ne.s32.totalorder %s167, %s181
      %p183 = scmp.eq.s32.totalorder %s61, 0
      %p184 = por %p182, %p183
      %s185 = ssub.s32 %s63, %s70
      %p186 = scmp.eq.s32.totalorder %s185, 0
      %s188 = sadd.s32 %s187, 1
      %s189 = scalar_select %p186, %s187, %s188
      %p192 = pneg %p186
      %p193 = scmp.eq.s32.totalorder %s55, 5
      %p194 = por %p192, %p193
      %p195 = scmp.ne.s32.totalorder %s187, %s190
      %p196 = scmp.eq.s32.totalorder %s55, 0
      %p197 = por %p195, %p196
      %p198 = scmp.ne.s32.totalorder %s187, %s190
      %p199 = scmp.eq.s32.totalorder %s60, 5
      %p200 = por %p198, %p199
      %p201 = scmp.ne.s32.totalorder %s190, %s191
      %p202 = scmp.eq.s32.totalorder %s60, 0
      %p203 = por %p201, %p202
      %p204 = scmp.ne.s32.totalorder %s190, %s191
      %p205 = scmp.eq.s32.totalorder %s61, 5
      %p206 = por %p204, %p205
      %p208 = scmp.ne.s32.totalorder %s191, %s207
      %p209 = scmp.eq.s32.totalorder %s61, 0
      %p210 = por %p208, %p209
      %s211 = ssub.s32 %s63, %s70
      %p212 = scmp.eq.s32.totalorder %s211, 0
      %s214 = sadd.s32 %s213, 1
      %s215 = scalar_select %p212, %s213, %s214
      %p218 = pneg %p212
      %p219 = scmp.eq.s32.totalorder %s55, 5
      %p220 = por %p218, %p219
      %p221 = scmp.ne.s32.totalorder %s213, %s216
      %p222 = scmp.eq.s32.totalorder %s55, 0
      %p223 = por %p221, %p222
      %p224 = scmp.ne.s32.totalorder %s213, %s216
      %p225 = scmp.eq.s32.totalorder %s60, 5
      %p226 = por %p224, %p225
      %p227 = scmp.ne.s32.totalorder %s216, %s217
      %p228 = scmp.eq.s32.totalorder %s60, 0
      %p229 = por %p227, %p228
      %p230 = scmp.ne.s32.totalorder %s216, %s217
      %p231 = scmp.eq.s32.totalorder %s61, 5
      %p232 = por %p230, %p231
      %p234 = scmp.ne.s32.totalorder %s217, %s233
      %p235 = scmp.eq.s32.totalorder %s61, 0
      %p236 = por %p234, %p235
      %s237 = ssub.s32 %s63, %s70
      %p238 = scmp.eq.s32.totalorder %s237, 0
      %s240 = sadd.s32 %s239, 1
      %s241 = scalar_select %p238, %s239, %s240
      %p244 = pneg %p238
      %p245 = scmp.eq.s32.totalorder %s55, 5
      %p246 = por %p244, %p245
      %p247 = scmp.ne.s32.totalorder %s239, %s242
      %p248 = scmp.eq.s32.totalorder %s55, 0
      %p249 = por %p247, %p248
      %p250 = scmp.ne.s32.totalorder %s239, %s242
      %p251 = scmp.eq.s32.totalorder %s60, 5
      %p252 = por %p250, %p251
      %p253 = scmp.ne.s32.totalorder %s242, %s243
      %p254 = scmp.eq.s32.totalorder %s60, 0
      %p255 = por %p253, %p254
      %p256 = scmp.ne.s32.totalorder %s242, %s243
      %p257 = scmp.eq.s32.totalorder %s61, 5
      %p258 = por %p256, %p257
      %p260 = scmp.ne.s32.totalorder %s243, %s259
      %p261 = scmp.eq.s32.totalorder %s61, 0
      %p262 = por %p260, %p261
      %s263 = ssub.s32 %s63, %s70
      %p264 = scmp.eq.s32.totalorder %s263, 0
      %s266 = sadd.s32 %s265, 1
      %s267 = scalar_select %p264, %s265, %s266
      %p270 = pneg %p264
      %p271 = scmp.eq.s32.totalorder %s55, 5
      %p272 = por %p270, %p271
      %p273 = scmp.ne.s32.totalorder %s265, %s268
      %p274 = scmp.eq.s32.totalorder %s55, 0
      %p275 = por %p273, %p274
      %p276 = scmp.ne.s32.totalorder %s265, %s268
      %p277 = scmp.eq.s32.totalorder %s60, 5
      %p278 = por %p276, %p277
      %p279 = scmp.ne.s32.totalorder %s268, %s269
      %p280 = scmp.eq.s32.totalorder %s60, 0
      %p281 = por %p279, %p280
      %p282 = scmp.ne.s32.totalorder %s268, %s269
      %p283 = scmp.eq.s32.totalorder %s61, 5
      %p284 = por %p282, %p283
      %p286 = scmp.ne.s32.totalorder %s269, %s285
      %p287 = scmp.eq.s32.totalorder %s61, 0
      %p288 = por %p286, %p287
      %s289 = ssub.s32 %s63, %s70
      %p290 = scmp.eq.s32.totalorder %s289, 0
      %s292 = sadd.s32 %s291, 1
      %s293 = scalar_select %p290, %s291, %s292
      %p296 = pneg %p290
      %p297 = scmp.eq.s32.totalorder %s55, 5
      %p298 = por %p296, %p297
      %p299 = scmp.ne.s32.totalorder %s291, %s294
      %p300 = scmp.eq.s32.totalorder %s55, 0
      %p301 = por %p299, %p300
      %p302 = scmp.ne.s32.totalorder %s291, %s294
      %p303 = scmp.eq.s32.totalorder %s60, 5
      %p304 = por %p302, %p303
      %p305 = scmp.ne.s32.totalorder %s294, %s295
      %p306 = scmp.eq.s32.totalorder %s60, 0
      %p307 = por %p305, %p306
      %p308 = scmp.ne.s32.totalorder %s294, %s295
      %p309 = scmp.eq.s32.totalorder %s61, 5
      %p310 = por %p308, %p309
      %p312 = scmp.ne.s32.totalorder %s295, %s311
      %p313 = scmp.eq.s32.totalorder %s61, 0
      %p314 = por %p312, %p313
      %s315 = ssub.s32 %s63, %s70
      %p316 = scmp.eq.s32.totalorder %s315, 0
      %s318 = sadd.s32 %s317, 1
      %s319 = scalar_select %p316, %s317, %s318
      %p322 = pneg %p316
      %p323 = scmp.eq.s32.totalorder %s55, 5
      %p324 = por %p322, %p323
      %p325 = scmp.ne.s32.totalorder %s317, %s320
      %p326 = scmp.eq.s32.totalorder %s55, 0
      %p327 = por %p325, %p326
      %p328 = scmp.ne.s32.totalorder %s317, %s320
      %p329 = scmp.eq.s32.totalorder %s60, 5
      %p330 = por %p328, %p329
      %p331 = scmp.ne.s32.totalorder %s320, %s321
      %p332 = scmp.eq.s32.totalorder %s60, 0
      %p333 = por %p331, %p332
      %p334 = scmp.ne.s32.totalorder %s320, %s321
      %p335 = scmp.eq.s32.totalorder %s61, 5
      %p336 = por %p334, %p335
      %p338 = scmp.ne.s32.totalorder %s321, %s337
      %p339 = scmp.eq.s32.totalorder %s61, 0
      %p340 = por %p338, %p339
      %s341 = ssub.s32 %s63, %s70
      %p342 = scmp.eq.s32.totalorder %s341, 0
      %s344 = sadd.s32 %s343, 1
      %s345 = scalar_select %p342, %s343, %s344
      %p348 = pneg %p342
      %p349 = scmp.eq.s32.totalorder %s55, 5
      %p350 = por %p348, %p349
      %p351 = scmp.ne.s32.totalorder %s343, %s346
      %p352 = scmp.eq.s32.totalorder %s55, 0
      %p353 = por %p351, %p352
      %p354 = scmp.ne.s32.totalorder %s343, %s346
      %p355 = scmp.eq.s32.totalorder %s60, 5
      %p356 = por %p354, %p355
      %p357 = scmp.ne.s32.totalorder %s346, %s347
      %p358 = scmp.eq.s32.totalorder %s60, 0
      %p359 = por %p357, %p358
      %p360 = scmp.ne.s32.totalorder %s346, %s347
      %p361 = scmp.eq.s32.totalorder %s61, 5
      %p362 = por %p360, %p361
      %p364 = scmp.ne.s32.totalorder %s347, %s363
      %p365 = scmp.eq.s32.totalorder %s61, 0
      %p366 = por %p364, %p365
      %s367 = ssub.s32 %s63, %s70
      %p368 = scmp.eq.s32.totalorder %s367, 0
      %s370 = sadd.s32 %s369, 1
      %s371 = scalar_select %p368, %s369, %s370
      %p374 = pneg %p368
      %p375 = scmp.eq.s32.totalorder %s55, 5
      %p376 = por %p374, %p375
      %p377 = scmp.ne.s32.totalorder %s369, %s372
      %p378 = scmp.eq.s32.totalorder %s55, 0
      %p379 = por %p377, %p378
      %p380 = scmp.ne.s32.totalorder %s369, %s372
      %p381 = scmp.eq.s32.totalorder %s60, 5
      %p382 = por %p380, %p381
      %p383 = scmp.ne.s32.totalorder %s372, %s373
      %p384 = scmp.eq.s32.totalorder %s60, 0
      %p385 = por %p383, %p384
      %p386 = scmp.ne.s32.totalorder %s372, %s373
      %p387 = scmp.eq.s32.totalorder %s61, 5
      %p388 = por %p386, %p387
      %p390 = scmp.ne.s32.totalorder %s373, %s389
      %p391 = scmp.eq.s32.totalorder %s61, 0
      %p392 = por %p390, %p391
      %s393 = ssub.s32 %s63, %s70
      %p394 = scmp.eq.s32.totalorder %s393, 0
      %s396 = sadd.s32 %s395, 1
      %s397 = scalar_select %p394, %s395, %s396
      %p400 = pneg %p394
      %p401 = scmp.eq.s32.totalorder %s55, 5
      %p402 = por %p400, %p401
      %p403 = scmp.ne.s32.totalorder %s395, %s398
      %p404 = scmp.eq.s32.totalorder %s55, 0
      %p405 = por %p403, %p404
      %p406 = scmp.ne.s32.totalorder %s395, %s398
      %p407 = scmp.eq.s32.totalorder %s60, 5
      %p408 = por %p406, %p407
      %p409 = scmp.ne.s32.totalorder %s398, %s399
      %p410 = scmp.eq.s32.totalorder %s60, 0
      %p411 = por %p409, %p410
      %p412 = scmp.ne.s32.totalorder %s398, %s399
      %p413 = scmp.eq.s32.totalorder %s61, 5
      %p414 = por %p412, %p413
      %p416 = scmp.ne.s32.totalorder %s399, %s415
      %p417 = scmp.eq.s32.totalorder %s61, 0
      %p418 = por %p416, %p417
      %s419 = ssub.s32 %s63, %s70
      %p420 = scmp.eq.s32.totalorder %s419, 0
      %s422 = sadd.s32 %s421, 1
      %s423 = scalar_select %p420, %s421, %s422
      %p426 = pneg %p420
      %p427 = scmp.eq.s32.totalorder %s55, 5
      %p428 = por %p426, %p427
      %p429 = scmp.ne.s32.totalorder %s421, %s424
      %p430 = scmp.eq.s32.totalorder %s55, 0
      %p431 = por %p429, %p430
      %p432 = scmp.ne.s32.totalorder %s421, %s424
      %p433 = scmp.eq.s32.totalorder %s60, 5
      %p434 = por %p432, %p433
      %p435 = scmp.ne.s32.totalorder %s424, %s425
      %p436 = scmp.eq.s32.totalorder %s60, 0
      %p437 = por %p435, %p436
      %p438 = scmp.ne.s32.totalorder %s424, %s425
      %p439 = scmp.eq.s32.totalorder %s61, 5
      %p440 = por %p438, %p439
      %p442 = scmp.ne.s32.totalorder %s425, %s441
      %p443 = scmp.eq.s32.totalorder %s61, 0
      %p444 = por %p442, %p443
      %s445 = ssub.s32 %s63, %s70
      %p446 = scmp.eq.s32.totalorder %s445, 0
      %s448 = sadd.s32 %s447, 1
      %s449 = scalar_select %p446, %s447, %s448
      %p452 = pneg %p446
      %p453 = scmp.eq.s32.totalorder %s55, 5
      %p454 = por %p452, %p453
      %p455 = scmp.ne.s32.totalorder %s447, %s450
      %p456 = scmp.eq.s32.totalorder %s55, 0
      %p457 = por %p455, %p456
      %p458 = scmp.ne.s32.totalorder %s447, %s450
      %p459 = scmp.eq.s32.totalorder %s60, 5
      %p460 = por %p458, %p459
      %p461 = scmp.ne.s32.totalorder %s450, %s451
      %p462 = scmp.eq.s32.totalorder %s60, 0
      %p463 = por %p461, %p462
      %p464 = scmp.ne.s32.totalorder %s450, %s451
      %p465 = scmp.eq.s32.totalorder %s61, 5
      %p466 = por %p464, %p465
      %p468 = scmp.ne.s32.totalorder %s451, %s467
      %p469 = scmp.eq.s32.totalorder %s61, 0
      %p470 = por %p468, %p469
      %s471 = ssub.s32 %s63, %s70
      %p472 = scmp.eq.s32.totalorder %s471, 0
      %s474 = sadd.s32 %s473, 1
      %s475 = scalar_select %p472, %s473, %s474
      %p478 = pneg %p472
      %p479 = scmp.eq.s32.totalorder %s55, 5
      %p480 = por %p478, %p479
      %p481 = scmp.ne.s32.totalorder %s473, %s476
      %p482 = scmp.eq.s32.totalorder %s55, 0
      %p483 = por %p481, %p482
      %p484 = scmp.ne.s32.totalorder %s473, %s476
      %p485 = scmp.eq.s32.totalorder %s60, 5
      %p486 = por %p484, %p485
      %p487 = scmp.ne.s32.totalorder %s476, %s477
      %p488 = scmp.eq.s32.totalorder %s60, 0
      %p489 = por %p487, %p488
      %p490 = scmp.ne.s32.totalorder %s476, %s477
      %p491 = scmp.eq.s32.totalorder %s61, 5
      %p492 = por %p490, %p491
      %p494 = scmp.ne.s32.totalorder %s477, %s493
      %p495 = scmp.eq.s32.totalorder %s61, 0
      %p496 = por %p494, %p495
      %s498 = sadd.s32 %s497, 1
      %p501 = scmp.eq.s32.totalorder %s55, 5
      %p502 = scmp.ne.s32.totalorder %s497, %s499
      %p503 = scmp.eq.s32.totalorder %s55, 0
      %p504 = por %p502, %p503
      %p505 = scmp.ne.s32.totalorder %s497, %s499
      %p506 = scmp.eq.s32.totalorder %s60, 5
      %p507 = por %p505, %p506
      %p508 = scmp.ne.s32.totalorder %s499, %s500
      %p509 = scmp.eq.s32.totalorder %s60, 0
      %p510 = por %p508, %p509
      %p511 = scmp.ne.s32.totalorder %s499, %s500
      %p512 = scmp.eq.s32.totalorder %s61, 5
      %p513 = por %p511, %p512
      %p515 = scmp.ne.s32.totalorder %s500, %s514
      %p516 = scmp.eq.s32.totalorder %s61, 0
      %p517 = por %p515, %p516
      %s519 = sadd.s32 %s518, 1
      %p522 = scmp.eq.s32.totalorder %s55, 5
      %p523 = scmp.ne.s32.totalorder %s518, %s520
      %p524 = scmp.eq.s32.totalorder %s55, 0
      %p525 = por %p523, %p524
      %p526 = scmp.ne.s32.totalorder %s518, %s520
      %p527 = scmp.eq.s32.totalorder %s60, 5
      %p528 = por %p526, %p527
      %p529 = scmp.ne.s32.totalorder %s520, %s521
      %p530 = scmp.eq.s32.totalorder %s60, 0
      %p531 = por %p529, %p530
      %p532 = scmp.ne.s32.totalorder %s520, %s521
      %p533 = scmp.eq.s32.totalorder %s61, 5
      %p534 = por %p532, %p533
      %p536 = scmp.ne.s32.totalorder %s521, %s535
      %p537 = scmp.eq.s32.totalorder %s61, 0
      %p538 = por %p536, %p537
      %s540 = sadd.s32 %s539, 1
      %p543 = scmp.eq.s32.totalorder %s55, 5
      %p544 = scmp.ne.s32.totalorder %s539, %s541
      %p545 = scmp.eq.s32.totalorder %s55, 0
      %p546 = por %p544, %p545
      %p547 = scmp.ne.s32.totalorder %s539, %s541
      %p548 = scmp.eq.s32.totalorder %s60, 5
      %p549 = por %p547, %p548
      %p550 = scmp.ne.s32.totalorder %s541, %s542
      %p551 = scmp.eq.s32.totalorder %s60, 0
      %p552 = por %p550, %p551
      %p553 = scmp.ne.s32.totalorder %s541, %s542
      %p554 = scmp.eq.s32.totalorder %s61, 5
      %p555 = por %p553, %p554
      %p557 = scmp.ne.s32.totalorder %s542, %s556
      %p558 = scmp.eq.s32.totalorder %s61, 0
      %p559 = por %p557, %p558
      %s561 = sadd.s32 %s560, 1
      %p564 = scmp.eq.s32.totalorder %s55, 5
      %p565 = scmp.ne.s32.totalorder %s560, %s562
      %p566 = scmp.eq.s32.totalorder %s55, 0
      %p567 = por %p565, %p566
      %p568 = scmp.ne.s32.totalorder %s560, %s562
      %p569 = scmp.eq.s32.totalorder %s60, 5
      %p570 = por %p568, %p569
      %p571 = scmp.ne.s32.totalorder %s562, %s563
      %p572 = scmp.eq.s32.totalorder %s60, 0
      %p573 = por %p571, %p572
      %p574 = scmp.ne.s32.totalorder %s562, %s563
      %p575 = scmp.eq.s32.totalorder %s61, 5
      %p576 = por %p574, %p575
      %p578 = scmp.ne.s32.totalorder %s563, %s577
      %p579 = scmp.eq.s32.totalorder %s61, 0
      %p580 = por %p578, %p579
      %s581 = ssub.s32 %s62, %s74
      %p582 = scmp.eq.s32.totalorder %s581, 0
      %s584 = sadd.s32 %s583, 1
      %s585 = scalar_select %p582, %s583, %s584
      %p588 = pneg %p582
      %p589 = scmp.eq.s32.totalorder %s55, 5
      %p590 = por %p588, %p589
      %p591 = scmp.ne.s32.totalorder %s583, %s586
      %p592 = scmp.eq.s32.totalorder %s55, 0
      %p593 = por %p591, %p592
      %p594 = scmp.ne.s32.totalorder %s583, %s586
      %p595 = scmp.eq.s32.totalorder %s60, 5
      %p596 = por %p594, %p595
      %p597 = scmp.ne.s32.totalorder %s586, %s587
      %p598 = scmp.eq.s32.totalorder %s60, 0
      %p599 = por %p597, %p598
      %p600 = scmp.ne.s32.totalorder %s586, %s587
      %p601 = scmp.eq.s32.totalorder %s61, 5
      %p602 = por %p600, %p601
      %p604 = scmp.ne.s32.totalorder %s587, %s603
      %p605 = scmp.eq.s32.totalorder %s61, 0
      %p606 = por %p604, %p605
      %p607 = scmp.le.s32.totalorder 1, %s55
      %p608 = scmp.lt.s32.totalorder %s55, 7
      %p609 = pnand %p607, %p608
      %p610 = pneg %p609
      // Predicated region
      $region9: #{tpu_custom_call.1} parent=5 // pred_check
        _
      $region10: #{tpu_custom_call.1} parent=5 // pred_check_branch
        %612 = sbr.rel (%p609) target = $region12
      $region11: #{tpu_custom_call.1} parent=5 // pred_region
        %s613 = ssub.s32 %s55, 1
        // Predicated region
        $region13: #{tpu_custom_call.1} parent=11 // pred_check
          %p614 = pneg %p114
        $region14: #{tpu_custom_call.1} parent=11 // pred_check_branch
          %616 = sbr.rel (%p614) target = $region16
        $region15: #{tpu_custom_call.1} parent=11 // pred_region
          %s618 = ssub.s32 320, 320
          %619 = vsyncadd [#allocation8], %s618
          %s620 = sshll.u32 [#allocation7], 4
          %s621 = int_to_ptr.vmem [resolvable:$true] %s620
          %626 = dma.hbm_to_vmem [thread:$0]  %s1, 320, %s621, [#allocation8], 64, 64, 4
        $region16: #{tpu_custom_call.1} parent=11 // pred_fallthru
          _
        // Predicated region
        $region17: #{tpu_custom_call.1} parent=11 // pred_check
          %p627 = pneg %p135
        $region18: #{tpu_custom_call.1} parent=11 // pred_check_branch
          %629 = sbr.rel (%p627) target = $region20
        $region19: #{tpu_custom_call.1} parent=11 // pred_region
          %s631 = ssub.s32 16, 16
          %632 = vsyncadd [#allocation8], %s631
          %s634 = sshll.u32 [#allocation9], 4
          %s635 = int_to_ptr.vmem [resolvable:$true] %s634
          %637 = dma.hbm_to_vmem [thread:$0]  %s2, 16, %s635, [#allocation8]
        $region20: #{tpu_custom_call.1} parent=11 // pred_fallthru
          _
        // Predicated region
        $region21: #{tpu_custom_call.1} parent=11 // pred_check
          %p638 = pneg %p156
        $region22: #{tpu_custom_call.1} parent=11 // pred_check_branch
          %640 = sbr.rel (%p638) target = $region24
        $region23: #{tpu_custom_call.1} parent=11 // pred_region
          %s642 = ssub.s32 16, 16
          %643 = vsyncadd [#allocation11], %s642
          %s645 = sshll.u32 [#allocation10], 4
          %s646 = int_to_ptr.vmem [resolvable:$true] %s645
          %648 = dma.hbm_to_vmem [thread:$0]  %s3, 16, %s646, [#allocation11]
        $region24: #{tpu_custom_call.1} parent=11 // pred_fallthru
          _
        // Predicated region
        $region25: #{tpu_custom_call.1} parent=11 // pred_check
          %p649 = pneg %p177
        $region26: #{tpu_custom_call.1} parent=11 // pred_check_branch
          %651 = sbr.rel (%p649) target = $region28
        $region27: #{tpu_custom_call.1} parent=11 // pred_region
          %s653 = ssub.s32 256, 256
          %654 = vsyncadd [#allocation11], %s653
          %s655 = sshll.u32 [#allocation12], 4
          %s656 = int_to_ptr.vmem [resolvable:$true] %s655
          %661 = dma.hbm_to_vmem [thread:$0]  %s4, 256, %s656, [#allocation11], 128, 128, 8
        $region28: #{tpu_custom_call.1} parent=11 // pred_fallthru
          _
        // Predicated region
        $region29: #{tpu_custom_call.1} parent=11 // pred_check
          %p662 = pneg %p510
        $region30: #{tpu_custom_call.1} parent=11 // pred_check_branch
          %664 = sbr.rel (%p662) target = $region32
        $region31: #{tpu_custom_call.1} parent=11 // pred_region
          %s666 = ssub.s32 16, 16
          %667 = vsyncadd [#allocation32], %s666
          %s669 = sshll.u32 [#allocation31], 4
          %s670 = int_to_ptr.vmem [resolvable:$true] %s669
          %672 = dma.hbm_to_vmem [thread:$0]  %s17, 16, %s670, [#allocation32]
        $region32: #{tpu_custom_call.1} parent=11 // pred_fallthru
          _
        // Predicated region
        $region33: #{tpu_custom_call.1} parent=11 // pred_check
          %p673 = pneg %p531
        $region34: #{tpu_custom_call.1} parent=11 // pred_check_branch
          %675 = sbr.rel (%p673) target = $region36
        $region35: #{tpu_custom_call.1} parent=11 // pred_region
          %s677 = ssub.s32 16, 16
          %678 = vsyncadd [#allocation32], %s677
          %s680 = sshll.u32 [#allocation33], 4
          %s681 = int_to_ptr.vmem [resolvable:$true] %s680
          %683 = dma.hbm_to_vmem [thread:$0]  %s18, 16, %s681, [#allocation32]
        $region36: #{tpu_custom_call.1} parent=11 // pred_fallthru
          _
        // Predicated region
        $region37: #{tpu_custom_call.1} parent=11 // pred_check
          %p684 = pneg %p552
        $region38: #{tpu_custom_call.1} parent=11 // pred_check_branch
          %686 = sbr.rel (%p684) target = $region40
        $region39: #{tpu_custom_call.1} parent=11 // pred_region
          %s688 = ssub.s32 320, 320
          %689 = vsyncadd [#allocation35], %s688
          %s690 = sshll.u32 [#allocation34], 4
          %s691 = int_to_ptr.vmem [resolvable:$true] %s690
          %696 = dma.hbm_to_vmem [thread:$0]  %s19, 320, %s691, [#allocation35], 64, 64, 4
        $region40: #{tpu_custom_call.1} parent=11 // pred_fallthru
          _
        // Predicated region
        $region41: #{tpu_custom_call.1} parent=11 // pred_check
          %p697 = pneg %p573
        $region42: #{tpu_custom_call.1} parent=11 // pred_check_branch
          %699 = sbr.rel (%p697) target = $region44
        $region43: #{tpu_custom_call.1} parent=11 // pred_region
          %s701 = ssub.s32 16, 16
          %702 = vsyncadd [#allocation35], %s701
          %s704 = sshll.u32 [#allocation36], 4
          %s705 = int_to_ptr.vmem [resolvable:$true] %s704
          %707 = dma.hbm_to_vmem [thread:$0]  %s20, 16, %s705, [#allocation35]
        $region44: #{tpu_custom_call.1} parent=11 // pred_fallthru
          _
      $region12: #{tpu_custom_call.1} parent=5 // pred_fallthru
        _
      %p708 = scmp.lt.s32.totalorder %s55, 6
      // Predicated region
      $region45: #{tpu_custom_call.1} parent=5 // pred_check
        %p709 = pneg %p708
      $region46: #{tpu_custom_call.1} parent=5 // pred_check_branch
        %711 = sbr.rel (%p709) target = $region48
      $region47: #{tpu_custom_call.1} parent=5 // pred_region
        // Predicated region
        $region49: #{tpu_custom_call.1} parent=47 // pred_check
          %p712 = pneg %p87
        $region50: #{tpu_custom_call.1} parent=47 // pred_check_branch
          %714 = sbr.rel (%p712) target = $region52
        $region51: #{tpu_custom_call.1} parent=47 // pred_region
          %s715 = sand.u32 %s77, 1
          %s716 = scalar_lea.sflag [#allocation5], %s715
          %s717 = sand.u32 %s77, 1
          %s718 = smul.addr %s717, 8
          %s719 = scalar_lea.vmem [#allocation4], %s718
          %s721 = ssub.s32 128, 128
          %722 = vsyncadd %s716, %s721
          %s723 = smul.addr %s62, 2
          %s724 = smul.addr %s723, 64
          %s725 = scalar_lea.hbm %s0, %s724
          %s726 = sshll.u32 %s719, 4
          %s727 = int_to_ptr.vmem [resolvable:$true] %s726
          %732 = dma.hbm_to_vmem [thread:$0]  %s725, 128, %s727, %s716, 64, 64, 4
        $region52: #{tpu_custom_call.1} parent=47 // pred_fallthru
          _
        // Predicated region
        $region53: #{tpu_custom_call.1} parent=47 // pred_check
          %p733 = pneg %p197
        $region54: #{tpu_custom_call.1} parent=47 // pred_check_branch
          %735 = sbr.rel (%p733) target = $region56
        $region55: #{tpu_custom_call.1} parent=47 // pred_region
          %s736 = sand.u32 %s55, 1
          %s737 = scalar_lea.sflag [#allocation14], %s736
          %s738 = sand.u32 %s187, 1
          %s739 = scalar_lea.vmem [#allocation13], %s738
          %s741 = ssub.s32 16, 16
          %742 = vsyncadd %s737, %s741
          %s743 = smul.addr %s63, 16
          %s744 = scalar_lea.hbm %s5, %s743
          %s746 = sshll.u32 %s739, 4
          %s747 = int_to_ptr.vmem [resolvable:$true] %s746
          %749 = dma.hbm_to_vmem [thread:$0]  %s744, 16, %s747, %s737
        $region56: #{tpu_custom_call.1} parent=47 // pred_fallthru
          _
        // Predicated region
        $region57: #{tpu_custom_call.1} parent=47 // pred_check
          %p750 = pneg %p223
        $region58: #{tpu_custom_call.1} parent=47 // pred_check_branch
          %752 = sbr.rel (%p750) target = $region60
        $region59: #{tpu_custom_call.1} parent=47 // pred_region
          %s753 = sand.u32 %s55, 1
          %s754 = scalar_lea.sflag [#allocation14], %s753
          %s755 = sand.u32 %s213, 1
          %s756 = scalar_lea.vmem [#allocation15], %s755
          %s758 = ssub.s32 16, 16
          %759 = vsyncadd %s754, %s758
          %s760 = smul.addr %s63, 16
          %s761 = scalar_lea.hbm %s6, %s760
          %s763 = sshll.u32 %s756, 4
          %s764 = int_to_ptr.vmem [resolvable:$true] %s763
          %766 = dma.hbm_to_vmem [thread:$0]  %s761, 16, %s764, %s754
        $region60: #{tpu_custom_call.1} parent=47 // pred_fallthru
          _
        // Predicated region
        $region61: #{tpu_custom_call.1} parent=47 // pred_check
          %p767 = pneg %p249
        $region62: #{tpu_custom_call.1} parent=47 // pred_check_branch
          %769 = sbr.rel (%p767) target = $region64
        $region63: #{tpu_custom_call.1} parent=47 // pred_region
          %s770 = sand.u32 %s55, 1
          %s771 = scalar_lea.sflag [#allocation17], %s770
          %s772 = sand.u32 %s239, 1
          %s773 = smul.addr %s772, 20
          %s774 = scalar_lea.vmem [#allocation16], %s773
          %s776 = ssub.s32 320, 320
          %777 = vsyncadd %s771, %s776
          %s778 = smul.addr %s63, 5
          %s779 = smul.addr %s778, 64
          %s780 = scalar_lea.hbm %s7, %s779
          %s781 = sshll.u32 %s774, 4
          %s782 = int_to_ptr.vmem [resolvable:$true] %s781
          %787 = dma.hbm_to_vmem [thread:$0]  %s780, 320, %s782, %s771, 64, 64, 4
        $region64: #{tpu_custom_call.1} parent=47 // pred_fallthru
          _
        // Predicated region
        $region65: #{tpu_custom_call.1} parent=47 // pred_check
          %p788 = pneg %p275
        $region66: #{tpu_custom_call.1} parent=47 // pred_check_branch
          %790 = sbr.rel (%p788) target = $region68
        $region67: #{tpu_custom_call.1} parent=47 // pred_region
          %s791 = sand.u32 %s55, 1
          %s792 = scalar_lea.sflag [#allocation17], %s791
          %s793 = sand.u32 %s265, 1
          %s794 = scalar_lea.vmem [#allocation18], %s793
          %s796 = ssub.s32 16, 16
          %797 = vsyncadd %s792, %s796
          %s798 = smul.addr %s63, 16
          %s799 = scalar_lea.hbm %s8, %s798
          %s801 = sshll.u32 %s794, 4
          %s802 = int_to_ptr.vmem [resolvable:$true] %s801
          %804 = dma.hbm_to_vmem [thread:$0]  %s799, 16, %s802, %s792
        $region68: #{tpu_custom_call.1} parent=47 // pred_fallthru
          _
        // Predicated region
        $region69: #{tpu_custom_call.1} parent=47 // pred_check
          %p805 = pneg %p301
        $region70: #{tpu_custom_call.1} parent=47 // pred_check_branch
          %807 = sbr.rel (%p805) target = $region72
        $region71: #{tpu_custom_call.1} parent=47 // pred_region
          %s808 = sand.u32 %s55, 1
          %s809 = scalar_lea.sflag [#allocation20], %s808
          %s810 = sand.u32 %s291, 1
          %s811 = smul.addr %s810, 20
          %s812 = scalar_lea.vmem [#allocation19], %s811
          %s814 = ssub.s32 320, 320
          %815 = vsyncadd %s809, %s814
          %s816 = smul.addr %s63, 5
          %s817 = smul.addr %s816, 64
          %s818 = scalar_lea.hbm %s9, %s817
          %s819 = sshll.u32 %s812, 4
          %s820 = int_to_ptr.vmem [resolvable:$true] %s819
          %825 = dma.hbm_to_vmem [thread:$0]  %s818, 320, %s820, %s809, 64, 64, 4
        $region72: #{tpu_custom_call.1} parent=47 // pred_fallthru
          _
        // Predicated region
        $region73: #{tpu_custom_call.1} parent=47 // pred_check
          %p826 = pneg %p327
        $region74: #{tpu_custom_call.1} parent=47 // pred_check_branch
          %828 = sbr.rel (%p826) target = $region76
        $region75: #{tpu_custom_call.1} parent=47 // pred_region
          %s829 = sand.u32 %s55, 1
          %s830 = scalar_lea.sflag [#allocation20], %s829
          %s831 = sand.u32 %s317, 1
          %s832 = scalar_lea.vmem [#allocation21], %s831
          %s834 = ssub.s32 16, 16
          %835 = vsyncadd %s830, %s834
          %s836 = smul.addr %s63, 16
          %s837 = scalar_lea.hbm %s10, %s836
          %s839 = sshll.u32 %s832, 4
          %s840 = int_to_ptr.vmem [resolvable:$true] %s839
          %842 = dma.hbm_to_vmem [thread:$0]  %s837, 16, %s840, %s830
        $region76: #{tpu_custom_call.1} parent=47 // pred_fallthru
          _
        // Predicated region
        $region77: #{tpu_custom_call.1} parent=47 // pred_check
          %p843 = pneg %p353
        $region78: #{tpu_custom_call.1} parent=47 // pred_check_branch
          %845 = sbr.rel (%p843) target = $region80
        $region79: #{tpu_custom_call.1} parent=47 // pred_region
          %s846 = sand.u32 %s55, 1
          %s847 = scalar_lea.sflag [#allocation23], %s846
          %s848 = sand.u32 %s343, 1
          %s849 = scalar_lea.vmem [#allocation22], %s848
          %s851 = ssub.s32 16, 16
          %852 = vsyncadd %s847, %s851
          %s853 = smul.addr %s63, 16
          %s854 = scalar_lea.hbm %s11, %s853
          %s856 = sshll.u32 %s849, 4
          %s857 = int_to_ptr.vmem [resolvable:$true] %s856
          %859 = dma.hbm_to_vmem [thread:$0]  %s854, 16, %s857, %s847
        $region80: #{tpu_custom_call.1} parent=47 // pred_fallthru
          _
        // Predicated region
        $region81: #{tpu_custom_call.1} parent=47 // pred_check
          %p860 = pneg %p379
        $region82: #{tpu_custom_call.1} parent=47 // pred_check_branch
          %862 = sbr.rel (%p860) target = $region84
        $region83: #{tpu_custom_call.1} parent=47 // pred_region
          %s863 = sand.u32 %s55, 1
          %s864 = scalar_lea.sflag [#allocation23], %s863
          %s865 = sand.u32 %s369, 1
          %s866 = scalar_lea.vmem [#allocation24], %s865
          %s868 = ssub.s32 16, 16
          %869 = vsyncadd %s864, %s868
          %s870 = smul.addr %s63, 16
          %s871 = scalar_lea.hbm %s12, %s870
          %s873 = sshll.u32 %s866, 4
          %s874 = int_to_ptr.vmem [resolvable:$true] %s873
          %876 = dma.hbm_to_vmem [thread:$0]  %s871, 16, %s874, %s864
        $region84: #{tpu_custom_call.1} parent=47 // pred_fallthru
          _
        // Predicated region
        $region85: #{tpu_custom_call.1} parent=47 // pred_check
          %p877 = pneg %p405
        $region86: #{tpu_custom_call.1} parent=47 // pred_check_branch
          %879 = sbr.rel (%p877) target = $region88
        $region87: #{tpu_custom_call.1} parent=47 // pred_region
          %s880 = sand.u32 %s55, 1
          %s881 = scalar_lea.sflag [#allocation26], %s880
          %s882 = sand.u32 %s395, 1
          %s883 = smul.addr %s882, 40
          %s884 = scalar_lea.vmem [#allocation25], %s883
          %s886 = ssub.s32 640, 640
          %887 = vsyncadd %s881, %s886
          %s888 = smul.addr %s63, 10
          %s889 = smul.addr %s888, 64
          %s890 = scalar_lea.hbm %s13, %s889
          %s891 = sshll.u32 %s884, 4
          %s892 = int_to_ptr.vmem [resolvable:$true] %s891
          %897 = dma.hbm_to_vmem [thread:$0]  %s890, 640, %s892, %s881, 128, 128, 8
        $region88: #{tpu_custom_call.1} parent=47 // pred_fallthru
          _
        // Predicated region
        $region89: #{tpu_custom_call.1} parent=47 // pred_check
          %p898 = pneg %p431
        $region90: #{tpu_custom_call.1} parent=47 // pred_check_branch
          %900 = sbr.rel (%p898) target = $region92
        $region91: #{tpu_custom_call.1} parent=47 // pred_region
          %s901 = sand.u32 %s55, 1
          %s902 = scalar_lea.sflag [#allocation26], %s901
          %s903 = sand.u32 %s421, 1
          %s904 = smul.addr %s903, 2
          %s905 = scalar_lea.vmem [#allocation27], %s904
          %s907 = ssub.s32 32, 32
          %908 = vsyncadd %s902, %s907
          %s909 = smul.addr %s63, 2
          %s910 = smul.addr %s909, 16
          %s911 = scalar_lea.hbm %s14, %s910
          %s913 = sshll.u32 %s905, 4
          %s914 = int_to_ptr.vmem [resolvable:$true] %s913
          %916 = dma.hbm_to_vmem [thread:$0]  %s911, 32, %s914, %s902
        $region92: #{tpu_custom_call.1} parent=47 // pred_fallthru
          _
        // Predicated region
        $region93: #{tpu_custom_call.1} parent=47 // pred_check
          %p917 = pneg %p457
        $region94: #{tpu_custom_call.1} parent=47 // pred_check_branch
          %919 = sbr.rel (%p917) target = $region96
        $region95: #{tpu_custom_call.1} parent=47 // pred_region
          %s920 = sand.u32 %s55, 1
          %s921 = scalar_lea.sflag [#allocation29], %s920
          %s922 = sand.u32 %s447, 1
          %s923 = smul.addr %s922, 72
          %s924 = scalar_lea.vmem [#allocation28], %s923
          %s926 = ssub.s32 1152, 1152
          %927 = vsyncadd %s921, %s926
          %s928 = smul.addr %s63, 18
          %s929 = smul.addr %s928, 64
          %s930 = scalar_lea.hbm %s15, %s929
          %s931 = sshll.u32 %s924, 4
          %s932 = int_to_ptr.vmem [resolvable:$true] %s931
          %937 = dma.hbm_to_vmem [thread:$0]  %s930, 1152, %s932, %s921, 64, 64, 4
        $region96: #{tpu_custom_call.1} parent=47 // pred_fallthru
          _
        // Predicated region
        $region97: #{tpu_custom_call.1} parent=47 // pred_check
          %p938 = pneg %p483
        $region98: #{tpu_custom_call.1} parent=47 // pred_check_branch
          %940 = sbr.rel (%p938) target = $region100
        $region99: #{tpu_custom_call.1} parent=47 // pred_region
          %s941 = sand.u32 %s55, 1
          %s942 = scalar_lea.sflag [#allocation29], %s941
          %s943 = sand.u32 %s473, 1
          %s944 = scalar_lea.vmem [#allocation30], %s943
          %s946 = ssub.s32 16, 16
          %947 = vsyncadd %s942, %s946
          %s948 = smul.addr %s63, 16
          %s949 = scalar_lea.hbm %s16, %s948
          %s951 = sshll.u32 %s944, 4
          %s952 = int_to_ptr.vmem [resolvable:$true] %s951
          %954 = dma.hbm_to_vmem [thread:$0]  %s949, 16, %s952, %s942
        $region100: #{tpu_custom_call.1} parent=47 // pred_fallthru
          _
      $region48: #{tpu_custom_call.1} parent=5 // pred_fallthru
        _
      %p955 = scmp.le.s32.totalorder 1, %s55
      %p956 = scmp.lt.s32.totalorder %s55, 7
      %p957 = pnand %p955, %p956
      %p958 = pneg %p957
      // Predicated region
      $region101: #{tpu_custom_call.1} parent=5 // pred_check
        _
      $region102: #{tpu_custom_call.1} parent=5 // pred_check_branch
        %960 = sbr.rel (%p957) target = $region104
      $region103: #{tpu_custom_call.1} parent=5 // pred_region
        %s961 = ssub.s32 %s55, 1
        %s962 = sand.u32 %s80, 1
        %s963 = scalar_lea.sflag [#allocation5], %s962
        %s964 = sand.u32 %s80, 1
        %s965 = smul.addr %s964, 8
        %s966 = scalar_lea.vmem [#allocation4], %s965
        // Predicated region
        $region105: #{tpu_custom_call.1} parent=103 // pred_check
          %p967 = pneg %p93
        $region106: #{tpu_custom_call.1} parent=103 // pred_check_branch
          %969 = sbr.rel (%p967) target = $region108
        $region107: #{tpu_custom_call.1} parent=103 // pred_region
          %970 = dma.done %s963, 128
        $region108: #{tpu_custom_call.1} parent=103 // pred_fallthru
          _
        // Predicated region
        $region109: #{tpu_custom_call.1} parent=103 // pred_check
          %p971 = pneg %p114
        $region110: #{tpu_custom_call.1} parent=103 // pred_check_branch
          %973 = sbr.rel (%p971) target = $region112
        $region111: #{tpu_custom_call.1} parent=103 // pred_region
          %974 = dma.done [#allocation8], 320
        $region112: #{tpu_custom_call.1} parent=103 // pred_fallthru
          _
        // Predicated region
        $region113: #{tpu_custom_call.1} parent=103 // pred_check
          %p975 = pneg %p135
        $region114: #{tpu_custom_call.1} parent=103 // pred_check_branch
          %977 = sbr.rel (%p975) target = $region116
        $region115: #{tpu_custom_call.1} parent=103 // pred_region
          %978 = dma.done [#allocation8], 16
        $region116: #{tpu_custom_call.1} parent=103 // pred_fallthru
          _
        // Predicated region
        $region117: #{tpu_custom_call.1} parent=103 // pred_check
          %p979 = pneg %p156
        $region118: #{tpu_custom_call.1} parent=103 // pred_check_branch
          %981 = sbr.rel (%p979) target = $region120
        $region119: #{tpu_custom_call.1} parent=103 // pred_region
          %982 = dma.done [#allocation11], 16
        $region120: #{tpu_custom_call.1} parent=103 // pred_fallthru
          _
        // Predicated region
        $region121: #{tpu_custom_call.1} parent=103 // pred_check
          %p983 = pneg %p177
        $region122: #{tpu_custom_call.1} parent=103 // pred_check_branch
          %985 = sbr.rel (%p983) target = $region124
        $region123: #{tpu_custom_call.1} parent=103 // pred_region
          %986 = dma.done [#allocation11], 256
        $region124: #{tpu_custom_call.1} parent=103 // pred_fallthru
          _
        %s987 = sand.u32 %s60, 1
        %s988 = scalar_lea.sflag [#allocation14], %s987
        %s989 = sand.u32 %s190, 1
        %s990 = scalar_lea.vmem [#allocation13], %s989
        // Predicated region
        $region125: #{tpu_custom_call.1} parent=103 // pred_check
          %p991 = pneg %p203
        $region126: #{tpu_custom_call.1} parent=103 // pred_check_branch
          %993 = sbr.rel (%p991) target = $region128
        $region127: #{tpu_custom_call.1} parent=103 // pred_region
          %994 = dma.done %s988, 16
        $region128: #{tpu_custom_call.1} parent=103 // pred_fallthru
          _
        %s995 = sand.u32 %s60, 1
        %s996 = scalar_lea.sflag [#allocation14], %s995
        %s997 = sand.u32 %s216, 1
        %s998 = scalar_lea.vmem [#allocation15], %s997
        // Predicated region
        $region129: #{tpu_custom_call.1} parent=103 // pred_check
          %p999 = pneg %p229
        $region130: #{tpu_custom_call.1} parent=103 // pred_check_branch
          %1001 = sbr.rel (%p999) target = $region132
        $region131: #{tpu_custom_call.1} parent=103 // pred_region
          %1002 = dma.done %s996, 16
        $region132: #{tpu_custom_call.1} parent=103 // pred_fallthru
          _
        %s1003 = sand.u32 %s60, 1
        %s1004 = scalar_lea.sflag [#allocation17], %s1003
        %s1005 = sand.u32 %s242, 1
        %s1006 = smul.addr %s1005, 20
        %s1007 = scalar_lea.vmem [#allocation16], %s1006
        // Predicated region
        $region133: #{tpu_custom_call.1} parent=103 // pred_check
          %p1008 = pneg %p255
        $region134: #{tpu_custom_call.1} parent=103 // pred_check_branch
          %1010 = sbr.rel (%p1008) target = $region136
        $region135: #{tpu_custom_call.1} parent=103 // pred_region
          %1011 = dma.done %s1004, 320
        $region136: #{tpu_custom_call.1} parent=103 // pred_fallthru
          _
        %s1012 = sand.u32 %s60, 1
        %s1013 = scalar_lea.sflag [#allocation17], %s1012
        %s1014 = sand.u32 %s268, 1
        %s1015 = scalar_lea.vmem [#allocation18], %s1014
        // Predicated region
        $region137: #{tpu_custom_call.1} parent=103 // pred_check
          %p1016 = pneg %p281
        $region138: #{tpu_custom_call.1} parent=103 // pred_check_branch
          %1018 = sbr.rel (%p1016) target = $region140
        $region139: #{tpu_custom_call.1} parent=103 // pred_region
          %1019 = dma.done %s1013, 16
        $region140: #{tpu_custom_call.1} parent=103 // pred_fallthru
          _
        %s1020 = sand.u32 %s60, 1
        %s1021 = scalar_lea.sflag [#allocation20], %s1020
        %s1022 = sand.u32 %s294, 1
        %s1023 = smul.addr %s1022, 20
        %s1024 = scalar_lea.vmem [#allocation19], %s1023
        // Predicated region
        $region141: #{tpu_custom_call.1} parent=103 // pred_check
          %p1025 = pneg %p307
        $region142: #{tpu_custom_call.1} parent=103 // pred_check_branch
          %1027 = sbr.rel (%p1025) target = $region144
        $region143: #{tpu_custom_call.1} parent=103 // pred_region
          %1028 = dma.done %s1021, 320
        $region144: #{tpu_custom_call.1} parent=103 // pred_fallthru
          _
        %s1029 = sand.u32 %s60, 1
        %s1030 = scalar_lea.sflag [#allocation20], %s1029
        %s1031 = sand.u32 %s320, 1
        %s1032 = scalar_lea.vmem [#allocation21], %s1031
        // Predicated region
        $region145: #{tpu_custom_call.1} parent=103 // pred_check
          %p1033 = pneg %p333
        $region146: #{tpu_custom_call.1} parent=103 // pred_check_branch
          %1035 = sbr.rel (%p1033) target = $region148
        $region147: #{tpu_custom_call.1} parent=103 // pred_region
          %1036 = dma.done %s1030, 16
        $region148: #{tpu_custom_call.1} parent=103 // pred_fallthru
          _
        %s1037 = sand.u32 %s60, 1
        %s1038 = scalar_lea.sflag [#allocation23], %s1037
        %s1039 = sand.u32 %s346, 1
        %s1040 = scalar_lea.vmem [#allocation22], %s1039
        // Predicated region
        $region149: #{tpu_custom_call.1} parent=103 // pred_check
          %p1041 = pneg %p359
        $region150: #{tpu_custom_call.1} parent=103 // pred_check_branch
          %1043 = sbr.rel (%p1041) target = $region152
        $region151: #{tpu_custom_call.1} parent=103 // pred_region
          %1044 = dma.done %s1038, 16
        $region152: #{tpu_custom_call.1} parent=103 // pred_fallthru
          _
        %s1045 = sand.u32 %s60, 1
        %s1046 = scalar_lea.sflag [#allocation23], %s1045
        %s1047 = sand.u32 %s372, 1
        %s1048 = scalar_lea.vmem [#allocation24], %s1047
        // Predicated region
        $region153: #{tpu_custom_call.1} parent=103 // pred_check
          %p1049 = pneg %p385
        $region154: #{tpu_custom_call.1} parent=103 // pred_check_branch
          %1051 = sbr.rel (%p1049) target = $region156
        $region155: #{tpu_custom_call.1} parent=103 // pred_region
          %1052 = dma.done %s1046, 16
        $region156: #{tpu_custom_call.1} parent=103 // pred_fallthru
          _
        %s1053 = sand.u32 %s60, 1
        %s1054 = scalar_lea.sflag [#allocation26], %s1053
        %s1055 = sand.u32 %s398, 1
        %s1056 = smul.addr %s1055, 40
        %s1057 = scalar_lea.vmem [#allocation25], %s1056
        // Predicated region
        $region157: #{tpu_custom_call.1} parent=103 // pred_check
          %p1058 = pneg %p411
        $region158: #{tpu_custom_call.1} parent=103 // pred_check_branch
          %1060 = sbr.rel (%p1058) target = $region160
        $region159: #{tpu_custom_call.1} parent=103 // pred_region
          %1061 = dma.done %s1054, 640
        $region160: #{tpu_custom_call.1} parent=103 // pred_fallthru
          _
        %s1062 = sand.u32 %s60, 1
        %s1063 = scalar_lea.sflag [#allocation26], %s1062
        %s1064 = sand.u32 %s424, 1
        %s1065 = smul.addr %s1064, 2
        %s1066 = scalar_lea.vmem [#allocation27], %s1065
        // Predicated region
        $region161: #{tpu_custom_call.1} parent=103 // pred_check
          %p1067 = pneg %p437
        $region162: #{tpu_custom_call.1} parent=103 // pred_check_branch
          %1069 = sbr.rel (%p1067) target = $region164
        $region163: #{tpu_custom_call.1} parent=103 // pred_region
          %1070 = dma.done %s1063, 32
        $region164: #{tpu_custom_call.1} parent=103 // pred_fallthru
          _
        %s1071 = sand.u32 %s60, 1
        %s1072 = scalar_lea.sflag [#allocation29], %s1071
        %s1073 = sand.u32 %s450, 1
        %s1074 = smul.addr %s1073, 72
        %s1075 = scalar_lea.vmem [#allocation28], %s1074
        // Predicated region
        $region165: #{tpu_custom_call.1} parent=103 // pred_check
          %p1076 = pneg %p463
        $region166: #{tpu_custom_call.1} parent=103 // pred_check_branch
          %1078 = sbr.rel (%p1076) target = $region168
        $region167: #{tpu_custom_call.1} parent=103 // pred_region
          %1079 = dma.done %s1072, 1152
        $region168: #{tpu_custom_call.1} parent=103 // pred_fallthru
          _
        %s1080 = sand.u32 %s60, 1
        %s1081 = scalar_lea.sflag [#allocation29], %s1080
        %s1082 = sand.u32 %s476, 1
        %s1083 = scalar_lea.vmem [#allocation30], %s1082
        // Predicated region
        $region169: #{tpu_custom_call.1} parent=103 // pred_check
          %p1084 = pneg %p489
        $region170: #{tpu_custom_call.1} parent=103 // pred_check_branch
          %1086 = sbr.rel (%p1084) target = $region172
        $region171: #{tpu_custom_call.1} parent=103 // pred_region
          %1087 = dma.done %s1081, 16
        $region172: #{tpu_custom_call.1} parent=103 // pred_fallthru
          _
        // Predicated region
        $region173: #{tpu_custom_call.1} parent=103 // pred_check
          %p1088 = pneg %p510
        $region174: #{tpu_custom_call.1} parent=103 // pred_check_branch
          %1090 = sbr.rel (%p1088) target = $region176
        $region175: #{tpu_custom_call.1} parent=103 // pred_region
          %1091 = dma.done [#allocation32], 16
        $region176: #{tpu_custom_call.1} parent=103 // pred_fallthru
          _
        // Predicated region
        $region177: #{tpu_custom_call.1} parent=103 // pred_check
          %p1092 = pneg %p531
        $region178: #{tpu_custom_call.1} parent=103 // pred_check_branch
          %1094 = sbr.rel (%p1092) target = $region180
        $region179: #{tpu_custom_call.1} parent=103 // pred_region
          %1095 = dma.done [#allocation32], 16
        $region180: #{tpu_custom_call.1} parent=103 // pred_fallthru
          _
        // Predicated region
        $region181: #{tpu_custom_call.1} parent=103 // pred_check
          %p1096 = pneg %p552
        $region182: #{tpu_custom_call.1} parent=103 // pred_check_branch
          %1098 = sbr.rel (%p1096) target = $region184
        $region183: #{tpu_custom_call.1} parent=103 // pred_region
          %1099 = dma.done [#allocation35], 320
        $region184: #{tpu_custom_call.1} parent=103 // pred_fallthru
          _
        // Predicated region
        $region185: #{tpu_custom_call.1} parent=103 // pred_check
          %p1100 = pneg %p573
        $region186: #{tpu_custom_call.1} parent=103 // pred_check_branch
          %1102 = sbr.rel (%p1100) target = $region188
        $region187: #{tpu_custom_call.1} parent=103 // pred_region
          %1103 = dma.done [#allocation35], 16
        $region188: #{tpu_custom_call.1} parent=103 // pred_fallthru
          _
        %s1104 = sand.u32 %s80, 1
        %s1105 = scalar_lea.sflag [#allocation5], %s1104
        %s1106 = sand.u32 %s80, 1
        %s1107 = smul.addr %s1106, 8
        %s1108 = scalar_lea.vmem [#allocation4], %s1107
        %p1109 = pneg %p93
        %p1110 = pneg %p90
        %p1111 = pneg %p114
        %p1112 = pneg %p111
        %p1113 = pneg %p135
        %p1114 = pneg %p132
        %p1115 = pneg %p156
        %p1116 = pneg %p153
        %p1117 = pneg %p177
        %p1118 = pneg %p174
        %s1119 = sand.u32 %s60, 1
        %s1120 = scalar_lea.sflag [#allocation14], %s1119
        %s1121 = sand.u32 %s190, 1
        %s1122 = scalar_lea.vmem [#allocation13], %s1121
        %p1123 = pneg %p203
        %p1124 = pneg %p200
        %s1125 = sand.u32 %s60, 1
        %s1126 = scalar_lea.sflag [#allocation14], %s1125
        %s1127 = sand.u32 %s216, 1
        %s1128 = scalar_lea.vmem [#allocation15], %s1127
        %p1129 = pneg %p229
        %p1130 = pneg %p226
        %s1131 = sand.u32 %s60, 1
        %s1132 = scalar_lea.sflag [#allocation17], %s1131
        %s1133 = sand.u32 %s242, 1
        %s1134 = smul.addr %s1133, 20
        %s1135 = scalar_lea.vmem [#allocation16], %s1134
        %p1136 = pneg %p255
        %p1137 = pneg %p252
        %s1138 = sand.u32 %s60, 1
        %s1139 = scalar_lea.sflag [#allocation17], %s1138
        %s1140 = sand.u32 %s268, 1
        %s1141 = scalar_lea.vmem [#allocation18], %s1140
        %p1142 = pneg %p281
        %p1143 = pneg %p278
        %s1144 = sand.u32 %s60, 1
        %s1145 = scalar_lea.sflag [#allocation20], %s1144
        %s1146 = sand.u32 %s294, 1
        %s1147 = smul.addr %s1146, 20
        %s1148 = scalar_lea.vmem [#allocation19], %s1147
        %p1149 = pneg %p307
        %p1150 = pneg %p304
        %s1151 = sand.u32 %s60, 1
        %s1152 = scalar_lea.sflag [#allocation20], %s1151
        %s1153 = sand.u32 %s320, 1
        %s1154 = scalar_lea.vmem [#allocation21], %s1153
        %p1155 = pneg %p333
        %p1156 = pneg %p330
        %s1157 = sand.u32 %s60, 1
        %s1158 = scalar_lea.sflag [#allocation23], %s1157
        %s1159 = sand.u32 %s346, 1
        %s1160 = scalar_lea.vmem [#allocation22], %s1159
        %p1161 = pneg %p359
        %p1162 = pneg %p356
        %s1163 = sand.u32 %s60, 1
        %s1164 = scalar_lea.sflag [#allocation23], %s1163
        %s1165 = sand.u32 %s372, 1
        %s1166 = scalar_lea.vmem [#allocation24], %s1165
        %p1167 = pneg %p385
        %p1168 = pneg %p382
        %s1169 = sand.u32 %s60, 1
        %s1170 = scalar_lea.sflag [#allocation26], %s1169
        %s1171 = sand.u32 %s398, 1
        %s1172 = smul.addr %s1171, 40
        %s1173 = scalar_lea.vmem [#allocation25], %s1172
        %p1174 = pneg %p411
        %p1175 = pneg %p408
        %s1176 = sand.u32 %s60, 1
        %s1177 = scalar_lea.sflag [#allocation26], %s1176
        %s1178 = sand.u32 %s424, 1
        %s1179 = smul.addr %s1178, 2
        %s1180 = scalar_lea.vmem [#allocation27], %s1179
        %p1181 = pneg %p437
        %p1182 = pneg %p434
        %s1183 = sand.u32 %s60, 1
        %s1184 = scalar_lea.sflag [#allocation29], %s1183
        %s1185 = sand.u32 %s450, 1
        %s1186 = smul.addr %s1185, 72
        %s1187 = scalar_lea.vmem [#allocation28], %s1186
        %p1188 = pneg %p463
        %p1189 = pneg %p460
        %s1190 = sand.u32 %s60, 1
        %s1191 = scalar_lea.sflag [#allocation29], %s1190
        %s1192 = sand.u32 %s476, 1
        %s1193 = scalar_lea.vmem [#allocation30], %s1192
        %p1194 = pneg %p489
        %p1195 = pneg %p486
        %p1196 = pneg %p510
        %p1197 = pneg %p507
        %p1198 = pneg %p531
        %p1199 = pneg %p528
        %p1200 = pneg %p552
        %p1201 = pneg %p549
        %p1202 = pneg %p573
        %p1203 = pneg %p570
        %p1204 = pneg %p599
        %p1205 = pneg %p596
        %s1206 = sand.u32 %s586, 1
        %s1207 = scalar_lea.sflag [#allocation6], %s1206
        %s1208 = sand.u32 %s586, 1
        %s1209 = scalar_lea.vmem [#allocation37], %s1208
        %p1211 = scmp.eq.s32.totalorder %s65, 0
        // Predicated region
        $region189: #{tpu_custom_call.1} parent=103 // pred_check
          %p1212 = pneg %p1211
        $region190: #{tpu_custom_call.1} parent=103 // pred_check_branch
          %1214 = sbr.rel (%p1212) target = $region192
        $region191: #{tpu_custom_call.1} parent=103 // pred_region
          %v1215 = vld [vmem:[%s966] sm:$0xf]
          %v1216 = vld [vmem:[%s966 + $0x4] sm:$0xf]
          %v1217 = vld [vmem:[#allocation7] sm:$0xf]
          %v1218 = vld [vmem:[#allocation7 + $0x4] sm:$0xf]
          %v1219 = vld [vmem:[#allocation7 + $0x8] sm:$0xf]
          %v1220 = vld [vmem:[#allocation7 + $0xc] sm:$0xf]
          %v1221 = vld [vmem:[#allocation7 + $0x10] sm:$0x3]
          %v1222 = vld [vmem:[#allocation9] sm:$0x1]
          %v1224 = vlaneseq
          %v1225 = vshrl.u32 %v1224, 7
          %v1226 = vsub.s32 0, %v1225
          %v1227 = vrot.slane %v1222, %v1226
          %v1231 = vunpack.c.l.b16 %v1215
          %v1232 = vunpack.c.l.b16 %v1216
          %v1233 = vpack.c.b16 %v1232, %v1231
          %v1239 = vunpack.c.l.b16 %v1217
          %v1240 = vunpack.c.l.b16 %v1218
          %v1241 = vunpack.c.l.b16 %v1219
          %v1242 = vunpack.c.l.b16 %v1220
          %v1243 = vunpack.c.l.b16 %v1221
          %v1244 = vpack.c.b16 %v1240, %v1239
          %v1245 = vpack.c.b16 %v1242, %v1241
          %v1246 = vpack.c.b16 %v1243, %v1243
          %vm1249 = vcmask 293888
          %v1251 = vsel %vm1249, %v1233, 0
          %vm1253 = vcmask 1041408
          %v1255 = vsel %vm1253, %v1246, 0
          %1257 = vmatprep.subr.bf16.mxu0 0
          %1258 = vmatpush1.bf16.msra.mxu0 %v1244
          %1259 = vmatprep.subr.bf16.mxu0 0
          %1260 = vmatpush1.bf16.msra.mxu0 %v1245
          %1261 = vmatprep.subr.bf16.mxu0 0
          %1262 = vmatpush1.bf16.msra.mxu0 %v1255
          %1263 = vmatprep.subr.bf16.mxu0 0
          %1264 = vmatpush1.bf16.msra.mxu0 0
          %1265 = vmatprep.subr.bf16.mxu0 0
          %1266 = vmatpush1.bf16.msra.mxu0 0
          %1267 = vmatprep.subr.bf16.mxu0 0
          %1268 = vmatpush1.bf16.msra.mxu0 0
          %1269 = vmatprep.subr.bf16.mxu0 0
          %1270 = vmatpush1.bf16.msra.mxu0 0
          %1271 = vmatprep.subr.bf16.mxu0 0
          %1272 = vmatpush1.bf16.msra.mxu0 0
          %1273 = vmatprep.subr.bf16.mxu0 0
          %1274 = vmatpush1.bf16.msra.mxu0 0
          %1275 = vmatprep.subr.bf16.mxu0 0
          %1276 = vmatpush1.bf16.msra.mxu0 0
          %1277 = vmatprep.subr.bf16.mxu0 0
          %1278 = vmatpush1.bf16.msra.mxu0 0
          %1279 = vmatprep.subr.bf16.mxu0 0
          %1280 = vmatpush1.bf16.msra.mxu0 0
          %1281 = vmatprep.subr.bf16.mxu0 0
          %1282 = vmatpush1.bf16.msra.mxu0 0
          %1283 = vmatprep.subr.bf16.mxu0 0
          %1284 = vmatpush1.bf16.msra.mxu0 0
          %1285 = vmatprep.subr.bf16.mxu0 0
          %1286 = vmatpush1.bf16.msra.mxu0 0
          %1287 = vmatprep.subr.bf16.mxu0 0
          %1288 = vmatpush1.bf16.msra.mxu0 0
          %1289 = vmatprep.mubr.bf16.mxu0 0
          %1290 = vmatmul.mubr.bf16.gmra.mrb[0].mxu0 %v1251
          %v1291 = vpop.f32.mrb[0].mxu0
          %v1292 = vadd.f32 %v1227, %v1291
          %v1293 = vpop.f32.mrb[0].mxu0
          %v1294 = vpop.f32.mrb[0].mxu0
          %v1295 = vadd.f32 %v1227, %v1294
          %v1296 = vpop.f32.mrb[0].mxu0
          %1297 = vdwg.mxu0
          %v1298 = vld [vmem:[#allocation12] sm:$0xff]
          %v1299 = vld [vmem:[#allocation12 + $0x8] sm:$0xff]
          %v1300 = vadd.f32 %v1292, %v1298
          %v1301 = vadd.f32 %v1295, %v1299
          %v1302 = vld [vmem:[#allocation10] sm:$0x1]
          %vm1305 = vcmask 1040384
          %v1306 = vrot.slane %v1300, 7
          %v1307 = vrot.slane %v1301, 7
          %v1308 = vsel %vm1305, %v1306, %v1307
          %v1312 = vsel %vm1305, %v1302, %v1306
          %v1313 = vsel %vm1305, %v1307, 0.0
          %1314 = vst.msk [vmem:[#allocation2] sm:$0xff] %vm1249, %v1312
          %1315 = vst.msk [vmem:[#allocation2 + $0x8] sm:$0xff] %vm1249, %v1308
          %1316 = vst.msk [vmem:[#allocation2 + $0x10] sm:$0xff] %vm1249, %v1313
          %1317 = vst.msk [vmem:[#allocation2 + $0x18] sm:$0xff] %vm1249, 0.0
        $region192: #{tpu_custom_call.1} parent=103 // pred_fallthru
          _
        %v1318 = vld [vmem:[#allocation2] sm:$0xff]
        %v1319 = vld [vmem:[#allocation2 + $0x8] sm:$0xff]
        %v1320 = vld [vmem:[#allocation2 + $0x10] sm:$0xff]
        %v1321 = vld [vmem:[#allocation2 + $0x18] sm:$0xff]
        %v1322 = vld [vmem:[%s990] sm:$0x1]
        %v1323 = vld [vmem:[%s998] sm:$0x1]
        %vm1324 = vcmask 293888
        %v1325 = vsel %vm1324, %v1318, 0.0
        %1326 = vadd.xlane.f32.xlu0 %v1325
        %v1327 = vpop.xlane.xlu0 %1326
        %v1328 = vsel %vm1324, %v1319, 0.0
        %1329 = vadd.xlane.f32.xlu0 %v1328
        %v1330 = vpop.xlane.xlu0 %1329
        %v1331 = vsel %vm1324, %v1320, 0.0
        %1332 = vadd.xlane.f32.xlu0 %v1331
        %v1333 = vpop.xlane.xlu0 %1332
        %v1334 = vsel %vm1324, %v1321, 0.0
        %1335 = vadd.xlane.f32.xlu0 %v1334
        %v1336 = vpop.xlane.xlu0 %1335
        %v1337 = vrcp.pop 36.0
        %v1338 = vmul.f32 %v1327, %v1337
        %v1339 = vmul.f32 %v1330, %v1337
        %v1340 = vmul.f32 %v1333, %v1337
        %v1341 = vmul.f32 %v1336, %v1337
        %v1342 = vsub.f32 %v1318, %v1338
        %v1343 = vsub.f32 %v1319, %v1339
        %v1344 = vsub.f32 %v1320, %v1340
        %v1345 = vsub.f32 %v1321, %v1341
        %v1346 = vmul.f32 %v1342, %v1342
        %v1347 = vmul.f32 %v1343, %v1343
        %v1348 = vmul.f32 %v1344, %v1344
        %v1349 = vmul.f32 %v1345, %v1345
        %v1350 = vsel %vm1324, %v1346, 0.0
        %1351 = vadd.xlane.f32.xlu0 %v1350
        %v1352 = vpop.xlane.xlu0 %1351
        %v1353 = vsel %vm1324, %v1347, 0.0
        %1354 = vadd.xlane.f32.xlu0 %v1353
        %v1355 = vpop.xlane.xlu0 %1354
        %v1356 = vsel %vm1324, %v1348, 0.0
        %1357 = vadd.xlane.f32.xlu0 %v1356
        %v1358 = vpop.xlane.xlu0 %1357
        %v1359 = vsel %vm1324, %v1349, 0.0
        %1360 = vadd.xlane.f32.xlu0 %v1359
        %v1361 = vpop.xlane.xlu0 %1360
        %v1362 = vmul.f32 %v1352, %v1337
        %v1363 = vmul.f32 %v1355, %v1337
        %v1364 = vmul.f32 %v1358, %v1337
        %v1365 = vmul.f32 %v1361, %v1337
        %v1366 = vadd.f32 %v1362, 1e-05
        %v1367 = vadd.f32 %v1363, 1e-05
        %v1368 = vadd.f32 %v1364, 1e-05
        %v1369 = vadd.f32 %v1365, 1e-05
        %v1370 = vrsqrt.pop %v1366
        %v1371 = vrsqrt.pop %v1367
        %v1372 = vrsqrt.pop %v1368
        %v1373 = vrsqrt.pop %v1369
        %v1374 = vmul.f32 %v1342, %v1370
        %v1375 = vmul.f32 %v1343, %v1371
        %v1376 = vmul.f32 %v1344, %v1372
        %v1377 = vmul.f32 %v1345, %v1373
        %v1379 = vlaneseq
        %v1380 = vshrl.u32 %v1379, 7
        %v1381 = vsub.s32 0, %v1380
        %v1382 = vrot.slane %v1322, %v1381
        %v1384 = vmul.f32 %v1374, %v1382
        %v1385 = vmul.f32 %v1375, %v1382
        %v1386 = vmul.f32 %v1376, %v1382
        %v1387 = vmul.f32 %v1377, %v1382
        %v1389 = vlaneseq
        %v1390 = vshrl.u32 %v1389, 7
        %v1391 = vsub.s32 0, %v1390
        %v1392 = vrot.slane %v1323, %v1391
        %v1394 = vadd.f32 %v1384, %v1392
        %v1395 = vadd.f32 %v1385, %v1392
        %v1396 = vadd.f32 %v1386, %v1392
        %v1397 = vadd.f32 %v1387, %v1392
        %v1398 = vpack.c.bf16 %v1395, %v1394
        %v1399 = vpack.c.bf16 %v1397, %v1396
        %v1400 = vld [vmem:[%s1007] sm:$0xf]
        %v1401 = vld [vmem:[%s1007 + $0x4] sm:$0xf]
        %v1402 = vld [vmem:[%s1007 + $0x8] sm:$0xf]
        %v1403 = vld [vmem:[%s1007 + $0xc] sm:$0xf]
        %v1404 = vld [vmem:[%s1007 + $0x10] sm:$0x3]
        %v1405 = vld [vmem:[%s1015] sm:$0x1]
        %v1407 = vlaneseq
        %v1408 = vshrl.u32 %v1407, 7
        %v1409 = vsub.s32 0, %v1408
        %v1410 = vrot.slane %v1405, %v1409
        %v1417 = vunpack.c.l.b16 %v1400
        %v1418 = vunpack.c.l.b16 %v1401
        %v1419 = vunpack.c.l.b16 %v1402
        %v1420 = vunpack.c.l.b16 %v1403
        %v1421 = vunpack.c.l.b16 %v1404
        %v1422 = vpack.c.b16 %v1418, %v1417
        %v1423 = vpack.c.b16 %v1420, %v1419
        %v1424 = vpack.c.b16 %v1421, %v1421
        %v1428 = vsel %vm1324, %v1398, 0
        %v1431 = vsel %vm1324, %v1399, 0
        %vm1433 = vcmask 1041408
        %v1435 = vsel %vm1433, %v1424, 0
        %1437 = vmatprep.subr.bf16.mxu0 0
        %1438 = vmatpush1.bf16.msra.mxu0 %v1422
        %1439 = vmatprep.subr.bf16.mxu0 0
        %1440 = vmatpush1.bf16.msra.mxu0 %v1423
        %1441 = vmatprep.subr.bf16.mxu0 0
        %1442 = vmatpush1.bf16.msra.mxu0 %v1435
        %1443 = vmatprep.subr.bf16.mxu0 0
        %1444 = vmatpush1.bf16.msra.mxu0 0
        %1445 = vmatprep.subr.bf16.mxu0 0
        %1446 = vmatpush1.bf16.msra.mxu0 0
        %1447 = vmatprep.subr.bf16.mxu0 0
        %1448 = vmatpush1.bf16.msra.mxu0 0
        %1449 = vmatprep.subr.bf16.mxu0 0
        %1450 = vmatpush1.bf16.msra.mxu0 0
        %1451 = vmatprep.subr.bf16.mxu0 0
        %1452 = vmatpush1.bf16.msra.mxu0 0
        %1453 = vmatprep.subr.bf16.mxu0 0
        %1454 = vmatpush1.bf16.msra.mxu0 0
        %1455 = vmatprep.subr.bf16.mxu0 0
        %1456 = vmatpush1.bf16.msra.mxu0 0
        %1457 = vmatprep.subr.bf16.mxu0 0
        %1458 = vmatpush1.bf16.msra.mxu0 0
        %1459 = vmatprep.subr.bf16.mxu0 0
        %1460 = vmatpush1.bf16.msra.mxu0 0
        %1461 = vmatprep.subr.bf16.mxu0 0
        %1462 = vmatpush1.bf16.msra.mxu0 0
        %1463 = vmatprep.subr.bf16.mxu0 0
        %1464 = vmatpush1.bf16.msra.mxu0 0
        %1465 = vmatprep.subr.bf16.mxu0 0
        %1466 = vmatpush1.bf16.msra.mxu0 0
        %1467 = vmatprep.subr.bf16.mxu0 0
        %1468 = vmatpush1.bf16.msra.mxu0 0
        %1469 = vmatprep.mubr.bf16.mxu0 0
        %1470 = vmatmul.mubr.bf16.gmra.mrb[0].mxu0 %v1428
        %v1471 = vpop.f32.mrb[0].mxu0
        %v1472 = vadd.f32 %v1410, %v1471
        %v1473 = vpop.f32.mrb[0].mxu0
        %v1474 = vpop.f32.mrb[0].mxu0
        %v1475 = vadd.f32 %v1410, %v1474
        %v1476 = vpop.f32.mrb[0].mxu0
        %1477 = vmatprep.mubr.bf16.mxu0 0
        %1478 = vmatmul.mubr.bf16.gmra.mrb[0].mxu0 %v1431
        %v1479 = vpop.f32.mrb[0].mxu0
        %v1480 = vadd.f32 %v1410, %v1479
        %v1481 = vpop.f32.mrb[0].mxu0
        %v1482 = vpop.f32.mrb[0].mxu0
        %v1483 = vadd.f32 %v1410, %v1482
        %v1484 = vpop.f32.mrb[0].mxu0
        %1485 = vdwg.mxu0
        %v1486 = vlaneseq
        %v1487 = vand.u32 %v1486, 127
        %vm1488 = vcmp.lt.s32.totalorder %v1487, 17
        %v1489 = vsel %vm1488, 0.0, -1e+30
        %v1490 = vpack.c.bf16 %v1475, %v1472
        %v1491 = vpack.c.bf16 %v1483, %v1480
        %1494 = vrot.lane.b32.xlu0 %v1490, 92
        %v1495 = vpop.permute.xlu0 %1494
        %1496 = vrot.lane.b32.xlu0 %v1491, 92
        %v1497 = vpop.permute.xlu0 %1496
        %vm1498 = vcmask 97280
        %v1500 = vsel %vm1498, %v1490, 0
        %v1503 = vsel %vm1498, %v1491, 0
        %v1506 = vsel %vm1498, %v1495, 0
        %v1509 = vsel %vm1498, %v1497, 0
        %1511 = vmatprep.subr.bf16.mxu0 0
        %1512 = vmatpush1.bf16.xpose.msra.mxu0 %v1506
        %1513 = vmatprep.subr.bf16.mxu0 0
        %1514 = vmatpush1.bf16.xpose.msra.mxu0 %v1509
        %1515 = vmatprep.subr.bf16.mxu0 0
        %1516 = vmatpush1.bf16.xpose.msra.mxu0 0
        %1517 = vmatprep.subr.bf16.mxu0 0
        %1518 = vmatpush1.bf16.xpose.msra.mxu0 0
        %1519 = vmatprep.subr.bf16.mxu0 0
        %1520 = vmatpush1.bf16.xpose.msra.mxu0 0
        %1521 = vmatprep.subr.bf16.mxu0 0
        %1522 = vmatpush1.bf16.xpose.msra.mxu0 0
        %1523 = vmatprep.subr.bf16.mxu0 0
        %1524 = vmatpush1.bf16.xpose.msra.mxu0 0
        %1525 = vmatprep.subr.bf16.mxu0 0
        %1526 = vmatpush1.bf16.xpose.msra.mxu0 0
        %1527 = vmatprep.subr.bf16.mxu0 0
        %1528 = vmatpush1.bf16.xpose.msra.mxu0 0
        %1529 = vmatprep.subr.bf16.mxu0 0
        %1530 = vmatpush1.bf16.xpose.msra.mxu0 0
        %1531 = vmatprep.subr.bf16.mxu0 0
        %1532 = vmatpush1.bf16.xpose.msra.mxu0 0
        %1533 = vmatprep.subr.bf16.mxu0 0
        %1534 = vmatpush1.bf16.xpose.msra.mxu0 0
        %1535 = vmatprep.subr.bf16.mxu0 0
        %1536 = vmatpush1.bf16.xpose.msra.mxu0 0
        %1537 = vmatprep.subr.bf16.mxu0 0
        %1538 = vmatpush1.bf16.xpose.msra.mxu0 0
        %1539 = vmatprep.subr.bf16.mxu0 0
        %1540 = vmatpush1.bf16.xpose.msra.mxu0 0
        %1541 = vmatprep.subr.bf16.mxu0 0
        %1542 = vmatpush1.bf16.xpose.msra.mxu0 0
        %1543 = vmatprep.mubr.bf16.mxu0 0
        %1544 = vmatmul.mubr.bf16.gmra.mrb[0].mxu0 %v1500
        %v1545 = vpop.f32.mrb[0].mxu0
        %v1546 = vadd.f32 %v1489, %v1545
        %v1547 = vpop.f32.mrb[0].mxu0
        %v1548 = vpop.f32.mrb[0].mxu0
        %v1549 = vadd.f32 %v1489, %v1548
        %v1550 = vpop.f32.mrb[0].mxu0
        %1551 = vmatprep.mubr.bf16.mxu0 0
        %1552 = vmatmul.mubr.bf16.gmra.mrb[0].mxu0 %v1503
        %v1553 = vpop.f32.mrb[0].mxu0
        %v1554 = vadd.f32 %v1489, %v1553
        %v1555 = vpop.f32.mrb[0].mxu0
        %v1556 = vpop.f32.mrb[0].mxu0
        %v1557 = vadd.f32 %v1489, %v1556
        %v1558 = vpop.f32.mrb[0].mxu0
        %1559 = vdwg.mxu0
        %vm1560 = vcmask 261120
        %v1561 = vsel %vm1560, %v1546, -inf
        %1562 = vmax.xlane.f32.xlu0 %v1561
        %v1563 = vpop.xlane.xlu0 %1562
        %v1564 = vsel %vm1560, %v1549, -inf
        %1565 = vmax.xlane.f32.xlu0 %v1564
        %v1566 = vpop.xlane.xlu0 %1565
        %v1567 = vsel %vm1560, %v1554, -inf
        %1568 = vmax.xlane.f32.xlu0 %v1567
        %v1569 = vpop.xlane.xlu0 %1568
        %v1570 = vsel %vm1560, %v1557, -inf
        %1571 = vmax.xlane.f32.xlu0 %v1570
        %v1572 = vpop.xlane.xlu0 %1571
        %v1573 = vsub.f32 %v1546, %v1563
        %v1574 = vsub.f32 %v1549, %v1566
        %v1575 = vsub.f32 %v1554, %v1569
        %v1576 = vsub.f32 %v1557, %v1572
        %v1577 = vmul.f32 %v1573, 1.442695
        %v1578 = vpow.pop %v1577
        %v1579 = vmul.f32 %v1574, 1.442695
        %v1580 = vpow.pop %v1579
        %v1581 = vmul.f32 %v1575, 1.442695
        %v1582 = vpow.pop %v1581
        %v1583 = vmul.f32 %v1576, 1.442695
        %v1584 = vpow.pop %v1583
        %v1585 = vsel %vm1560, %v1578, 0.0
        %1586 = vadd.xlane.f32.xlu0 %v1585
        %v1587 = vpop.xlane.xlu0 %1586
        %v1588 = vsel %vm1560, %v1580, 0.0
        %1589 = vadd.xlane.f32.xlu0 %v1588
        %v1590 = vpop.xlane.xlu0 %1589
        %v1591 = vsel %vm1560, %v1582, 0.0
        %1592 = vadd.xlane.f32.xlu0 %v1591
        %v1593 = vpop.xlane.xlu0 %1592
        %v1594 = vsel %vm1560, %v1584, 0.0
        %1595 = vadd.xlane.f32.xlu0 %v1594
        %v1596 = vpop.xlane.xlu0 %1595
        %v1597 = vrcp.pop %v1587
        %v1598 = vrcp.pop %v1590
        %v1599 = vrcp.pop %v1593
        %v1600 = vrcp.pop %v1596
        %v1601 = vmul.f32 %v1578, %v1597
        %v1602 = vmul.f32 %v1580, %v1598
        %v1603 = vmul.f32 %v1582, %v1599
        %v1604 = vmul.f32 %v1584, %v1600
        %v1605 = vpack.c.bf16 %v1602, %v1601
        %v1606 = vpack.c.bf16 %v1604, %v1603
        %1607 = vrot.lane.b32.xlu0 %v1490, 56
        %v1608 = vpop.permute.xlu0 %1607
        %1609 = vrot.lane.b32.xlu0 %v1491, 56
        %v1610 = vpop.permute.xlu0 %1609
        %v1614 = vsel %vm1560, %v1605, 0
        %v1617 = vsel %vm1560, %v1606, 0
        %1619 = vmatprep.subr.bf16.mxu0 0
        %1620 = vmatpush1.bf16.msra.mxu0 %v1608
        %1621 = vmatprep.subr.bf16.mxu0 0
        %1622 = vmatpush1.bf16.msra.mxu0 %v1610
        %1623 = vmatprep.subr.bf16.mxu0 0
        %1624 = vmatpush1.bf16.msra.mxu0 0
        %1625 = vmatprep.subr.bf16.mxu0 0
        %1626 = vmatpush1.bf16.msra.mxu0 0
        %1627 = vmatprep.subr.bf16.mxu0 0
        %1628 = vmatpush1.bf16.msra.mxu0 0
        %1629 = vmatprep.subr.bf16.mxu0 0
        %1630 = vmatpush1.bf16.msra.mxu0 0
        %1631 = vmatprep.subr.bf16.mxu0 0
        %1632 = vmatpush1.bf16.msra.mxu0 0
        %1633 = vmatprep.subr.bf16.mxu0 0
        %1634 = vmatpush1.bf16.msra.mxu0 0
        %1635 = vmatprep.subr.bf16.mxu0 0
        %1636 = vmatpush1.bf16.msra.mxu0 0
        %1637 = vmatprep.subr.bf16.mxu0 0
        %1638 = vmatpush1.bf16.msra.mxu0 0
        %1639 = vmatprep.subr.bf16.mxu0 0
        %1640 = vmatpush1.bf16.msra.mxu0 0
        %1641 = vmatprep.subr.bf16.mxu0 0
        %1642 = vmatpush1.bf16.msra.mxu0 0
        %1643 = vmatprep.subr.bf16.mxu0 0
        %1644 = vmatpush1.bf16.msra.mxu0 0
        %1645 = vmatprep.subr.bf16.mxu0 0
        %1646 = vmatpush1.bf16.msra.mxu0 0
        %1647 = vmatprep.subr.bf16.mxu0 0
        %1648 = vmatpush1.bf16.msra.mxu0 0
        %1649 = vmatprep.subr.bf16.mxu0 0
        %1650 = vmatpush1.bf16.msra.mxu0 0
        %1651 = vmatprep.mubr.bf16.mxu0 0
        %1652 = vmatmul.mubr.bf16.gmra.mrb[0].mxu0 %v1614
        %v1653 = vpop.f32.mrb[0].mxu0
        %v1654 = vadd.f32 0.0, %v1653
        %v1655 = vpop.f32.mrb[0].mxu0
        %v1656 = vpop.f32.mrb[0].mxu0
        %v1657 = vadd.f32 0.0, %v1656
        %v1658 = vpop.f32.mrb[0].mxu0
        %1659 = vmatprep.mubr.bf16.mxu0 0
        %1660 = vmatmul.mubr.bf16.gmra.mrb[0].mxu0 %v1617
        %v1661 = vpop.f32.mrb[0].mxu0
        %v1662 = vadd.f32 0.0, %v1661
        %v1663 = vpop.f32.mrb[0].mxu0
        %v1664 = vpop.f32.mrb[0].mxu0
        %v1665 = vadd.f32 0.0, %v1664
        %v1666 = vpop.f32.mrb[0].mxu0
        %1667 = vdwg.mxu0
        %1668 = vst.msk [vmem:[#allocation3] sm:$0xff] %vm1498, %v1654
        %1669 = vst.msk [vmem:[#allocation3 + $0x8] sm:$0xff] %vm1498, %v1657
        %1670 = vst.msk [vmem:[#allocation3 + $0x10] sm:$0xff] %vm1498, %v1662
        %1671 = vst.msk [vmem:[#allocation3 + $0x18] sm:$0xff] %vm1498, %v1665
        %1672 = vrot.lane.b32.xlu0 %v1490, 116
        %v1673 = vpop.permute.xlu0 %1672
        %1674 = vrot.lane.b32.xlu0 %v1491, 116
        %v1675 = vpop.permute.xlu0 %1674
        %1676 = vrot.lane.b32.xlu0 %v1490, 80
        %v1677 = vpop.permute.xlu0 %1676
        %1678 = vrot.lane.b32.xlu0 %v1491, 80
        %v1679 = vpop.permute.xlu0 %1678
        %v1681 = vsel %vm1498, %v1673, 0
        %v1684 = vsel %vm1498, %v1675, 0
        %v1687 = vsel %vm1498, %v1677, 0
        %v1690 = vsel %vm1498, %v1679, 0
        %1692 = vmatprep.subr.bf16.mxu0 0
        %1693 = vmatpush1.bf16.xpose.msra.mxu0 %v1687
        %1694 = vmatprep.subr.bf16.mxu0 0
        %1695 = vmatpush1.bf16.xpose.msra.mxu0 %v1690
        %1696 = vmatprep.subr.bf16.mxu0 0
        %1697 = vmatpush1.bf16.xpose.msra.mxu0 0
        %1698 = vmatprep.subr.bf16.mxu0 0
        %1699 = vmatpush1.bf16.xpose.msra.mxu0 0
        %1700 = vmatprep.subr.bf16.mxu0 0
        %1701 = vmatpush1.bf16.xpose.msra.mxu0 0
        %1702 = vmatprep.subr.bf16.mxu0 0
        %1703 = vmatpush1.bf16.xpose.msra.mxu0 0
        %1704 = vmatprep.subr.bf16.mxu0 0
        %1705 = vmatpush1.bf16.xpose.msra.mxu0 0
        %1706 = vmatprep.subr.bf16.mxu0 0
        %1707 = vmatpush1.bf16.xpose.msra.mxu0 0
        %1708 = vmatprep.subr.bf16.mxu0 0
        %1709 = vmatpush1.bf16.xpose.msra.mxu0 0
        %1710 = vmatprep.subr.bf16.mxu0 0
        %1711 = vmatpush1.bf16.xpose.msra.mxu0 0
        %1712 = vmatprep.subr.bf16.mxu0 0
        %1713 = vmatpush1.bf16.xpose.msra.mxu0 0
        %1714 = vmatprep.subr.bf16.mxu0 0
        %1715 = vmatpush1.bf16.xpose.msra.mxu0 0
        %1716 = vmatprep.subr.bf16.mxu0 0
        %1717 = vmatpush1.bf16.xpose.msra.mxu0 0
        %1718 = vmatprep.subr.bf16.mxu0 0
        %1719 = vmatpush1.bf16.xpose.msra.mxu0 0
        %1720 = vmatprep.subr.bf16.mxu0 0
        %1721 = vmatpush1.bf16.xpose.msra.mxu0 0
        %1722 = vmatprep.subr.bf16.mxu0 0
        %1723 = vmatpush1.bf16.xpose.msra.mxu0 0
        %1724 = vmatprep.mubr.bf16.mxu0 0
        %1725 = vmatmul.mubr.bf16.gmra.mrb[0].mxu0 %v1681
        %v1726 = vpop.f32.mrb[0].mxu0
        %v1727 = vadd.f32 %v1489, %v1726
        %v1728 = vpop.f32.mrb[0].mxu0
        %v1729 = vpop.f32.mrb[0].mxu0
        %v1730 = vadd.f32 %v1489, %v1729
        %v1731 = vpop.f32.mrb[0].mxu0
        %1732 = vmatprep.mubr.bf16.mxu0 0
        %1733 = vmatmul.mubr.bf16.gmra.mrb[0].mxu0 %v1684
        %v1734 = vpop.f32.mrb[0].mxu0
        %v1735 = vadd.f32 %v1489, %v1734
        %v1736 = vpop.f32.mrb[0].mxu0
        %v1737 = vpop.f32.mrb[0].mxu0
        %v1738 = vadd.f32 %v1489, %v1737
        %v1739 = vpop.f32.mrb[0].mxu0
        %1740 = vdwg.mxu0
        %v1741 = vsel %vm1560, %v1727, -inf
        %1742 = vmax.xlane.f32.xlu0 %v1741
        %v1743 = vpop.xlane.xlu0 %1742
        %v1744 = vsel %vm1560, %v1730, -inf
        %1745 = vmax.xlane.f32.xlu0 %v1744
        %v1746 = vpop.xlane.xlu0 %1745
        %v1747 = vsel %vm1560, %v1735, -inf
        %1748 = vmax.xlane.f32.xlu0 %v1747
        %v1749 = vpop.xlane.xlu0 %1748
        %v1750 = vsel %vm1560, %v1738, -inf
        %1751 = vmax.xlane.f32.xlu0 %v1750
        %v1752 = vpop.xlane.xlu0 %1751
        %v1753 = vsub.f32 %v1727, %v1743
        %v1754 = vsub.f32 %v1730, %v1746
        %v1755 = vsub.f32 %v1735, %v1749
        %v1756 = vsub.f32 %v1738, %v1752
        %v1757 = vmul.f32 %v1753, 1.442695
        %v1758 = vpow.pop %v1757
        %v1759 = vmul.f32 %v1754, 1.442695
        %v1760 = vpow.pop %v1759
        %v1761 = vmul.f32 %v1755, 1.442695
        %v1762 = vpow.pop %v1761
        %v1763 = vmul.f32 %v1756, 1.442695
        %v1764 = vpow.pop %v1763
        %v1765 = vsel %vm1560, %v1758, 0.0
        %1766 = vadd.xlane.f32.xlu0 %v1765
        %v1767 = vpop.xlane.xlu0 %1766
        %v1768 = vsel %vm1560, %v1760, 0.0
        %1769 = vadd.xlane.f32.xlu0 %v1768
        %v1770 = vpop.xlane.xlu0 %1769
        %v1771 = vsel %vm1560, %v1762, 0.0
        %1772 = vadd.xlane.f32.xlu0 %v1771
        %v1773 = vpop.xlane.xlu0 %1772
        %v1774 = vsel %vm1560, %v1764, 0.0
        %1775 = vadd.xlane.f32.xlu0 %v1774
        %v1776 = vpop.xlane.xlu0 %1775
        %v1777 = vrcp.pop %v1767
        %v1778 = vrcp.pop %v1770
        %v1779 = vrcp.pop %v1773
        %v1780 = vrcp.pop %v1776
        %v1781 = vmul.f32 %v1758, %v1777
        %v1782 = vmul.f32 %v1760, %v1778
        %v1783 = vmul.f32 %v1762, %v1779
        %v1784 = vmul.f32 %v1764, %v1780
        %v1785 = vpack.c.bf16 %v1782, %v1781
        %v1786 = vpack.c.bf16 %v1784, %v1783
        %1787 = vrot.lane.b32.xlu0 %v1490, 44
        %v1788 = vpop.permute.xlu0 %1787
        %1789 = vrot.lane.b32.xlu0 %v1491, 44
        %v1790 = vpop.permute.xlu0 %1789
        %v1794 = vsel %vm1560, %v1785, 0
        %v1797 = vsel %vm1560, %v1786, 0
        %1799 = vmatprep.subr.bf16.mxu0 0
        %1800 = vmatpush1.bf16.msra.mxu0 %v1788
        %1801 = vmatprep.subr.bf16.mxu0 0
        %1802 = vmatpush1.bf16.msra.mxu0 %v1790
        %1803 = vmatprep.subr.bf16.mxu0 0
        %1804 = vmatpush1.bf16.msra.mxu0 0
        %1805 = vmatprep.subr.bf16.mxu0 0
        %1806 = vmatpush1.bf16.msra.mxu0 0
        %1807 = vmatprep.subr.bf16.mxu0 0
        %1808 = vmatpush1.bf16.msra.mxu0 0
        %1809 = vmatprep.subr.bf16.mxu0 0
        %1810 = vmatpush1.bf16.msra.mxu0 0
        %1811 = vmatprep.subr.bf16.mxu0 0
        %1812 = vmatpush1.bf16.msra.mxu0 0
        %1813 = vmatprep.subr.bf16.mxu0 0
        %1814 = vmatpush1.bf16.msra.mxu0 0
        %1815 = vmatprep.subr.bf16.mxu0 0
        %1816 = vmatpush1.bf16.msra.mxu0 0
        %1817 = vmatprep.subr.bf16.mxu0 0
        %1818 = vmatpush1.bf16.msra.mxu0 0
        %1819 = vmatprep.subr.bf16.mxu0 0
        %1820 = vmatpush1.bf16.msra.mxu0 0
        %1821 = vmatprep.subr.bf16.mxu0 0
        %1822 = vmatpush1.bf16.msra.mxu0 0
        %1823 = vmatprep.subr.bf16.mxu0 0
        %1824 = vmatpush1.bf16.msra.mxu0 0
        %1825 = vmatprep.subr.bf16.mxu0 0
        %1826 = vmatpush1.bf16.msra.mxu0 0
        %1827 = vmatprep.subr.bf16.mxu0 0
        %1828 = vmatpush1.bf16.msra.mxu0 0
        %1829 = vmatprep.subr.bf16.mxu0 0
        %1830 = vmatpush1.bf16.msra.mxu0 0
        %1831 = vmatprep.mubr.bf16.mxu0 0
        %1832 = vmatmul.mubr.bf16.gmra.mrb[0].mxu0 %v1794
        %v1833 = vpop.f32.mrb[0].mxu0
        %v1834 = vadd.f32 0.0, %v1833
        %v1835 = vpop.f32.mrb[0].mxu0
        %v1836 = vpop.f32.mrb[0].mxu0
        %v1837 = vadd.f32 0.0, %v1836
        %v1838 = vpop.f32.mrb[0].mxu0
        %1839 = vmatprep.mubr.bf16.mxu0 0
        %1840 = vmatmul.mubr.bf16.gmra.mrb[0].mxu0 %v1797
        %v1841 = vpop.f32.mrb[0].mxu0
        %v1842 = vadd.f32 0.0, %v1841
        %v1843 = vpop.f32.mrb[0].mxu0
        %v1844 = vpop.f32.mrb[0].mxu0
        %v1845 = vadd.f32 0.0, %v1844
        %v1846 = vpop.f32.mrb[0].mxu0
        %1847 = vdwg.mxu0
        %1852 = vrot.lane.b32.xlu0 %v1834, 12
        %v1853 = vpop.permute.xlu0 %1852
        %1854 = vrot.lane.b32.xlu0 %v1837, 12
        %v1855 = vpop.permute.xlu0 %1854
        %1856 = vrot.lane.b32.xlu0 %v1842, 12
        %v1857 = vpop.permute.xlu0 %1856
        %1858 = vrot.lane.b32.xlu0 %v1845, 12
        %v1859 = vpop.permute.xlu0 %1858
        %vm1864 = vcmask 195680
        %1865 = vst.msk [vmem:[#allocation3] sm:$0xff] %vm1864, %v1853
        %1866 = vst.msk [vmem:[#allocation3 + $0x8] sm:$0xff] %vm1864, %v1855
        %1867 = vst.msk [vmem:[#allocation3 + $0x10] sm:$0xff] %vm1864, %v1857
        %1868 = vst.msk [vmem:[#allocation3 + $0x18] sm:$0xff] %vm1864, %v1859
        %1869 = vrot.lane.b32.xlu0 %v1490, 104
        %v1870 = vpop.permute.xlu0 %1869
        %1871 = vrot.lane.b32.xlu0 %v1491, 104
        %v1872 = vpop.permute.xlu0 %1871
        %1873 = vrot.lane.b32.xlu0 %v1490, 68
        %v1874 = vpop.permute.xlu0 %1873
        %1875 = vrot.lane.b32.xlu0 %v1491, 68
        %v1876 = vpop.permute.xlu0 %1875
        %v1878 = vsel %vm1498, %v1870, 0
        %v1881 = vsel %vm1498, %v1872, 0
        %v1884 = vsel %vm1498, %v1874, 0
        %v1887 = vsel %vm1498, %v1876, 0
        %1889 = vmatprep.subr.bf16.mxu0 0
        %1890 = vmatpush1.bf16.xpose.msra.mxu0 %v1884
        %1891 = vmatprep.subr.bf16.mxu0 0
        %1892 = vmatpush1.bf16.xpose.msra.mxu0 %v1887
        %1893 = vmatprep.subr.bf16.mxu0 0
        %1894 = vmatpush1.bf16.xpose.msra.mxu0 0
        %1895 = vmatprep.subr.bf16.mxu0 0
        %1896 = vmatpush1.bf16.xpose.msra.mxu0 0
        %1897 = vmatprep.subr.bf16.mxu0 0
        %1898 = vmatpush1.bf16.xpose.msra.mxu0 0
        %1899 = vmatprep.subr.bf16.mxu0 0
        %1900 = vmatpush1.bf16.xpose.msra.mxu0 0
        %1901 = vmatprep.subr.bf16.mxu0 0
        %1902 = vmatpush1.bf16.xpose.msra.mxu0 0
        %1903 = vmatprep.subr.bf16.mxu0 0
        %1904 = vmatpush1.bf16.xpose.msra.mxu0 0
        %1905 = vmatprep.subr.bf16.mxu0 0
        %1906 = vmatpush1.bf16.xpose.msra.mxu0 0
        %1907 = vmatprep.subr.bf16.mxu0 0
        %1908 = vmatpush1.bf16.xpose.msra.mxu0 0
        %1909 = vmatprep.subr.bf16.mxu0 0
        %1910 = vmatpush1.bf16.xpose.msra.mxu0 0
        %1911 = vmatprep.subr.bf16.mxu0 0
        %1912 = vmatpush1.bf16.xpose.msra.mxu0 0
        %1913 = vmatprep.subr.bf16.mxu0 0
        %1914 = vmatpush1.bf16.xpose.msra.mxu0 0
        %1915 = vmatprep.subr.bf16.mxu0 0
        %1916 = vmatpush1.bf16.xpose.msra.mxu0 0
        %1917 = vmatprep.subr.bf16.mxu0 0
        %1918 = vmatpush1.bf16.xpose.msra.mxu0 0
        %1919 = vmatprep.subr.bf16.mxu0 0
        %1920 = vmatpush1.bf16.xpose.msra.mxu0 0
        %1921 = vmatprep.mubr.bf16.mxu0 0
        %1922 = vmatmul.mubr.bf16.gmra.mrb[0].mxu0 %v1878
        %v1923 = vpop.f32.mrb[0].mxu0
        %v1924 = vadd.f32 %v1489, %v1923
        %v1925 = vpop.f32.mrb[0].mxu0
        %v1926 = vpop.f32.mrb[0].mxu0
        %v1927 = vadd.f32 %v1489, %v1926
        %v1928 = vpop.f32.mrb[0].mxu0
        %1929 = vmatprep.mubr.bf16.mxu0 0
        %1930 = vmatmul.mubr.bf16.gmra.mrb[0].mxu0 %v1881
        %v1931 = vpop.f32.mrb[0].mxu0
        %v1932 = vadd.f32 %v1489, %v1931
        %v1933 = vpop.f32.mrb[0].mxu0
        %v1934 = vpop.f32.mrb[0].mxu0
        %v1935 = vadd.f32 %v1489, %v1934
        %v1936 = vpop.f32.mrb[0].mxu0
        %1937 = vdwg.mxu0
        %v1938 = vsel %vm1560, %v1924, -inf
        %1939 = vmax.xlane.f32.xlu0 %v1938
        %v1940 = vpop.xlane.xlu0 %1939
        %v1941 = vsel %vm1560, %v1927, -inf
        %1942 = vmax.xlane.f32.xlu0 %v1941
        %v1943 = vpop.xlane.xlu0 %1942
        %v1944 = vsel %vm1560, %v1932, -inf
        %1945 = vmax.xlane.f32.xlu0 %v1944
        %v1946 = vpop.xlane.xlu0 %1945
        %v1947 = vsel %vm1560, %v1935, -inf
        %1948 = vmax.xlane.f32.xlu0 %v1947
        %v1949 = vpop.xlane.xlu0 %1948
        %v1950 = vsub.f32 %v1924, %v1940
        %v1951 = vsub.f32 %v1927, %v1943
        %v1952 = vsub.f32 %v1932, %v1946
        %v1953 = vsub.f32 %v1935, %v1949
        %v1954 = vmul.f32 %v1950, 1.442695
        %v1955 = vpow.pop %v1954
        %v1956 = vmul.f32 %v1951, 1.442695
        %v1957 = vpow.pop %v1956
        %v1958 = vmul.f32 %v1952, 1.442695
        %v1959 = vpow.pop %v1958
        %v1960 = vmul.f32 %v1953, 1.442695
        %v1961 = vpow.pop %v1960
        %v1962 = vsel %vm1560, %v1955, 0.0
        %1963 = vadd.xlane.f32.xlu0 %v1962
        %v1964 = vpop.xlane.xlu0 %1963
        %v1965 = vsel %vm1560, %v1957, 0.0
        %1966 = vadd.xlane.f32.xlu0 %v1965
        %v1967 = vpop.xlane.xlu0 %1966
        %v1968 = vsel %vm1560, %v1959, 0.0
        %1969 = vadd.xlane.f32.xlu0 %v1968
        %v1970 = vpop.xlane.xlu0 %1969
        %v1971 = vsel %vm1560, %v1961, 0.0
        %1972 = vadd.xlane.f32.xlu0 %v1971
        %v1973 = vpop.xlane.xlu0 %1972
        %v1974 = vrcp.pop %v1964
        %v1975 = vrcp.pop %v1967
        %v1976 = vrcp.pop %v1970
        %v1977 = vrcp.pop %v1973
        %v1978 = vmul.f32 %v1955, %v1974
        %v1979 = vmul.f32 %v1957, %v1975
        %v1980 = vmul.f32 %v1959, %v1976
        %v1981 = vmul.f32 %v1961, %v1977
        %v1982 = vpack.c.bf16 %v1979, %v1978
        %v1983 = vpack.c.bf16 %v1981, %v1980
        %1984 = vrot.lane.b32.xlu0 %v1490, 32
        %v1985 = vpop.permute.xlu0 %1984
        %1986 = vrot.lane.b32.xlu0 %v1491, 32
        %v1987 = vpop.permute.xlu0 %1986
        %v1991 = vsel %vm1560, %v1982, 0
        %v1994 = vsel %vm1560, %v1983, 0
        %1996 = vmatprep.subr.bf16.mxu0 0
        %1997 = vmatpush1.bf16.msra.mxu0 %v1985
        %1998 = vmatprep.subr.bf16.mxu0 0
        %1999 = vmatpush1.bf16.msra.mxu0 %v1987
        %2000 = vmatprep.subr.bf16.mxu0 0
        %2001 = vmatpush1.bf16.msra.mxu0 0
        %2002 = vmatprep.subr.bf16.mxu0 0
        %2003 = vmatpush1.bf16.msra.mxu0 0
        %2004 = vmatprep.subr.bf16.mxu0 0
        %2005 = vmatpush1.bf16.msra.mxu0 0
        %2006 = vmatprep.subr.bf16.mxu0 0
        %2007 = vmatpush1.bf16.msra.mxu0 0
        %2008 = vmatprep.subr.bf16.mxu0 0
        %2009 = vmatpush1.bf16.msra.mxu0 0
        %2010 = vmatprep.subr.bf16.mxu0 0
        %2011 = vmatpush1.bf16.msra.mxu0 0
        %2012 = vmatprep.subr.bf16.mxu0 0
        %2013 = vmatpush1.bf16.msra.mxu0 0
        %2014 = vmatprep.subr.bf16.mxu0 0
        %2015 = vmatpush1.bf16.msra.mxu0 0
        %2016 = vmatprep.subr.bf16.mxu0 0
        %2017 = vmatpush1.bf16.msra.mxu0 0
        %2018 = vmatprep.subr.bf16.mxu0 0
        %2019 = vmatpush1.bf16.msra.mxu0 0
        %2020 = vmatprep.subr.bf16.mxu0 0
        %2021 = vmatpush1.bf16.msra.mxu0 0
        %2022 = vmatprep.subr.bf16.mxu0 0
        %2023 = vmatpush1.bf16.msra.mxu0 0
        %2024 = vmatprep.subr.bf16.mxu0 0
        %2025 = vmatpush1.bf16.msra.mxu0 0
        %2026 = vmatprep.subr.bf16.mxu0 0
        %2027 = vmatpush1.bf16.msra.mxu0 0
        %2028 = vmatprep.mubr.bf16.mxu0 0
        %2029 = vmatmul.mubr.bf16.gmra.mrb[0].mxu0 %v1991
        %v2030 = vpop.f32.mrb[0].mxu0
        %v2031 = vadd.f32 0.0, %v2030
        %v2032 = vpop.f32.mrb[0].mxu0
        %v2033 = vpop.f32.mrb[0].mxu0
        %v2034 = vadd.f32 0.0, %v2033
        %v2035 = vpop.f32.mrb[0].mxu0
        %2036 = vmatprep.mubr.bf16.mxu0 0
        %2037 = vmatmul.mubr.bf16.gmra.mrb[0].mxu0 %v1994
        %v2038 = vpop.f32.mrb[0].mxu0
        %v2039 = vadd.f32 0.0, %v2038
        %v2040 = vpop.f32.mrb[0].mxu0
        %v2041 = vpop.f32.mrb[0].mxu0
        %v2042 = vadd.f32 0.0, %v2041
        %v2043 = vpop.f32.mrb[0].mxu0
        %2044 = vdwg.mxu0
        %2049 = vrot.lane.b32.xlu0 %v2031, 24
        %v2050 = vpop.permute.xlu0 %2049
        %2051 = vrot.lane.b32.xlu0 %v2034, 24
        %v2052 = vpop.permute.xlu0 %2051
        %2053 = vrot.lane.b32.xlu0 %v2039, 24
        %v2054 = vpop.permute.xlu0 %2053
        %2055 = vrot.lane.b32.xlu0 %v2042, 24
        %v2056 = vpop.permute.xlu0 %2055
        %vm2061 = vcmask 294080
        %2062 = vst.msk [vmem:[#allocation3] sm:$0xff] %vm2061, %v2050
        %2063 = vst.msk [vmem:[#allocation3 + $0x8] sm:$0xff] %vm2061, %v2052
        %2064 = vst.msk [vmem:[#allocation3 + $0x10] sm:$0xff] %vm2061, %v2054
        %2065 = vst.msk [vmem:[#allocation3 + $0x18] sm:$0xff] %vm2061, %v2056
        %v2066 = vld [vmem:[#allocation3] sm:$0xff]
        %v2067 = vld [vmem:[#allocation3 + $0x8] sm:$0xff]
        %v2068 = vld [vmem:[#allocation3 + $0x10] sm:$0xff]
        %v2069 = vld [vmem:[#allocation3 + $0x18] sm:$0xff]
        %v2070 = vpack.c.bf16 %v2067, %v2066
        %v2071 = vpack.c.bf16 %v2069, %v2068
        %v2072 = vld [vmem:[%s1024] sm:$0xf]
        %v2073 = vld [vmem:[%s1024 + $0x4] sm:$0xf]
        %v2074 = vld [vmem:[%s1024 + $0x8] sm:$0xf]
        %v2075 = vld [vmem:[%s1024 + $0xc] sm:$0xf]
        %v2076 = vld [vmem:[%s1024 + $0x10] sm:$0x3]
        %v2082 = vunpack.c.l.b16 %v2072
        %v2083 = vunpack.c.l.b16 %v2073
        %v2084 = vunpack.c.l.b16 %v2074
        %v2085 = vunpack.c.l.b16 %v2075
        %v2086 = vunpack.c.l.b16 %v2076
        %v2087 = vpack.c.b16 %v2083, %v2082
        %v2088 = vpack.c.b16 %v2085, %v2084
        %v2089 = vpack.c.b16 %v2086, %v2086
        %v2093 = vsel %vm1324, %v2070, 0
        %v2096 = vsel %vm1324, %v2071, 0
        %v2099 = vsel %vm1433, %v2089, 0
        %2101 = vmatprep.subr.bf16.mxu0 0
        %2102 = vmatpush1.bf16.msra.mxu0 %v2087
        %2103 = vmatprep.subr.bf16.mxu0 0
        %2104 = vmatpush1.bf16.msra.mxu0 %v2088
        %2105 = vmatprep.subr.bf16.mxu0 0
        %2106 = vmatpush1.bf16.msra.mxu0 %v2099
        %2107 = vmatprep.subr.bf16.mxu0 0
        %2108 = vmatpush1.bf16.msra.mxu0 0
        %2109 = vmatprep.subr.bf16.mxu0 0
        %2110 = vmatpush1.bf16.msra.mxu0 0
        %2111 = vmatprep.subr.bf16.mxu0 0
        %2112 = vmatpush1.bf16.msra.mxu0 0
        %2113 = vmatprep.subr.bf16.mxu0 0
        %2114 = vmatpush1.bf16.msra.mxu0 0
        %2115 = vmatprep.subr.bf16.mxu0 0
        %2116 = vmatpush1.bf16.msra.mxu0 0
        %2117 = vmatprep.subr.bf16.mxu0 0
        %2118 = vmatpush1.bf16.msra.mxu0 0
        %2119 = vmatprep.subr.bf16.mxu0 0
        %2120 = vmatpush1.bf16.msra.mxu0 0
        %2121 = vmatprep.subr.bf16.mxu0 0
        %2122 = vmatpush1.bf16.msra.mxu0 0
        %2123 = vmatprep.subr.bf16.mxu0 0
        %2124 = vmatpush1.bf16.msra.mxu0 0
        %2125 = vmatprep.subr.bf16.mxu0 0
        %2126 = vmatpush1.bf16.msra.mxu0 0
        %2127 = vmatprep.subr.bf16.mxu0 0
        %2128 = vmatpush1.bf16.msra.mxu0 0
        %2129 = vmatprep.subr.bf16.mxu0 0
        %2130 = vmatpush1.bf16.msra.mxu0 0
        %2131 = vmatprep.subr.bf16.mxu0 0
        %2132 = vmatpush1.bf16.msra.mxu0 0
        %2133 = vmatprep.mubr.bf16.mxu0 0
        %2134 = vmatmul.mubr.bf16.gmra.mrb[0].mxu0 %v2093
        %v2135 = vpop.f32.mrb[0].mxu0
        %v2136 = vadd.f32 0.0, %v2135
        %v2137 = vpop.f32.mrb[0].mxu0
        %v2138 = vpop.f32.mrb[0].mxu0
        %v2139 = vadd.f32 0.0, %v2138
        %v2140 = vpop.f32.mrb[0].mxu0
        %2141 = vmatprep.mubr.bf16.mxu0 0
        %2142 = vmatmul.mubr.bf16.gmra.mrb[0].mxu0 %v2096
        %v2143 = vpop.f32.mrb[0].mxu0
        %v2144 = vadd.f32 0.0, %v2143
        %v2145 = vpop.f32.mrb[0].mxu0
        %v2146 = vpop.f32.mrb[0].mxu0
        %v2147 = vadd.f32 0.0, %v2146
        %v2148 = vpop.f32.mrb[0].mxu0
        %2149 = vdwg.mxu0
        %v2150 = vadd.f32 %v1318, %v2136
        %v2151 = vadd.f32 %v1319, %v2139
        %v2152 = vadd.f32 %v1320, %v2144
        %v2153 = vadd.f32 %v1321, %v2147
        %v2154 = vld [vmem:[%s1032] sm:$0x1]
        %v2156 = vlaneseq
        %v2157 = vshrl.u32 %v2156, 7
        %v2158 = vsub.s32 0, %v2157
        %v2159 = vrot.slane %v2154, %v2158
        %v2161 = vadd.f32 %v2150, %v2159
        %v2162 = vadd.f32 %v2151, %v2159
        %v2163 = vadd.f32 %v2152, %v2159
        %v2164 = vadd.f32 %v2153, %v2159
        %v2165 = vld [vmem:[%s1040] sm:$0x1]
        %v2166 = vld [vmem:[%s1048] sm:$0x1]
        %v2167 = vsel %vm1324, %v2161, 0.0
        %2168 = vadd.xlane.f32.xlu0 %v2167
        %v2169 = vpop.xlane.xlu0 %2168
        %v2170 = vsel %vm1324, %v2162, 0.0
        %2171 = vadd.xlane.f32.xlu0 %v2170
        %v2172 = vpop.xlane.xlu0 %2171
        %v2173 = vsel %vm1324, %v2163, 0.0
        %2174 = vadd.xlane.f32.xlu0 %v2173
        %v2175 = vpop.xlane.xlu0 %2174
        %v2176 = vsel %vm1324, %v2164, 0.0
        %2177 = vadd.xlane.f32.xlu0 %v2176
        %v2178 = vpop.xlane.xlu0 %2177
        %v2179 = vmul.f32 %v2169, %v1337
        %v2180 = vmul.f32 %v2172, %v1337
        %v2181 = vmul.f32 %v2175, %v1337
        %v2182 = vmul.f32 %v2178, %v1337
        %v2183 = vsub.f32 %v2161, %v2179
        %v2184 = vsub.f32 %v2162, %v2180
        %v2185 = vsub.f32 %v2163, %v2181
        %v2186 = vsub.f32 %v2164, %v2182
        %v2187 = vmul.f32 %v2183, %v2183
        %v2188 = vmul.f32 %v2184, %v2184
        %v2189 = vmul.f32 %v2185, %v2185
        %v2190 = vmul.f32 %v2186, %v2186
        %v2191 = vsel %vm1324, %v2187, 0.0
        %2192 = vadd.xlane.f32.xlu0 %v2191
        %v2193 = vpop.xlane.xlu0 %2192
        %v2194 = vsel %vm1324, %v2188, 0.0
        %2195 = vadd.xlane.f32.xlu0 %v2194
        %v2196 = vpop.xlane.xlu0 %2195
        %v2197 = vsel %vm1324, %v2189, 0.0
        %2198 = vadd.xlane.f32.xlu0 %v2197
        %v2199 = vpop.xlane.xlu0 %2198
        %v2200 = vsel %vm1324, %v2190, 0.0
        %2201 = vadd.xlane.f32.xlu0 %v2200
        %v2202 = vpop.xlane.xlu0 %2201
        %v2203 = vmul.f32 %v2193, %v1337
        %v2204 = vmul.f32 %v2196, %v1337
        %v2205 = vmul.f32 %v2199, %v1337
        %v2206 = vmul.f32 %v2202, %v1337
        %v2207 = vadd.f32 %v2203, 1e-05
        %v2208 = vadd.f32 %v2204, 1e-05
        %v2209 = vadd.f32 %v2205, 1e-05
        %v2210 = vadd.f32 %v2206, 1e-05
        %v2211 = vrsqrt.pop %v2207
        %v2212 = vrsqrt.pop %v2208
        %v2213 = vrsqrt.pop %v2209
        %v2214 = vrsqrt.pop %v2210
        %v2215 = vmul.f32 %v2183, %v2211
        %v2216 = vmul.f32 %v2184, %v2212
        %v2217 = vmul.f32 %v2185, %v2213
        %v2218 = vmul.f32 %v2186, %v2214
        %v2220 = vlaneseq
        %v2221 = vshrl.u32 %v2220, 7
        %v2222 = vsub.s32 0, %v2221
        %v2223 = vrot.slane %v2165, %v2222
        %v2225 = vmul.f32 %v2215, %v2223
        %v2226 = vmul.f32 %v2216, %v2223
        %v2227 = vmul.f32 %v2217, %v2223
        %v2228 = vmul.f32 %v2218, %v2223
        %v2230 = vlaneseq
        %v2231 = vshrl.u32 %v2230, 7
        %v2232 = vsub.s32 0, %v2231
        %v2233 = vrot.slane %v2166, %v2232
        %v2235 = vadd.f32 %v2225, %v2233
        %v2236 = vadd.f32 %v2226, %v2233
        %v2237 = vadd.f32 %v2227, %v2233
        %v2238 = vadd.f32 %v2228, %v2233
        %v2239 = vpack.c.bf16 %v2236, %v2235
        %v2240 = vpack.c.bf16 %v2238, %v2237
        %v2241 = vld [vmem:[%s1057] sm:$0xff]
        %v2242 = vld [vmem:[%s1057 + $0x8] sm:$0xff]
        %v2243 = vld [vmem:[%s1057 + $0x10] sm:$0xff]
        %v2244 = vld [vmem:[%s1057 + $0x18] sm:$0xff]
        %v2245 = vld [vmem:[%s1057 + $0x20] sm:$0x33]
        %v2246 = vld [vmem:[%s1066] sm:$0x3]
        %v2248 = vlaneseq
        %v2249 = vshrl.u32 %v2248, 7
        %v2250 = vsub.s32 0, %v2249
        %v2251 = vrot.slane %v2246, %v2250
        %v2252 = vlaneseq
        %v2253 = vshrl.u32 %v2252, 7
        %v2254 = vsub.s32 1, %v2253
        %v2255 = vrot.slane %v2246, %v2254
        %v2263 = vunpack.c.l.b16 %v2241
        %v2264 = vunpack.c.h.b16 %v2241
        %v2265 = vunpack.c.l.b16 %v2242
        %v2266 = vunpack.c.h.b16 %v2242
        %v2267 = vunpack.c.l.b16 %v2243
        %v2268 = vunpack.c.h.b16 %v2243
        %v2269 = vunpack.c.l.b16 %v2244
        %v2270 = vunpack.c.h.b16 %v2244
        %v2271 = vunpack.c.l.b16 %v2245
        %v2272 = vunpack.c.h.b16 %v2245
        %v2273 = vpack.c.b16 %v2265, %v2263
        %v2274 = vpack.c.b16 %v2266, %v2264
        %v2275 = vpack.c.b16 %v2269, %v2267
        %v2276 = vpack.c.b16 %v2270, %v2268
        %v2277 = vpack.c.b16 %v2271, %v2271
        %v2278 = vpack.c.b16 %v2272, %v2272
        %v2284 = vsel %vm1324, %v2239, 0
        %v2287 = vsel %vm1324, %v2240, 0
        %v2290 = vsel %vm1433, %v2277, 0
        %v2293 = vsel %vm1433, %v2278, 0
        %2295 = vmatprep.subr.bf16.mxu0 %v2274
        %2296 = vmatpush1.bf16.msra.mxu0 %v2273
        %2297 = vmatprep.subr.bf16.mxu0 %v2276
        %2298 = vmatpush1.bf16.msra.mxu0 %v2275
        %2299 = vmatprep.subr.bf16.mxu0 %v2293
        %2300 = vmatpush1.bf16.msra.mxu0 %v2290
        %2301 = vmatprep.subr.bf16.mxu0 0
        %2302 = vmatpush1.bf16.msra.mxu0 0
        %2303 = vmatprep.subr.bf16.mxu0 0
        %2304 = vmatpush1.bf16.msra.mxu0 0
        %2305 = vmatprep.subr.bf16.mxu0 0
        %2306 = vmatpush1.bf16.msra.mxu0 0
        %2307 = vmatprep.subr.bf16.mxu0 0
        %2308 = vmatpush1.bf16.msra.mxu0 0
        %2309 = vmatprep.subr.bf16.mxu0 0
        %2310 = vmatpush1.bf16.msra.mxu0 0
        %2311 = vmatprep.subr.bf16.mxu0 0
        %2312 = vmatpush1.bf16.msra.mxu0 0
        %2313 = vmatprep.subr.bf16.mxu0 0
        %2314 = vmatpush1.bf16.msra.mxu0 0
        %2315 = vmatprep.subr.bf16.mxu0 0
        %2316 = vmatpush1.bf16.msra.mxu0 0
        %2317 = vmatprep.subr.bf16.mxu0 0
        %2318 = vmatpush1.bf16.msra.mxu0 0
        %2319 = vmatprep.subr.bf16.mxu0 0
        %2320 = vmatpush1.bf16.msra.mxu0 0
        %2321 = vmatprep.subr.bf16.mxu0 0
        %2322 = vmatpush1.bf16.msra.mxu0 0
        %2323 = vmatprep.subr.bf16.mxu0 0
        %2324 = vmatpush1.bf16.msra.mxu0 0
        %2325 = vmatprep.subr.bf16.mxu0 0
        %2326 = vmatpush1.bf16.msra.mxu0 0
        %2327 = vmatprep.mubr.bf16.mxu0 0
        %2328 = vmatmul.mubr.bf16.gmra.mrb[0].mxu0 %v2284
        %v2329 = vpop.f32.mrb[0].mxu0
        %v2330 = vadd.f32 %v2251, %v2329
        %v2331 = vpop.f32.mrb[0].mxu0
        %v2332 = vadd.f32 %v2255, %v2331
        %v2333 = vpop.f32.mrb[0].mxu0
        %v2334 = vadd.f32 %v2251, %v2333
        %v2335 = vpop.f32.mrb[0].mxu0
        %v2336 = vadd.f32 %v2255, %v2335
        %2337 = vmatprep.mubr.bf16.mxu0 0
        %2338 = vmatmul.mubr.bf16.gmra.mrb[0].mxu0 %v2287
        %v2339 = vpop.f32.mrb[0].mxu0
        %v2340 = vadd.f32 %v2251, %v2339
        %v2341 = vpop.f32.mrb[0].mxu0
        %v2342 = vadd.f32 %v2255, %v2341
        %v2343 = vpop.f32.mrb[0].mxu0
        %v2344 = vadd.f32 %v2251, %v2343
        %v2345 = vpop.f32.mrb[0].mxu0
        %v2346 = vadd.f32 %v2255, %v2345
        %2347 = vdwg.mxu0
        %v2348 = vmul.f32 %v2330, 0.5
        %v2349 = vmul.f32 %v2332, 0.5
        %v2350 = vmul.f32 %v2334, 0.5
        %v2351 = vmul.f32 %v2336, 0.5
        %v2352 = vmul.f32 %v2340, 0.5
        %v2353 = vmul.f32 %v2342, 0.5
        %v2354 = vmul.f32 %v2344, 0.5
        %v2355 = vmul.f32 %v2346, 0.5
        %v2356 = vmul.f32 %v2330, 0.044715
        %v2357 = vmul.f32 %v2332, 0.044715
        %v2358 = vmul.f32 %v2334, 0.044715
        %v2359 = vmul.f32 %v2336, 0.044715
        %v2360 = vmul.f32 %v2340, 0.044715
        %v2361 = vmul.f32 %v2342, 0.044715
        %v2362 = vmul.f32 %v2344, 0.044715
        %v2363 = vmul.f32 %v2346, 0.044715
        %v2364 = vmul.f32 %v2356, %v2330
        %v2365 = vmul.f32 %v2357, %v2332
        %v2366 = vmul.f32 %v2358, %v2334
        %v2367 = vmul.f32 %v2359, %v2336
        %v2368 = vmul.f32 %v2360, %v2340
        %v2369 = vmul.f32 %v2361, %v2342
        %v2370 = vmul.f32 %v2362, %v2344
        %v2371 = vmul.f32 %v2363, %v2346
        %v2372 = vmul.f32 %v2364, %v2330
        %v2373 = vmul.f32 %v2365, %v2332
        %v2374 = vmul.f32 %v2366, %v2334
        %v2375 = vmul.f32 %v2367, %v2336
        %v2376 = vmul.f32 %v2368, %v2340
        %v2377 = vmul.f32 %v2369, %v2342
        %v2378 = vmul.f32 %v2370, %v2344
        %v2379 = vmul.f32 %v2371, %v2346
        %v2380 = vadd.f32 %v2330, %v2372
        %v2381 = vadd.f32 %v2332, %v2373
        %v2382 = vadd.f32 %v2334, %v2374
        %v2383 = vadd.f32 %v2336, %v2375
        %v2384 = vadd.f32 %v2340, %v2376
        %v2385 = vadd.f32 %v2342, %v2377
        %v2386 = vadd.f32 %v2344, %v2378
        %v2387 = vadd.f32 %v2346, %v2379
        %v2388 = vmul.f32 %v2380, 0.7978846
        %v2389 = vmul.f32 %v2381, 0.7978846
        %v2390 = vmul.f32 %v2382, 0.7978846
        %v2391 = vmul.f32 %v2383, 0.7978846
        %v2392 = vmul.f32 %v2384, 0.7978846
        %v2393 = vmul.f32 %v2385, 0.7978846
        %v2394 = vmul.f32 %v2386, 0.7978846
        %v2395 = vmul.f32 %v2387, 0.7978846
        %v2396 = vtanh.pop %v2388
        %v2397 = vtanh.pop %v2389
        %v2398 = vtanh.pop %v2390
        %v2399 = vtanh.pop %v2391
        %v2400 = vtanh.pop %v2392
        %v2401 = vtanh.pop %v2393
        %v2402 = vtanh.pop %v2394
        %v2403 = vtanh.pop %v2395
        %v2404 = vadd.f32 %v2396, 1.0
        %v2405 = vadd.f32 %v2397, 1.0
        %v2406 = vadd.f32 %v2398, 1.0
        %v2407 = vadd.f32 %v2399, 1.0
        %v2408 = vadd.f32 %v2400, 1.0
        %v2409 = vadd.f32 %v2401, 1.0
        %v2410 = vadd.f32 %v2402, 1.0
        %v2411 = vadd.f32 %v2403, 1.0
        %v2412 = vmul.f32 %v2348, %v2404
        %v2413 = vmul.f32 %v2349, %v2405
        %v2414 = vmul.f32 %v2350, %v2406
        %v2415 = vmul.f32 %v2351, %v2407
        %v2416 = vmul.f32 %v2352, %v2408
        %v2417 = vmul.f32 %v2353, %v2409
        %v2418 = vmul.f32 %v2354, %v2410
        %v2419 = vmul.f32 %v2355, %v2411
        %v2420 = vpack.c.bf16 %v2414, %v2412
        %v2421 = vpack.c.bf16 %v2415, %v2413
        %v2422 = vpack.c.bf16 %v2418, %v2416
        %v2423 = vpack.c.bf16 %v2419, %v2417
        %v2424 = vld [vmem:[%s1075] sm:$0xf]
        %v2425 = vld [vmem:[%s1075 + $0x4] sm:$0xf]
        %v2426 = vld [vmem:[%s1075 + $0x8] sm:$0xf]
        %v2427 = vld [vmem:[%s1075 + $0xc] sm:$0xf]
        %v2428 = vld [vmem:[%s1075 + $0x10] sm:$0xf]
        %v2429 = vld [vmem:[%s1075 + $0x14] sm:$0xf]
        %v2430 = vld [vmem:[%s1075 + $0x18] sm:$0xf]
        %v2431 = vld [vmem:[%s1075 + $0x1c] sm:$0xf]
        %v2432 = vld [vmem:[%s1075 + $0x20] sm:$0xf]
        %v2433 = vld [vmem:[%s1075 + $0x24] sm:$0xf]
        %v2434 = vld [vmem:[%s1075 + $0x28] sm:$0xf]
        %v2435 = vld [vmem:[%s1075 + $0x2c] sm:$0xf]
        %v2436 = vld [vmem:[%s1075 + $0x30] sm:$0xf]
        %v2437 = vld [vmem:[%s1075 + $0x34] sm:$0xf]
        %v2438 = vld [vmem:[%s1075 + $0x38] sm:$0xf]
        %v2439 = vld [vmem:[%s1075 + $0x3c] sm:$0xf]
        %v2440 = vld [vmem:[%s1075 + $0x40] sm:$0xf]
        %v2441 = vld [vmem:[%s1075 + $0x44] sm:$0xf]
        %v2460 = vunpack.c.l.b16 %v2424
        %v2461 = vunpack.c.l.b16 %v2425
        %v2462 = vunpack.c.l.b16 %v2426
        %v2463 = vunpack.c.l.b16 %v2427
        %v2464 = vunpack.c.l.b16 %v2428
        %v2465 = vunpack.c.l.b16 %v2429
        %v2466 = vunpack.c.l.b16 %v2430
        %v2467 = vunpack.c.l.b16 %v2431
        %v2468 = vunpack.c.l.b16 %v2432
        %v2469 = vunpack.c.l.b16 %v2433
        %v2470 = vunpack.c.l.b16 %v2434
        %v2471 = vunpack.c.l.b16 %v2435
        %v2472 = vunpack.c.l.b16 %v2436
        %v2473 = vunpack.c.l.b16 %v2437
        %v2474 = vunpack.c.l.b16 %v2438
        %v2475 = vunpack.c.l.b16 %v2439
        %v2476 = vunpack.c.l.b16 %v2440
        %v2477 = vunpack.c.l.b16 %v2441
        %v2478 = vpack.c.b16 %v2461, %v2460
        %v2479 = vpack.c.b16 %v2463, %v2462
        %v2480 = vpack.c.b16 %v2465, %v2464
        %v2481 = vpack.c.b16 %v2467, %v2466
        %v2482 = vpack.c.b16 %v2469, %v2468
        %v2483 = vpack.c.b16 %v2471, %v2470
        %v2484 = vpack.c.b16 %v2473, %v2472
        %v2485 = vpack.c.b16 %v2475, %v2474
        %v2486 = vpack.c.b16 %v2477, %v2476
        %vm2496 = vcmask 130048
        %v2498 = vsel %vm2496, %v2421, 0
        %v2501 = vsel %vm2496, %v2423, 0
        %2503 = vmatprep.subr.bf16.mxu0 0
        %2504 = vmatpush1.bf16.msra.mxu0 %v2478
        %2505 = vmatprep.subr.bf16.mxu0 0
        %2506 = vmatpush1.bf16.msra.mxu0 %v2479
        %2507 = vmatprep.subr.bf16.mxu0 0
        %2508 = vmatpush1.bf16.msra.mxu0 %v2480
        %2509 = vmatprep.subr.bf16.mxu0 0
        %2510 = vmatpush1.bf16.msra.mxu0 %v2481
        %2511 = vmatprep.subr.bf16.mxu0 0
        %2512 = vmatpush1.bf16.msra.mxu0 %v2482
        %2513 = vmatprep.subr.bf16.mxu0 0
        %2514 = vmatpush1.bf16.msra.mxu0 %v2483
        %2515 = vmatprep.subr.bf16.mxu0 0
        %2516 = vmatpush1.bf16.msra.mxu0 %v2484
        %2517 = vmatprep.subr.bf16.mxu0 0
        %2518 = vmatpush1.bf16.msra.mxu0 %v2485
        %2519 = vmatprep.subr.bf16.mxu0 0
        %2520 = vmatpush1.bf16.msra.mxu0 %v2486
        %2521 = vmatprep.subr.bf16.mxu0 0
        %2522 = vmatpush1.bf16.msra.mxu0 0
        %2523 = vmatprep.subr.bf16.mxu0 0
        %2524 = vmatpush1.bf16.msra.mxu0 0
        %2525 = vmatprep.subr.bf16.mxu0 0
        %2526 = vmatpush1.bf16.msra.mxu0 0
        %2527 = vmatprep.subr.bf16.mxu0 0
        %2528 = vmatpush1.bf16.msra.mxu0 0
        %2529 = vmatprep.subr.bf16.mxu0 0
        %2530 = vmatpush1.bf16.msra.mxu0 0
        %2531 = vmatprep.subr.bf16.mxu0 0
        %2532 = vmatpush1.bf16.msra.mxu0 0
        %2533 = vmatprep.subr.bf16.mxu0 0
        %2534 = vmatpush1.bf16.msra.mxu0 0
        %2535 = vmatprep.mubr.bf16.mxu0 %v2498
        %2536 = vmatmul.mubr.bf16.gmra.mrb[0].mxu0 %v2420
        %v2537 = vpop.f32.mrb[0].mxu0
        %v2538 = vadd.f32 0.0, %v2537
        %v2539 = vpop.f32.mrb[0].mxu0
        %v2540 = vpop.f32.mrb[0].mxu0
        %v2541 = vadd.f32 0.0, %v2540
        %v2542 = vpop.f32.mrb[0].mxu0
        %2543 = vmatprep.mubr.bf16.mxu0 %v2501
        %2544 = vmatmul.mubr.bf16.gmra.mrb[0].mxu0 %v2422
        %v2545 = vpop.f32.mrb[0].mxu0
        %v2546 = vadd.f32 0.0, %v2545
        %v2547 = vpop.f32.mrb[0].mxu0
        %v2548 = vpop.f32.mrb[0].mxu0
        %v2549 = vadd.f32 0.0, %v2548
        %v2550 = vpop.f32.mrb[0].mxu0
        %2551 = vdwg.mxu0
        %v2552 = vadd.f32 %v2161, %v2538
        %v2553 = vadd.f32 %v2162, %v2541
        %v2554 = vadd.f32 %v2163, %v2546
        %v2555 = vadd.f32 %v2164, %v2549
        %v2556 = vld [vmem:[%s1083] sm:$0x1]
        %v2558 = vlaneseq
        %v2559 = vshrl.u32 %v2558, 7
        %v2560 = vsub.s32 0, %v2559
        %v2561 = vrot.slane %v2556, %v2560
        %v2563 = vadd.f32 %v2552, %v2561
        %v2564 = vadd.f32 %v2553, %v2561
        %v2565 = vadd.f32 %v2554, %v2561
        %v2566 = vadd.f32 %v2555, %v2561
        %2567 = vst.msk [vmem:[#allocation2] sm:$0xff] %vm1324, %v2563
        %2568 = vst.msk [vmem:[#allocation2 + $0x8] sm:$0xff] %vm1324, %v2564
        %2569 = vst.msk [vmem:[#allocation2 + $0x10] sm:$0xff] %vm1324, %v2565
        %2570 = vst.msk [vmem:[#allocation2 + $0x18] sm:$0xff] %vm1324, %v2566
        %p2571 = scmp.eq.s32.totalorder %s65, 2
        // Predicated region
        $region193: #{tpu_custom_call.1} parent=103 // pred_check
          %p2572 = pneg %p2571
        $region194: #{tpu_custom_call.1} parent=103 // pred_check_branch
          %2574 = sbr.rel (%p2572) target = $region196
        $region195: #{tpu_custom_call.1} parent=103 // pred_region
          %v2575 = vld [vmem:[#allocation31] sm:$0x1]
          %v2576 = vld [vmem:[#allocation33] sm:$0x1]
          %vm2577 = vcmask 286720
          %v2578 = vsel %vm2577, %v2563, 0.0
          %2579 = vadd.xlane.f32.xlu0 %v2578
          %v2580 = vpop.xlane.xlu0 %2579
          %v2581 = vmul.f32 %v2580, %v1337
          %v2582 = vsub.f32 %v2563, %v2581
          %v2583 = vmul.f32 %v2582, %v2582
          %v2584 = vsel %vm2577, %v2583, 0.0
          %2585 = vadd.xlane.f32.xlu0 %v2584
          %v2586 = vpop.xlane.xlu0 %2585
          %v2587 = vmul.f32 %v2586, %v1337
          %v2588 = vadd.f32 %v2587, 1e-05
          %v2589 = vrsqrt.pop %v2588
          %v2590 = vmul.f32 %v2582, %v2589
          %v2591 = vmul.f32 %v2590, %v2575
          %v2592 = vadd.f32 %v2591, %v2576
          %v2593 = vpack.c.bf16 %v2592, %v2592
          %v2594 = vld [vmem:[#allocation34] sm:$0xf]
          %v2595 = vld [vmem:[#allocation34 + $0x4] sm:$0xf]
          %v2596 = vld [vmem:[#allocation34 + $0x8] sm:$0xf]
          %v2597 = vld [vmem:[#allocation34 + $0xc] sm:$0xf]
          %v2598 = vld [vmem:[#allocation34 + $0x10] sm:$0x3]
          %v2599 = vld [vmem:[#allocation36] sm:$0x1]
          %v2605 = vunpack.c.l.b16 %v2594
          %v2606 = vunpack.c.l.b16 %v2595
          %v2607 = vunpack.c.l.b16 %v2596
          %v2608 = vunpack.c.l.b16 %v2597
          %v2609 = vunpack.c.l.b16 %v2598
          %v2610 = vpack.c.b16 %v2606, %v2605
          %v2611 = vpack.c.b16 %v2608, %v2607
          %v2612 = vpack.c.b16 %v2609, %v2609
          %v2616 = vsel %vm1324, %v2593, 0
          %v2619 = vsel %vm1433, %v2612, 0
          %2621 = vmatprep.subr.bf16.mxu0 0
          %2622 = vmatpush1.bf16.msra.mxu0 %v2610
          %2623 = vmatprep.subr.bf16.mxu0 0
          %2624 = vmatpush1.bf16.msra.mxu0 %v2611
          %2625 = vmatprep.subr.bf16.mxu0 0
          %2626 = vmatpush1.bf16.msra.mxu0 %v2619
          %2627 = vmatprep.subr.bf16.mxu0 0
          %2628 = vmatpush1.bf16.msra.mxu0 0
          %2629 = vmatprep.subr.bf16.mxu0 0
          %2630 = vmatpush1.bf16.msra.mxu0 0
          %2631 = vmatprep.subr.bf16.mxu0 0
          %2632 = vmatpush1.bf16.msra.mxu0 0
          %2633 = vmatprep.subr.bf16.mxu0 0
          %2634 = vmatpush1.bf16.msra.mxu0 0
          %2635 = vmatprep.subr.bf16.mxu0 0
          %2636 = vmatpush1.bf16.msra.mxu0 0
          %2637 = vmatprep.subr.bf16.mxu0 0
          %2638 = vmatpush1.bf16.msra.mxu0 0
          %2639 = vmatprep.subr.bf16.mxu0 0
          %2640 = vmatpush1.bf16.msra.mxu0 0
          %2641 = vmatprep.subr.bf16.mxu0 0
          %2642 = vmatpush1.bf16.msra.mxu0 0
          %2643 = vmatprep.subr.bf16.mxu0 0
          %2644 = vmatpush1.bf16.msra.mxu0 0
          %2645 = vmatprep.subr.bf16.mxu0 0
          %2646 = vmatpush1.bf16.msra.mxu0 0
          %2647 = vmatprep.subr.bf16.mxu0 0
          %2648 = vmatpush1.bf16.msra.mxu0 0
          %2649 = vmatprep.subr.bf16.mxu0 0
          %2650 = vmatpush1.bf16.msra.mxu0 0
          %2651 = vmatprep.subr.bf16.mxu0 0
          %2652 = vmatpush1.bf16.msra.mxu0 0
          %2653 = vmatprep.mubr.bf16.mxu0 0
          %2654 = vmatmul.mubr.bf16.gmra.mrb[0].mxu0 %v2616
          %v2655 = vpop.f32.mrb[0].mxu0
          %v2656 = vadd.f32 %v2599, %v2655
          %v2657 = vpop.f32.mrb[0].mxu0
          %v2658 = vpop.f32.mrb[0].mxu0
          %v2659 = vpop.f32.mrb[0].mxu0
          %2660 = vdwg.mxu0
          %vm2661 = vcmask 49152
          %2662 = vst.msk [vmem:[%s1209] sm:$0x1] %vm2661, %v2656
        $region196: #{tpu_custom_call.1} parent=103 // pred_fallthru
          _
        %s2663 = sand.u32 %s586, 1
        %s2664 = scalar_lea.sflag [#allocation6], %s2663
        %s2665 = sand.u32 %s586, 1
        %s2666 = scalar_lea.vmem [#allocation37], %s2665
        // Predicated region
        $region197: #{tpu_custom_call.1} parent=103 // pred_check
          %p2667 = pneg %p596
        $region198: #{tpu_custom_call.1} parent=103 // pred_check_branch
          %2669 = sbr.rel (%p2667) target = $region200
        $region199: #{tpu_custom_call.1} parent=103 // pred_region
          %s2671 = ssub.s32 16, 16
          %2672 = vsyncadd %s2664, %s2671
          %s2673 = smul.addr %s64, 16
          %s2674 = scalar_lea.hbm %s21, %s2673
          %s2676 = sshll.u32 %s2666, 4
          %s2677 = int_to_ptr.vmem [resolvable:$true] %s2676
          %2679 = dma.vmem_to_hbm [thread:$0]  %s2677, 16, %s2674, %s2664
        $region200: #{tpu_custom_call.1} parent=103 // pred_fallthru
          _
      $region104: #{tpu_custom_call.1} parent=5 // pred_fallthru
        _
      %p2680 = scmp.le.s32.totalorder 2, %s55
      // Predicated region
      $region201: #{tpu_custom_call.1} parent=5 // pred_check
        %p2681 = pneg %p2680
      $region202: #{tpu_custom_call.1} parent=5 // pred_check_branch
        %2683 = sbr.rel (%p2681) target = $region204
      $region203: #{tpu_custom_call.1} parent=5 // pred_region
        %s2684 = ssub.s32 %s55, 2
        // Predicated region
        $region205: #{tpu_custom_call.1} parent=203 // pred_check
          %p2685 = pneg %p602
        $region206: #{tpu_custom_call.1} parent=203 // pred_check_branch
          %2687 = sbr.rel (%p2685) target = $region208
        $region207: #{tpu_custom_call.1} parent=203 // pred_region
          %s2688 = sand.u32 %s587, 1
          %s2689 = scalar_lea.sflag [#allocation6], %s2688
          %s2690 = sand.u32 %s587, 1
          %s2691 = scalar_lea.vmem [#allocation37], %s2690
          %2692 = dma.done %s2689, 16
        $region208: #{tpu_custom_call.1} parent=203 // pred_fallthru
          _
      $region204: #{tpu_custom_call.1} parent=5 // pred_fallthru
        _
    $region6: #{tpu_custom_call.1} parent=1 // loop_footer
      %s59 = sadd.s32 1, %s55
    $region7: #{tpu_custom_call.1} parent=1 // loop_footer_branch
      %54 = sbr.rel target = $region3
    $region8: #{tpu_custom_call.1} parent=1 // loop_exit
      _
    %2693 = vsyncpa [#allocation5], 1
    %s2694 = scalar_lea.sflag [#allocation5], 1
    %2695 = vsyncpa %s2694, 1
    %2696 = vsyncpa [#allocation8], 1
    %2697 = vsyncpa [#allocation11], 1
    %2698 = vsyncpa [#allocation14], 1
    %s2699 = scalar_lea.sflag [#allocation14], 1
    %2700 = vsyncpa %s2699, 1
    %2701 = vsyncpa [#allocation17], 1
    %s2702 = scalar_lea.sflag [#allocation17], 1
    %2703 = vsyncpa %s2702, 1
    %2704 = vsyncpa [#allocation20], 1
    %s2705 = scalar_lea.sflag [#allocation20], 1
    %2706 = vsyncpa %s2705, 1
    %2707 = vsyncpa [#allocation23], 1
    %s2708 = scalar_lea.sflag [#allocation23], 1
    %2709 = vsyncpa %s2708, 1
    %2710 = vsyncpa [#allocation26], 1
    %s2711 = scalar_lea.sflag [#allocation26], 1
    %2712 = vsyncpa %s2711, 1
    %2713 = vsyncpa [#allocation29], 1
    %s2714 = scalar_lea.sflag [#allocation29], 1
    %2715 = vsyncpa %s2714, 1
    %2716 = vsyncpa [#allocation32], 1
    %2717 = vsyncpa [#allocation35], 1
    %2718 = vsyncpa [#allocation6], 1
    %s2719 = scalar_lea.sflag [#allocation6], 1
    %2720 = vsyncpa %s2719, 1

</llo_original>
